<compile_context>
chip_gen: v6e
topology: v6e:2x2x1
jax: 0.10.0
libtpu: 0.0.40
codegen_flags: <defaults>
</compile_context>

<pallas_src>
import functools

import jax
import jax.numpy as jnp
from jax import lax
from jax.experimental import pallas as pl
from jax.experimental.pallas import tpu as pltpu


def _gelu_tanh(y):
    # TODO(synk): PyTorch nn.GELU default is the exact erf-based GELU; the tanh
    # approximation (max abs error ~3e-4) is used because lax.erf lowering in
    # Mosaic is not guaranteed across TPU generations.
    c = 0.7978845608028654  # sqrt(2/pi)
    return 0.5 * y * (1.0 + jnp.tanh(c * (y + 0.044715 * y * y * y)))


# ----------------------------------------------------------------------------
# Fused Block kernel (one grid step = Bb batches = Bb*N token rows)
# ----------------------------------------------------------------------------
def make_block_kernel(*, num_heads, head_dim, seq_len, batch_block, hidden,
                      hidden_tile, compute_dtype, eps=1e-5):
    C = num_heads * head_dim
    N = seq_len
    Bb = batch_block
    H = num_heads
    Dh = head_dim

    def layernorm(y, g, b):
        mu = jnp.mean(y, axis=-1, keepdims=True)
        yc = y - mu
        var = jnp.mean(yc * yc, axis=-1, keepdims=True)
        return yc * lax.rsqrt(var + eps) * g + b

    def kernel(x_ref, g1_ref, b1_ref, wqkv_ref, wproj_ref, bproj_ref,
               g2_ref, b2_ref, w1_ref, bb1_ref, w2_ref, bb2_ref,
               out_ref, ctx_ref):
        x = x_ref[...]                                       # (Bb*N, C) f32

        # ------------------ attention branch ---------------------------------
        xn = layernorm(x, g1_ref[...], b1_ref[...])          # f32 elementwise
        # scale already folded into q-columns of wqkv; qkv_bias=False -> no add.
        qkv = jnp.dot(xn.astype(compute_dtype), wqkv_ref[...],
                      preferred_element_type=jnp.float32)    # (Bb*N, 3C)

        for b in range(Bb):                                  # static tiny loops
            r0 = b * N
            for h in range(H):
                lo = h * Dh
                q = qkv[r0:r0 + N, lo:lo + Dh]
                k = qkv[r0:r0 + N, C + lo:C + lo + Dh]
                v = qkv[r0:r0 + N, 2 * C + lo:2 * C + lo + Dh]
                # q @ k^T without materializing the transpose ("NT" matmul).
                s = lax.dot_general(q.astype(compute_dtype),
                                    k.astype(compute_dtype),
                                    (((1,), (1,)), ((), ())),
                                    preferred_element_type=jnp.float32)
                s = s - jnp.max(s, axis=-1, keepdims=True)   # stable softmax
                p = jnp.exp(s)
                denom = jnp.sum(p, axis=-1, keepdims=True)
                ctx_h = jnp.dot(p.astype(compute_dtype),
                                v.astype(compute_dtype),
                                preferred_element_type=jnp.float32)
                # Deferred normalization: O(N*Dh) muls instead of O(N*N) divs.
                ctx_h = ctx_h * pl.reciprocal(denom, approx=False)
                ctx_ref[r0:r0 + N, lo:lo + Dh] = ctx_h.astype(ctx_ref.dtype)

        # Single merged output projection: (Bb*N, C) @ (C, C).
        attn_out = jnp.dot(ctx_ref[...], wproj_ref[...],
                           preferred_element_type=jnp.float32) + bproj_ref[...]

        # attn_drop / proj_drop / drop_path are p = 0 -> identity.
        x = x + attn_out                                     # residual 1

        # ------------------ MLP branch ----------------------------------------
        xn2 = layernorm(x, g2_ref[...], b2_ref[...]).astype(compute_dtype)
        acc = None
        for c0 in range(0, hidden, hidden_tile):             # bound live h1 tile
            c1 = min(c0 + hidden_tile, hidden)
            h1 = jnp.dot(xn2, w1_ref[:, c0:c1],
                         preferred_element_type=jnp.float32) + bb1_ref[:, c0:c1]
            h1 = _gelu_tanh(h1)                              # f32 elementwise
            part = jnp.dot(h1.astype(compute_dtype), w2_ref[c0:c1, :],
                           preferred_element_type=jnp.float32)
            acc = part if acc is None else acc + part

        out_ref[...] = x + acc + bb2_ref[...]                # residual 2

    return kernel


# ----------------------------------------------------------------------------
# Wrapper
# ----------------------------------------------------------------------------
@functools.partial(jax.jit, static_argnames=("num_heads", "compute_dtype"))
def block_forward(x, params, num_heads, compute_dtype=jnp.bfloat16):
    """x: (B, N, C) float32.  params: 11-tuple, see __main__."""
    B, N, C = x.shape
    head_dim = C // num_heads
    scale = head_dim ** -0.5
    g1, b1, wqkv, wproj, bproj, g2, b2, w1, bb1, w2, bb2 = params
    hidden = w1.shape[1]

    # Weight prep: fold the attention scale into the q-columns of Wqkv
    # (qkv_bias=False so no bias to scale) and cast matmul weights once.
    wqkv = wqkv.at[:, :C].multiply(scale).astype(compute_dtype)
    wproj = wproj.astype(compute_dtype)
    w1 = w1.astype(compute_dtype)
    w2 = w2.astype(compute_dtype)

    # Pick the batch block so each grid step owns a large contiguous slab;
    # for tiny problems this collapses the grid to a single step.
    rows_target = 1024
    Bb = max(1, min(B, rows_target // max(N, 1)))
    while B % Bb != 0:
        Bb -= 1
    if (Bb * N) % 8 != 0:        # keep the block sublane-aligned
        Bb = B
    rows = Bb * N
    hidden_tile = min(hidden, 512)

    kernel = make_block_kernel(num_heads=num_heads, head_dim=head_dim,
                               seq_len=N, batch_block=Bb, hidden=hidden,
                               hidden_tile=hidden_tile,
                               compute_dtype=compute_dtype)

    # Explicit VMEM budget: resident weights + double-buffered activation
    # blocks + live intermediates, with headroom; clamped to 56 MiB for v7x.
    cbytes = jnp.dtype(compute_dtype).itemsize
    weight_bytes = ((wqkv.size + wproj.size + w1.size + w2.size) * cbytes
                    + (g1.size + b1.size + bproj.size + g2.size + b2.size
                       + bb1.size + bb2.size) * 4)
    io_bytes = rows * C * 4 * 2 * 2                   # x in + out, double-buffered
    live_bytes = rows * (4 * C + hidden_tile) * 4 + rows * C * cbytes
    vmem_limit = int(min(max(2 * (weight_bytes + io_bytes + live_bytes)
                             + (4 << 20), 32 << 20), 56 << 20))

    # Untiled VMEM residency for grid-invariant weights (no double-buffering).
    vmem_full = pl.BlockSpec(memory_space=pltpu.MemorySpace.VMEM)
    x2 = x.reshape(B * N, C)                          # lane-dense (rows, C) I/O
    out = pl.pallas_call(
        kernel,
        out_shape=jax.ShapeDtypeStruct((B * N, C), jnp.float32),
        grid=(B // Bb,),
        in_specs=[pl.BlockSpec((rows, C), lambda i: (i, 0))] + [vmem_full] * 11,
        out_specs=pl.BlockSpec((rows, C), lambda i: (i, 0)),
        scratch_shapes=[pltpu.VMEM((rows, C), compute_dtype)],
        compiler_params=pltpu.CompilerParams(
            dimension_semantics=("parallel",),
            vmem_limit_bytes=vmem_limit),
    )(x2, g1, b1, wqkv, wproj, bproj, g2, b2, w1, bb1, w2, bb2)
    return out.reshape(B, N, C)


# ----------------------------------------------------------------------------
# Pure-JAX reference (mirrors the PyTorch Block.forward semantics)
# ----------------------------------------------------------------------------
def reference(x, params, num_heads):
    B, N, C = x.shape
    head_dim = C // num_heads
    scale = head_dim ** -0.5
    g1, b1, wqkv, wproj, bproj, g2, b2, w1, bb1, w2, bb2 = params

    def ln(y, g, b, eps=1e-5):
        mu = y.mean(-1, keepdims=True)
        var = ((y - mu) ** 2).mean(-1, keepdims=True)
        return (y - mu) / jnp.sqrt(var + eps) * g + b

    xn = ln(x, g1, b1)
    qkv = xn @ wqkv                                          # qkv_bias=False
    qkv = qkv.reshape(B, N, 3, num_heads, head_dim).transpose(2, 0, 3, 1, 4)
    q, k, v = qkv[0], qkv[1], qkv[2]                         # (B, H, N, Dh)
    attn = jnp.einsum('bhnd,bhmd->bhnm', q, k) * scale
    attn = jax.nn.softmax(attn, axis=-1)
    ctx = jnp.einsum('bhnm,bhmd->bhnd', attn, v)
    ctx = ctx.transpose(0, 2, 1, 3).reshape(B, N, C)
    x = x + ctx @ wproj + bproj
    xn2 = ln(x, g2, b2)
    h = _gelu_tanh(xn2 @ w1 + bb1)
    return x + h @ w2 + bb2


if __name__ == "__main__":
    # Small, lane-friendly demo shapes: dim multiple of 128 for lane-dense I/O.
    B, N, dim, num_heads = 2, 16, 128, 4
    mlp_ratio = 4.0
    hidden = int(dim * mlp_ratio)

    key = jax.random.PRNGKey(0)
    kx, kq, kp, k1, k2, kn = jax.random.split(key, 6)
    x = jax.random.normal(kx, (B, N, dim), jnp.float32)

    def linear(key, fan_in, fan_out, bias=True):
        kw, kb = jax.random.split(key)
        bound = 1.0 / (fan_in ** 0.5)
        w = jax.random.uniform(kw, (fan_in, fan_out), jnp.float32, -bound, bound)
        b = (jax.random.uniform(kb, (1, fan_out), jnp.float32, -bound, bound)
             if bias else jnp.zeros((1, fan_out), jnp.float32))
        return w, b

    # nn.Linear weights stored transposed as (in, out); qkv_bias=False (default)
    wqkv, _ = linear(kq, dim, 3 * dim, bias=False)
    wproj, bproj = linear(kp, dim, dim)
    w1, bb1 = linear(k1, dim, hidden)
    w2, bb2 = linear(k2, hidden, dim)

    kn1, kn2, kn3, kn4 = jax.random.split(kn, 4)
    g1 = 1.0 + 0.05 * jax.random.normal(kn1, (1, dim), jnp.float32)
    b1 = 0.05 * jax.random.normal(kn2, (1, dim), jnp.float32)
    g2 = 1.0 + 0.05 * jax.random.normal(kn3, (1, dim), jnp.float32)
    b2 = 0.05 * jax.random.normal(kn4, (1, dim), jnp.float32)

    params = (g1, b1, wqkv, wproj, bproj, g2, b2, w1, bb1, w2, bb2)

    with jax.default_matmul_precision("highest"):
        ref = reference(x, params, num_heads)
    ref_scale = float(jnp.max(jnp.abs(ref)))

    # Strict-semantics check: pure-f32 matmul path.
    out_f32 = jax.block_until_ready(
        block_forward(x, params, num_heads, compute_dtype=jnp.float32))
    assert out_f32.shape == (B, N, dim)
    err_f32 = float(jnp.max(jnp.abs(out_f32 - ref)))
    assert err_f32 < 3e-3, f"f32 path max abs error too large: {err_f32}"

    # Default fast path: bf16 matmul operands with f32 accumulation
    # (tolerance accounts for bf16 input rounding only).
    out_bf16 = jax.block_until_ready(block_forward(x, params, num_heads))
    err_bf16 = float(jnp.max(jnp.abs(out_bf16 - ref)))
    assert err_bf16 < 5e-2 * ref_scale, (
        f"bf16 path max abs error too large: {err_bf16} (scale {ref_scale})")

    print("KERNEL_OK")
</pallas_src>

<mosaic_0001>
module attributes {stable_mosaic.version = 11 : i64} {
  func.func @kernel(%arg0: i32, %arg1: memref<32x128xf32, #tpu.memory_space<vmem>>, %arg2: memref<1x128xf32, #tpu.memory_space<vmem>>, %arg3: memref<1x128xf32, #tpu.memory_space<vmem>>, %arg4: memref<128x384xf32, #tpu.memory_space<vmem>>, %arg5: memref<128x128xf32, #tpu.memory_space<vmem>>, %arg6: memref<1x128xf32, #tpu.memory_space<vmem>>, %arg7: memref<1x128xf32, #tpu.memory_space<vmem>>, %arg8: memref<1x128xf32, #tpu.memory_space<vmem>>, %arg9: memref<128x512xf32, #tpu.memory_space<vmem>>, %arg10: memref<1x512xf32, #tpu.memory_space<vmem>>, %arg11: memref<512x128xf32, #tpu.memory_space<vmem>>, %arg12: memref<1x128xf32, #tpu.memory_space<vmem>>, %arg13: memref<32x128xf32, #tpu.memory_space<vmem>>, %arg14: memref<32x128xf32, #tpu.memory_space<vmem>>) attributes {dimension_semantics = [#tpu.dimension_semantics<parallel>], iteration_bounds = array<i64: 1>, scalar_prefetch = 0 : i64, scratch_operands = 1 : i64, tpu.core_type = #tpu.core_type<tc>, window_params = [{transform_indices = @transform_0, window_bounds = array<i64: 32, 128>}, {pipeline_mode = #tpu.pipeline_mode<synchronous>, transform_indices = @transform_1, window_bounds = array<i64: 1, 128>}, {pipeline_mode = #tpu.pipeline_mode<synchronous>, transform_indices = @transform_2, window_bounds = array<i64: 1, 128>}, {pipeline_mode = #tpu.pipeline_mode<synchronous>, transform_indices = @transform_3, window_bounds = array<i64: 128, 384>}, {pipeline_mode = #tpu.pipeline_mode<synchronous>, transform_indices = @transform_4, window_bounds = array<i64: 128, 128>}, {pipeline_mode = #tpu.pipeline_mode<synchronous>, transform_indices = @transform_5, window_bounds = array<i64: 1, 128>}, {pipeline_mode = #tpu.pipeline_mode<synchronous>, transform_indices = @transform_6, window_bounds = array<i64: 1, 128>}, {pipeline_mode = #tpu.pipeline_mode<synchronous>, transform_indices = @transform_7, window_bounds = array<i64: 1, 128>}, {pipeline_mode = #tpu.pipeline_mode<synchronous>, transform_indices = @transform_8, window_bounds = array<i64: 128, 512>}, {pipeline_mode = #tpu.pipeline_mode<synchronous>, transform_indices = @transform_9, window_bounds = array<i64: 1, 512>}, {pipeline_mode = #tpu.pipeline_mode<synchronous>, transform_indices = @transform_10, window_bounds = array<i64: 512, 128>}, {pipeline_mode = #tpu.pipeline_mode<synchronous>, transform_indices = @transform_11, window_bounds = array<i64: 1, 128>}, {transform_indices = @transform_12, window_bounds = array<i64: 32, 128>}]} {
    %c0 = arith.constant 0 : index
    %c0_0 = arith.constant 0 : index
    %0 = vector.load %arg1[%c0, %c0_0] : memref<32x128xf32, #tpu.memory_space<vmem>>, vector<32x128xf32>
    %c0_1 = arith.constant 0 : index
    %c0_2 = arith.constant 0 : index
    %1 = vector.load %arg2[%c0_1, %c0_2] : memref<1x128xf32, #tpu.memory_space<vmem>>, vector<1x128xf32>
    %c0_3 = arith.constant 0 : index
    %c0_4 = arith.constant 0 : index
    %2 = vector.load %arg3[%c0_3, %c0_4] : memref<1x128xf32, #tpu.memory_space<vmem>>, vector<1x128xf32>
    %cst = arith.constant dense<0.000000e+00> : vector<32xf32>
    %3 = vector.multi_reduction <add>, %0, %cst [1] : vector<32x128xf32> to vector<32xf32>
    %4 = vector.shape_cast %3 : vector<32xf32> to vector<32x1xf32>
    %cst_5 = arith.constant 1.280000e+02 : f32
    %5 = vector.broadcast %cst_5 : f32 to vector<32x1xf32>
    %6 = arith.divf %4, %5 : vector<32x1xf32>
    %7 = vector.broadcast %6 : vector<32x1xf32> to vector<32x128xf32>
    %8 = arith.subf %0, %7 : vector<32x128xf32>
    %9 = arith.mulf %8, %8 : vector<32x128xf32>
    %cst_6 = arith.constant dense<0.000000e+00> : vector<32xf32>
    %10 = vector.multi_reduction <add>, %9, %cst_6 [1] : vector<32x128xf32> to vector<32xf32>
    %11 = vector.shape_cast %10 : vector<32xf32> to vector<32x1xf32>
    %cst_7 = arith.constant 1.280000e+02 : f32
    %12 = vector.broadcast %cst_7 : f32 to vector<32x1xf32>
    %13 = arith.divf %11, %12 : vector<32x1xf32>
    %cst_8 = arith.constant 9.99999974E-6 : f32
    %14 = vector.broadcast %cst_8 : f32 to vector<32x1xf32>
    %15 = arith.addf %13, %14 : vector<32x1xf32>
    %16 = math.rsqrt %15 : vector<32x1xf32>
    %17 = vector.broadcast %16 : vector<32x1xf32> to vector<32x128xf32>
    %18 = arith.mulf %8, %17 : vector<32x128xf32>
    %19 = vector.broadcast %1 : vector<1x128xf32> to vector<32x128xf32>
    %20 = arith.mulf %18, %19 : vector<32x128xf32>
    %21 = vector.broadcast %2 : vector<1x128xf32> to vector<32x128xf32>
    %22 = arith.addf %20, %21 : vector<32x128xf32>
    %c0_9 = arith.constant 0 : index
    %c0_10 = arith.constant 0 : index
    %23 = vector.load %arg4[%c0_9, %c0_10] : memref<128x384xf32, #tpu.memory_space<vmem>>, vector<128x384xf32>
    %cst_11 = arith.constant dense<0.000000e+00> : vector<32x384xf32>
    %24 = tpu.matmul %22, %23, %cst_11 {dimension_numbers = #tpu.dot_dimension_numbers<[1], [0], [0], [1], [0, 0, 1, 1], [], []>} : vector<32x128xf32>, vector<128x384xf32>, vector<32x384xf32> -> vector<32x384xf32>
    %25 = vector.extract_strided_slice %24 {offsets = [0, 0], sizes = [16, 32], strides = [1, 1]} : vector<32x384xf32> to vector<16x32xf32>
    %26 = vector.extract_strided_slice %24 {offsets = [0, 128], sizes = [16, 32], strides = [1, 1]} : vector<32x384xf32> to vector<16x32xf32>
    %27 = vector.extract_strided_slice %24 {offsets = [0, 256], sizes = [16, 32], strides = [1, 1]} : vector<32x384xf32> to vector<16x32xf32>
    %cst_12 = arith.constant dense<0.000000e+00> : vector<16x16xf32>
    %28 = tpu.matmul %25, %26, %cst_12 {dimension_numbers = #tpu.dot_dimension_numbers<[1], [1], [0], [0], [0, 0, 1, 0], [], []>} : vector<16x32xf32>, vector<16x32xf32>, vector<16x16xf32> -> vector<16x16xf32>
    %cst_13 = arith.constant dense<0xFF800000> : vector<16xf32>
    %29 = vector.multi_reduction <maximumf>, %28, %cst_13 [1] : vector<16x16xf32> to vector<16xf32>
    %30 = vector.shape_cast %29 : vector<16xf32> to vector<16x1xf32>
    %31 = vector.broadcast %30 : vector<16x1xf32> to vector<16x16xf32>
    %32 = arith.subf %28, %31 : vector<16x16xf32>
    %33 = math.exp %32 : vector<16x16xf32>
    %cst_14 = arith.constant dense<0.000000e+00> : vector<16xf32>
    %34 = vector.multi_reduction <add>, %33, %cst_14 [1] : vector<16x16xf32> to vector<16xf32>
    %35 = vector.shape_cast %34 : vector<16xf32> to vector<16x1xf32>
    %cst_15 = arith.constant dense<0.000000e+00> : vector<16x32xf32>
    %36 = tpu.matmul %33, %27, %cst_15 {dimension_numbers = #tpu.dot_dimension_numbers<[1], [0], [0], [1], [0, 0, 1, 1], [], []>} : vector<16x16xf32>, vector<16x32xf32>, vector<16x32xf32> -> vector<16x32xf32>
    %37 = tpu.reciprocal %35 : vector<16x1xf32> -> vector<16x1xf32>
    %38 = vector.broadcast %37 : vector<16x1xf32> to vector<16x32xf32>
    %39 = arith.mulf %36, %38 : vector<16x32xf32>
    %c0_16 = arith.constant 0 : index
    %c0_17 = arith.constant 0 : index
    %40 = vector.load %arg14[%c0_16, %c0_17] : memref<32x128xf32, #tpu.memory_space<vmem>>, vector<16x32xf32>
    tpu.vector_store %arg14[%c0_16, %c0_17], %39 {strides = array<i32>} : memref<32x128xf32, #tpu.memory_space<vmem>>, vector<16x32xf32>,
    %41 = vector.extract_strided_slice %24 {offsets = [0, 32], sizes = [16, 32], strides = [1, 1]} : vector<32x384xf32> to vector<16x32xf32>
    %42 = vector.extract_strided_slice %24 {offsets = [0, 160], sizes = [16, 32], strides = [1, 1]} : vector<32x384xf32> to vector<16x32xf32>
    %43 = vector.extract_strided_slice %24 {offsets = [0, 288], sizes = [16, 32], strides = [1, 1]} : vector<32x384xf32> to vector<16x32xf32>
    %cst_18 = arith.constant dense<0.000000e+00> : vector<16x16xf32>
    %44 = tpu.matmul %41, %42, %cst_18 {dimension_numbers = #tpu.dot_dimension_numbers<[1], [1], [0], [0], [0, 0, 1, 0], [], []>} : vector<16x32xf32>, vector<16x32xf32>, vector<16x16xf32> -> vector<16x16xf32>
    %cst_19 = arith.constant dense<0xFF800000> : vector<16xf32>
    %45 = vector.multi_reduction <maximumf>, %44, %cst_19 [1] : vector<16x16xf32> to vector<16xf32>
    %46 = vector.shape_cast %45 : vector<16xf32> to vector<16x1xf32>
    %47 = vector.broadcast %46 : vector<16x1xf32> to vector<16x16xf32>
    %48 = arith.subf %44, %47 : vector<16x16xf32>
    %49 = math.exp %48 : vector<16x16xf32>
    %cst_20 = arith.constant dense<0.000000e+00> : vector<16xf32>
    %50 = vector.multi_reduction <add>, %49, %cst_20 [1] : vector<16x16xf32> to vector<16xf32>
    %51 = vector.shape_cast %50 : vector<16xf32> to vector<16x1xf32>
    %cst_21 = arith.constant dense<0.000000e+00> : vector<16x32xf32>
    %52 = tpu.matmul %49, %43, %cst_21 {dimension_numbers = #tpu.dot_dimension_numbers<[1], [0], [0], [1], [0, 0, 1, 1], [], []>} : vector<16x16xf32>, vector<16x32xf32>, vector<16x32xf32> -> vector<16x32xf32>
    %53 = tpu.reciprocal %51 : vector<16x1xf32> -> vector<16x1xf32>
    %54 = vector.broadcast %53 : vector<16x1xf32> to vector<16x32xf32>
    %55 = arith.mulf %52, %54 : vector<16x32xf32>
    %c0_22 = arith.constant 0 : index
    %c32 = arith.constant 32 : index
    %56 = vector.load %arg14[%c0_22, %c32] : memref<32x128xf32, #tpu.memory_space<vmem>>, vector<16x32xf32>
    tpu.vector_store %arg14[%c0_22, %c32], %55 {strides = array<i32>} : memref<32x128xf32, #tpu.memory_space<vmem>>, vector<16x32xf32>,
    %57 = vector.extract_strided_slice %24 {offsets = [0, 64], sizes = [16, 32], strides = [1, 1]} : vector<32x384xf32> to vector<16x32xf32>
    %58 = vector.extract_strided_slice %24 {offsets = [0, 192], sizes = [16, 32], strides = [1, 1]} : vector<32x384xf32> to vector<16x32xf32>
    %59 = vector.extract_strided_slice %24 {offsets = [0, 320], sizes = [16, 32], strides = [1, 1]} : vector<32x384xf32> to vector<16x32xf32>
    %cst_23 = arith.constant dense<0.000000e+00> : vector<16x16xf32>
    %60 = tpu.matmul %57, %58, %cst_23 {dimension_numbers = #tpu.dot_dimension_numbers<[1], [1], [0], [0], [0, 0, 1, 0], [], []>} : vector<16x32xf32>, vector<16x32xf32>, vector<16x16xf32> -> vector<16x16xf32>
    %cst_24 = arith.constant dense<0xFF800000> : vector<16xf32>
    %61 = vector.multi_reduction <maximumf>, %60, %cst_24 [1] : vector<16x16xf32> to vector<16xf32>
    %62 = vector.shape_cast %61 : vector<16xf32> to vector<16x1xf32>
    %63 = vector.broadcast %62 : vector<16x1xf32> to vector<16x16xf32>
    %64 = arith.subf %60, %63 : vector<16x16xf32>
    %65 = math.exp %64 : vector<16x16xf32>
    %cst_25 = arith.constant dense<0.000000e+00> : vector<16xf32>
    %66 = vector.multi_reduction <add>, %65, %cst_25 [1] : vector<16x16xf32> to vector<16xf32>
    %67 = vector.shape_cast %66 : vector<16xf32> to vector<16x1xf32>
    %cst_26 = arith.constant dense<0.000000e+00> : vector<16x32xf32>
    %68 = tpu.matmul %65, %59, %cst_26 {dimension_numbers = #tpu.dot_dimension_numbers<[1], [0], [0], [1], [0, 0, 1, 1], [], []>} : vector<16x16xf32>, vector<16x32xf32>, vector<16x32xf32> -> vector<16x32xf32>
    %69 = tpu.reciprocal %67 : vector<16x1xf32> -> vector<16x1xf32>
    %70 = vector.broadcast %69 : vector<16x1xf32> to vector<16x32xf32>
    %71 = arith.mulf %68, %70 : vector<16x32xf32>
    %c0_27 = arith.constant 0 : index
    %c64 = arith.constant 64 : index
    %72 = vector.load %arg14[%c0_27, %c64] : memref<32x128xf32, #tpu.memory_space<vmem>>, vector<16x32xf32>
    tpu.vector_store %arg14[%c0_27, %c64], %71 {strides = array<i32>} : memref<32x128xf32, #tpu.memory_space<vmem>>, vector<16x32xf32>,
    %73 = vector.extract_strided_slice %24 {offsets = [0, 96], sizes = [16, 32], strides = [1, 1]} : vector<32x384xf32> to vector<16x32xf32>
    %74 = vector.extract_strided_slice %24 {offsets = [0, 224], sizes = [16, 32], strides = [1, 1]} : vector<32x384xf32> to vector<16x32xf32>
    %75 = vector.extract_strided_slice %24 {offsets = [0, 352], sizes = [16, 32], strides = [1, 1]} : vector<32x384xf32> to vector<16x32xf32>
    %cst_28 = arith.constant dense<0.000000e+00> : vector<16x16xf32>
    %76 = tpu.matmul %73, %74, %cst_28 {dimension_numbers = #tpu.dot_dimension_numbers<[1], [1], [0], [0], [0, 0, 1, 0], [], []>} : vector<16x32xf32>, vector<16x32xf32>, vector<16x16xf32> -> vector<16x16xf32>
    %cst_29 = arith.constant dense<0xFF800000> : vector<16xf32>
    %77 = vector.multi_reduction <maximumf>, %76, %cst_29 [1] : vector<16x16xf32> to vector<16xf32>
    %78 = vector.shape_cast %77 : vector<16xf32> to vector<16x1xf32>
    %79 = vector.broadcast %78 : vector<16x1xf32> to vector<16x16xf32>
    %80 = arith.subf %76, %79 : vector<16x16xf32>
    %81 = math.exp %80 : vector<16x16xf32>
    %cst_30 = arith.constant dense<0.000000e+00> : vector<16xf32>
    %82 = vector.multi_reduction <add>, %81, %cst_30 [1] : vector<16x16xf32> to vector<16xf32>
    %83 = vector.shape_cast %82 : vector<16xf32> to vector<16x1xf32>
    %cst_31 = arith.constant dense<0.000000e+00> : vector<16x32xf32>
    %84 = tpu.matmul %81, %75, %cst_31 {dimension_numbers = #tpu.dot_dimension_numbers<[1], [0], [0], [1], [0, 0, 1, 1], [], []>} : vector<16x16xf32>, vector<16x32xf32>, vector<16x32xf32> -> vector<16x32xf32>
    %85 = tpu.reciprocal %83 : vector<16x1xf32> -> vector<16x1xf32>
    %86 = vector.broadcast %85 : vector<16x1xf32> to vector<16x32xf32>
    %87 = arith.mulf %84, %86 : vector<16x32xf32>
    %c0_32 = arith.constant 0 : index
    %c96 = arith.constant 96 : index
    %88 = vector.load %arg14[%c0_32, %c96] : memref<32x128xf32, #tpu.memory_space<vmem>>, vector<16x32xf32>
    tpu.vector_store %arg14[%c0_32, %c96], %87 {strides = array<i32>} : memref<32x128xf32, #tpu.memory_space<vmem>>, vector<16x32xf32>,
    %89 = vector.extract_strided_slice %24 {offsets = [16, 0], sizes = [16, 32], strides = [1, 1]} : vector<32x384xf32> to vector<16x32xf32>
    %90 = vector.extract_strided_slice %24 {offsets = [16, 128], sizes = [16, 32], strides = [1, 1]} : vector<32x384xf32> to vector<16x32xf32>
    %91 = vector.extract_strided_slice %24 {offsets = [16, 256], sizes = [16, 32], strides = [1, 1]} : vector<32x384xf32> to vector<16x32xf32>
    %cst_33 = arith.constant dense<0.000000e+00> : vector<16x16xf32>
    %92 = tpu.matmul %89, %90, %cst_33 {dimension_numbers = #tpu.dot_dimension_numbers<[1], [1], [0], [0], [0, 0, 1, 0], [], []>} : vector<16x32xf32>, vector<16x32xf32>, vector<16x16xf32> -> vector<16x16xf32>
    %cst_34 = arith.constant dense<0xFF800000> : vector<16xf32>
    %93 = vector.multi_reduction <maximumf>, %92, %cst_34 [1] : vector<16x16xf32> to vector<16xf32>
    %94 = vector.shape_cast %93 : vector<16xf32> to vector<16x1xf32>
    %95 = vector.broadcast %94 : vector<16x1xf32> to vector<16x16xf32>
    %96 = arith.subf %92, %95 : vector<16x16xf32>
    %97 = math.exp %96 : vector<16x16xf32>
    %cst_35 = arith.constant dense<0.000000e+00> : vector<16xf32>
    %98 = vector.multi_reduction <add>, %97, %cst_35 [1] : vector<16x16xf32> to vector<16xf32>
    %99 = vector.shape_cast %98 : vector<16xf32> to vector<16x1xf32>
    %cst_36 = arith.constant dense<0.000000e+00> : vector<16x32xf32>
    %100 = tpu.matmul %97, %91, %cst_36 {dimension_numbers = #tpu.dot_dimension_numbers<[1], [0], [0], [1], [0, 0, 1, 1], [], []>} : vector<16x16xf32>, vector<16x32xf32>, vector<16x32xf32> -> vector<16x32xf32>
    %101 = tpu.reciprocal %99 : vector<16x1xf32> -> vector<16x1xf32>
    %102 = vector.broadcast %101 : vector<16x1xf32> to vector<16x32xf32>
    %103 = arith.mulf %100, %102 : vector<16x32xf32>
    %c16 = arith.constant 16 : index
    %c0_37 = arith.constant 0 : index
    %104 = vector.load %arg14[%c16, %c0_37] : memref<32x128xf32, #tpu.memory_space<vmem>>, vector<16x32xf32>
    tpu.vector_store %arg14[%c16, %c0_37], %103 {strides = array<i32>} : memref<32x128xf32, #tpu.memory_space<vmem>>, vector<16x32xf32>,
    %105 = vector.extract_strided_slice %24 {offsets = [16, 32], sizes = [16, 32], strides = [1, 1]} : vector<32x384xf32> to vector<16x32xf32>
    %106 = vector.extract_strided_slice %24 {offsets = [16, 160], sizes = [16, 32], strides = [1, 1]} : vector<32x384xf32> to vector<16x32xf32>
    %107 = vector.extract_strided_slice %24 {offsets = [16, 288], sizes = [16, 32], strides = [1, 1]} : vector<32x384xf32> to vector<16x32xf32>
    %cst_38 = arith.constant dense<0.000000e+00> : vector<16x16xf32>
    %108 = tpu.matmul %105, %106, %cst_38 {dimension_numbers = #tpu.dot_dimension_numbers<[1], [1], [0], [0], [0, 0, 1, 0], [], []>} : vector<16x32xf32>, vector<16x32xf32>, vector<16x16xf32> -> vector<16x16xf32>
    %cst_39 = arith.constant dense<0xFF800000> : vector<16xf32>
    %109 = vector.multi_reduction <maximumf>, %108, %cst_39 [1] : vector<16x16xf32> to vector<16xf32>
    %110 = vector.shape_cast %109 : vector<16xf32> to vector<16x1xf32>
    %111 = vector.broadcast %110 : vector<16x1xf32> to vector<16x16xf32>
    %112 = arith.subf %108, %111 : vector<16x16xf32>
    %113 = math.exp %112 : vector<16x16xf32>
    %cst_40 = arith.constant dense<0.000000e+00> : vector<16xf32>
    %114 = vector.multi_reduction <add>, %113, %cst_40 [1] : vector<16x16xf32> to vector<16xf32>
    %115 = vector.shape_cast %114 : vector<16xf32> to vector<16x1xf32>
    %cst_41 = arith.constant dense<0.000000e+00> : vector<16x32xf32>
    %116 = tpu.matmul %113, %107, %cst_41 {dimension_numbers = #tpu.dot_dimension_numbers<[1], [0], [0], [1], [0, 0, 1, 1], [], []>} : vector<16x16xf32>, vector<16x32xf32>, vector<16x32xf32> -> vector<16x32xf32>
    %117 = tpu.reciprocal %115 : vector<16x1xf32> -> vector<16x1xf32>
    %118 = vector.broadcast %117 : vector<16x1xf32> to vector<16x32xf32>
    %119 = arith.mulf %116, %118 : vector<16x32xf32>
    %c16_42 = arith.constant 16 : index
    %c32_43 = arith.constant 32 : index
    %120 = vector.load %arg14[%c16_42, %c32_43] : memref<32x128xf32, #tpu.memory_space<vmem>>, vector<16x32xf32>
    tpu.vector_store %arg14[%c16_42, %c32_43], %119 {strides = array<i32>} : memref<32x128xf32, #tpu.memory_space<vmem>>, vector<16x32xf32>,
    %121 = vector.extract_strided_slice %24 {offsets = [16, 64], sizes = [16, 32], strides = [1, 1]} : vector<32x384xf32> to vector<16x32xf32>
    %122 = vector.extract_strided_slice %24 {offsets = [16, 192], sizes = [16, 32], strides = [1, 1]} : vector<32x384xf32> to vector<16x32xf32>
    %123 = vector.extract_strided_slice %24 {offsets = [16, 320], sizes = [16, 32], strides = [1, 1]} : vector<32x384xf32> to vector<16x32xf32>
    %cst_44 = arith.constant dense<0.000000e+00> : vector<16x16xf32>
    %124 = tpu.matmul %121, %122, %cst_44 {dimension_numbers = #tpu.dot_dimension_numbers<[1], [1], [0], [0], [0, 0, 1, 0], [], []>} : vector<16x32xf32>, vector<16x32xf32>, vector<16x16xf32> -> vector<16x16xf32>
    %cst_45 = arith.constant dense<0xFF800000> : vector<16xf32>
    %125 = vector.multi_reduction <maximumf>, %124, %cst_45 [1] : vector<16x16xf32> to vector<16xf32>
    %126 = vector.shape_cast %125 : vector<16xf32> to vector<16x1xf32>
    %127 = vector.broadcast %126 : vector<16x1xf32> to vector<16x16xf32>
    %128 = arith.subf %124, %127 : vector<16x16xf32>
    %129 = math.exp %128 : vector<16x16xf32>
    %cst_46 = arith.constant dense<0.000000e+00> : vector<16xf32>
    %130 = vector.multi_reduction <add>, %129, %cst_46 [1] : vector<16x16xf32> to vector<16xf32>
    %131 = vector.shape_cast %130 : vector<16xf32> to vector<16x1xf32>
    %cst_47 = arith.constant dense<0.000000e+00> : vector<16x32xf32>
    %132 = tpu.matmul %129, %123, %cst_47 {dimension_numbers = #tpu.dot_dimension_numbers<[1], [0], [0], [1], [0, 0, 1, 1], [], []>} : vector<16x16xf32>, vector<16x32xf32>, vector<16x32xf32> -> vector<16x32xf32>
    %133 = tpu.reciprocal %131 : vector<16x1xf32> -> vector<16x1xf32>
    %134 = vector.broadcast %133 : vector<16x1xf32> to vector<16x32xf32>
    %135 = arith.mulf %132, %134 : vector<16x32xf32>
    %c16_48 = arith.constant 16 : index
    %c64_49 = arith.constant 64 : index
    %136 = vector.load %arg14[%c16_48, %c64_49] : memref<32x128xf32, #tpu.memory_space<vmem>>, vector<16x32xf32>
    tpu.vector_store %arg14[%c16_48, %c64_49], %135 {strides = array<i32>} : memref<32x128xf32, #tpu.memory_space<vmem>>, vector<16x32xf32>,
    %137 = vector.extract_strided_slice %24 {offsets = [16, 96], sizes = [16, 32], strides = [1, 1]} : vector<32x384xf32> to vector<16x32xf32>
    %138 = vector.extract_strided_slice %24 {offsets = [16, 224], sizes = [16, 32], strides = [1, 1]} : vector<32x384xf32> to vector<16x32xf32>
    %139 = vector.extract_strided_slice %24 {offsets = [16, 352], sizes = [16, 32], strides = [1, 1]} : vector<32x384xf32> to vector<16x32xf32>
    %cst_50 = arith.constant dense<0.000000e+00> : vector<16x16xf32>
    %140 = tpu.matmul %137, %138, %cst_50 {dimension_numbers = #tpu.dot_dimension_numbers<[1], [1], [0], [0], [0, 0, 1, 0], [], []>} : vector<16x32xf32>, vector<16x32xf32>, vector<16x16xf32> -> vector<16x16xf32>
    %cst_51 = arith.constant dense<0xFF800000> : vector<16xf32>
    %141 = vector.multi_reduction <maximumf>, %140, %cst_51 [1] : vector<16x16xf32> to vector<16xf32>
    %142 = vector.shape_cast %141 : vector<16xf32> to vector<16x1xf32>
    %143 = vector.broadcast %142 : vector<16x1xf32> to vector<16x16xf32>
    %144 = arith.subf %140, %143 : vector<16x16xf32>
    %145 = math.exp %144 : vector<16x16xf32>
    %cst_52 = arith.constant dense<0.000000e+00> : vector<16xf32>
    %146 = vector.multi_reduction <add>, %145, %cst_52 [1] : vector<16x16xf32> to vector<16xf32>
    %147 = vector.shape_cast %146 : vector<16xf32> to vector<16x1xf32>
    %cst_53 = arith.constant dense<0.000000e+00> : vector<16x32xf32>
    %148 = tpu.matmul %145, %139, %cst_53 {dimension_numbers = #tpu.dot_dimension_numbers<[1], [0], [0], [1], [0, 0, 1, 1], [], []>} : vector<16x16xf32>, vector<16x32xf32>, vector<16x32xf32> -> vector<16x32xf32>
    %149 = tpu.reciprocal %147 : vector<16x1xf32> -> vector<16x1xf32>
    %150 = vector.broadcast %149 : vector<16x1xf32> to vector<16x32xf32>
    %151 = arith.mulf %148, %150 : vector<16x32xf32>
    %c16_54 = arith.constant 16 : index
    %c96_55 = arith.constant 96 : index
    %152 = vector.load %arg14[%c16_54, %c96_55] : memref<32x128xf32, #tpu.memory_space<vmem>>, vector<16x32xf32>
    tpu.vector_store %arg14[%c16_54, %c96_55], %151 {strides = array<i32>} : memref<32x128xf32, #tpu.memory_space<vmem>>, vector<16x32xf32>,
    %c0_56 = arith.constant 0 : index
    %c0_57 = arith.constant 0 : index
    %153 = vector.load %arg14[%c0_56, %c0_57] : memref<32x128xf32, #tpu.memory_space<vmem>>, vector<32x128xf32>
    %c0_58 = arith.constant 0 : index
    %c0_59 = arith.constant 0 : index
    %154 = vector.load %arg5[%c0_58, %c0_59] : memref<128x128xf32, #tpu.memory_space<vmem>>, vector<128x128xf32>
    %cst_60 = arith.constant dense<0.000000e+00> : vector<32x128xf32>
    %155 = tpu.matmul %153, %154, %cst_60 {dimension_numbers = #tpu.dot_dimension_numbers<[1], [0], [0], [1], [0, 0, 1, 1], [], []>} : vector<32x128xf32>, vector<128x128xf32>, vector<32x128xf32> -> vector<32x128xf32>
    %c0_61 = arith.constant 0 : index
    %c0_62 = arith.constant 0 : index
    %156 = vector.load %arg6[%c0_61, %c0_62] : memref<1x128xf32, #tpu.memory_space<vmem>>, vector<1x128xf32>
    %157 = vector.broadcast %156 : vector<1x128xf32> to vector<32x128xf32>
    %158 = arith.addf %155, %157 : vector<32x128xf32>
    %159 = arith.addf %0, %158 : vector<32x128xf32>
    %c0_63 = arith.constant 0 : index
    %c0_64 = arith.constant 0 : index
    %160 = vector.load %arg7[%c0_63, %c0_64] : memref<1x128xf32, #tpu.memory_space<vmem>>, vector<1x128xf32>
    %c0_65 = arith.constant 0 : index
    %c0_66 = arith.constant 0 : index
    %161 = vector.load %arg8[%c0_65, %c0_66] : memref<1x128xf32, #tpu.memory_space<vmem>>, vector<1x128xf32>
    %cst_67 = arith.constant dense<0.000000e+00> : vector<32xf32>
    %162 = vector.multi_reduction <add>, %159, %cst_67 [1] : vector<32x128xf32> to vector<32xf32>
    %163 = vector.shape_cast %162 : vector<32xf32> to vector<32x1xf32>
    %cst_68 = arith.constant 1.280000e+02 : f32
    %164 = vector.broadcast %cst_68 : f32 to vector<32x1xf32>
    %165 = arith.divf %163, %164 : vector<32x1xf32>
    %166 = vector.broadcast %165 : vector<32x1xf32> to vector<32x128xf32>
    %167 = arith.subf %159, %166 : vector<32x128xf32>
    %168 = arith.mulf %167, %167 : vector<32x128xf32>
    %cst_69 = arith.constant dense<0.000000e+00> : vector<32xf32>
    %169 = vector.multi_reduction <add>, %168, %cst_69 [1] : vector<32x128xf32> to vector<32xf32>
    %170 = vector.shape_cast %169 : vector<32xf32> to vector<32x1xf32>
    %cst_70 = arith.constant 1.280000e+02 : f32
    %171 = vector.broadcast %cst_70 : f32 to vector<32x1xf32>
    %172 = arith.divf %170, %171 : vector<32x1xf32>
    %cst_71 = arith.constant 9.99999974E-6 : f32
    %173 = vector.broadcast %cst_71 : f32 to vector<32x1xf32>
    %174 = arith.addf %172, %173 : vector<32x1xf32>
    %175 = math.rsqrt %174 : vector<32x1xf32>
    %176 = vector.broadcast %175 : vector<32x1xf32> to vector<32x128xf32>
    %177 = arith.mulf %167, %176 : vector<32x128xf32>
    %178 = vector.broadcast %160 : vector<1x128xf32> to vector<32x128xf32>
    %179 = arith.mulf %177, %178 : vector<32x128xf32>
    %180 = vector.broadcast %161 : vector<1x128xf32> to vector<32x128xf32>
    %181 = arith.addf %179, %180 : vector<32x128xf32>
    %c0_72 = arith.constant 0 : index
    %c0_73 = arith.constant 0 : index
    %182 = vector.load %arg9[%c0_72, %c0_73] : memref<128x512xf32, #tpu.memory_space<vmem>>, vector<128x512xf32>
    %cst_74 = arith.constant dense<0.000000e+00> : vector<32x512xf32>
    %183 = tpu.matmul %181, %182, %cst_74 {dimension_numbers = #tpu.dot_dimension_numbers<[1], [0], [0], [1], [0, 0, 1, 1], [], []>} : vector<32x128xf32>, vector<128x512xf32>, vector<32x512xf32> -> vector<32x512xf32>
    %c0_75 = arith.constant 0 : index
    %c0_76 = arith.constant 0 : index
    %184 = vector.load %arg10[%c0_75, %c0_76] : memref<1x512xf32, #tpu.memory_space<vmem>>, vector<1x512xf32>
    %185 = vector.broadcast %184 : vector<1x512xf32> to vector<32x512xf32>
    %186 = arith.addf %183, %185 : vector<32x512xf32>
    %cst_77 = arith.constant 5.000000e-01 : f32
    %187 = vector.broadcast %cst_77 : f32 to vector<32x512xf32>
    %188 = arith.mulf %187, %186 : vector<32x512xf32>
    %cst_78 = arith.constant 4.471500e-02 : f32
    %189 = vector.broadcast %cst_78 : f32 to vector<32x512xf32>
    %190 = arith.mulf %189, %186 : vector<32x512xf32>
    %191 = arith.mulf %190, %186 : vector<32x512xf32>
    %192 = arith.mulf %191, %186 : vector<32x512xf32>
    %193 = arith.addf %186, %192 : vector<32x512xf32>
    %cst_79 = arith.constant 0.797884583 : f32
    %194 = vector.broadcast %cst_79 : f32 to vector<32x512xf32>
    %195 = arith.mulf %194, %193 : vector<32x512xf32>
    %196 = math.tanh %195 : vector<32x512xf32>
    %cst_80 = arith.constant 1.000000e+00 : f32
    %197 = vector.broadcast %cst_80 : f32 to vector<32x512xf32>
    %198 = arith.addf %197, %196 : vector<32x512xf32>
    %199 = arith.mulf %188, %198 : vector<32x512xf32>
    %c0_81 = arith.constant 0 : index
    %c0_82 = arith.constant 0 : index
    %200 = vector.load %arg11[%c0_81, %c0_82] : memref<512x128xf32, #tpu.memory_space<vmem>>, vector<512x128xf32>
    %cst_83 = arith.constant dense<0.000000e+00> : vector<32x128xf32>
    %201 = tpu.matmul %199, %200, %cst_83 {dimension_numbers = #tpu.dot_dimension_numbers<[1], [0], [0], [1], [0, 0, 1, 1], [], []>} : vector<32x512xf32>, vector<512x128xf32>, vector<32x128xf32> -> vector<32x128xf32>
    %202 = arith.addf %159, %201 : vector<32x128xf32>
    %c0_84 = arith.constant 0 : index
    %c0_85 = arith.constant 0 : index
    %203 = vector.load %arg12[%c0_84, %c0_85] : memref<1x128xf32, #tpu.memory_space<vmem>>, vector<1x128xf32>
    %204 = vector.broadcast %203 : vector<1x128xf32> to vector<32x128xf32>
    %205 = arith.addf %202, %204 : vector<32x128xf32>
    %c0_86 = arith.constant 0 : index
    %c0_87 = arith.constant 0 : index
    %206 = vector.load %arg13[%c0_86, %c0_87] : memref<32x128xf32, #tpu.memory_space<vmem>>, vector<32x128xf32>
    tpu.vector_store %arg13[%c0_86, %c0_87], %205 {strides = array<i32>} : memref<32x128xf32, #tpu.memory_space<vmem>>, vector<32x128xf32>,
    return
  }
  func.func @transform_0(%arg0: i32) -> (i32, i32) {
    %c0_i32 = arith.constant 0 : i32
    %c0_i32_0 = arith.constant 0 : i32
    return %arg0, %c0_i32 : i32, i32
  }
  func.func @transform_1(%arg0: i32) -> (i32, i32) {
    %c0_i32 = arith.constant 0 : i32
    %c0_i32_0 = arith.constant 0 : i32
    %c0_i32_1 = arith.constant 0 : i32
    return %c0_i32, %c0_i32_0 : i32, i32
  }
  func.func @transform_2(%arg0: i32) -> (i32, i32) {
    %c0_i32 = arith.constant 0 : i32
    %c0_i32_0 = arith.constant 0 : i32
    %c0_i32_1 = arith.constant 0 : i32
    return %c0_i32, %c0_i32_0 : i32, i32
  }
  func.func @transform_3(%arg0: i32) -> (i32, i32) {
    %c0_i32 = arith.constant 0 : i32
    %c0_i32_0 = arith.constant 0 : i32
    %c0_i32_1 = arith.constant 0 : i32
    return %c0_i32, %c0_i32_0 : i32, i32
  }
  func.func @transform_4(%arg0: i32) -> (i32, i32) {
    %c0_i32 = arith.constant 0 : i32
    %c0_i32_0 = arith.constant 0 : i32
    %c0_i32_1 = arith.constant 0 : i32
    return %c0_i32, %c0_i32_0 : i32, i32
  }
  func.func @transform_5(%arg0: i32) -> (i32, i32) {
    %c0_i32 = arith.constant 0 : i32
    %c0_i32_0 = arith.constant 0 : i32
    %c0_i32_1 = arith.constant 0 : i32
    return %c0_i32, %c0_i32_0 : i32, i32
  }
  func.func @transform_6(%arg0: i32) -> (i32, i32) {
    %c0_i32 = arith.constant 0 : i32
    %c0_i32_0 = arith.constant 0 : i32
    %c0_i32_1 = arith.constant 0 : i32
    return %c0_i32, %c0_i32_0 : i32, i32
  }
  func.func @transform_7(%arg0: i32) -> (i32, i32) {
    %c0_i32 = arith.constant 0 : i32
    %c0_i32_0 = arith.constant 0 : i32
    %c0_i32_1 = arith.constant 0 : i32
    return %c0_i32, %c0_i32_0 : i32, i32
  }
  func.func @transform_8(%arg0: i32) -> (i32, i32) {
    %c0_i32 = arith.constant 0 : i32
    %c0_i32_0 = arith.constant 0 : i32
    %c0_i32_1 = arith.constant 0 : i32
    return %c0_i32, %c0_i32_0 : i32, i32
  }
  func.func @transform_9(%arg0: i32) -> (i32, i32) {
    %c0_i32 = arith.constant 0 : i32
    %c0_i32_0 = arith.constant 0 : i32
    %c0_i32_1 = arith.constant 0 : i32
    return %c0_i32, %c0_i32_0 : i32, i32
  }
  func.func @transform_10(%arg0: i32) -> (i32, i32) {
    %c0_i32 = arith.constant 0 : i32
    %c0_i32_0 = arith.constant 0 : i32
    %c0_i32_1 = arith.constant 0 : i32
    return %c0_i32, %c0_i32_0 : i32, i32
  }
  func.func @transform_11(%arg0: i32) -> (i32, i32) {
    %c0_i32 = arith.constant 0 : i32
    %c0_i32_0 = arith.constant 0 : i32
    %c0_i32_1 = arith.constant 0 : i32
    return %c0_i32, %c0_i32_0 : i32, i32
  }
  func.func @transform_12(%arg0: i32) -> (i32, i32) {
    %c0_i32 = arith.constant 0 : i32
    %c0_i32_0 = arith.constant 0 : i32
    return %arg0, %c0_i32 : i32, i32
  }
}

</mosaic_0001>

<llo_original>
// kernel: block_forward.1
$region0: #{block_forward.1}
  #allocation0 [shape = 'u32[]', space=smem, size = 0x4, offset = 0x4, fixed_abs, tag = 'smem constant byte address 0x4 - core index']
  #allocation1 [shape = 'u32[144,128]{1,0:T(1,128)}', space=vmem, size = 0x12000, scoped, tag = 'internal scratch']
  #allocation2 [shape = 'f32[32,128]{1,0:T(8,128)}', space=vmem, size = 0x4000, scoped, tag = 'scratch operand']
  %s0 = inlined_call_operand.hbm [shape: f32[32,128], index: 0, kind: input, shape index: {}]
  %s1 = inlined_call_operand.vmem [shape: f32[1,128], index: 1, kind: input, shape index: {}]
  %s2 = inlined_call_operand.vmem [shape: f32[1,128], index: 2, kind: input, shape index: {}]
  %s3 = inlined_call_operand.vmem [shape: f32[128,384], index: 3, kind: input, shape index: {}]
  %s4 = inlined_call_operand.vmem [shape: f32[128,128], index: 4, kind: input, shape index: {}]
  %s5 = inlined_call_operand.vmem [shape: f32[1,128], index: 5, kind: input, shape index: {}]
  %s6 = inlined_call_operand.hbm [shape: f32[1,128], index: 6, kind: input, shape index: {}]
  %s7 = inlined_call_operand.hbm [shape: f32[1,128], index: 7, kind: input, shape index: {}]
  %s8 = inlined_call_operand.vmem [shape: f32[128,512], index: 8, kind: input, shape index: {}]
  %s9 = inlined_call_operand.vmem [shape: f32[1,512], index: 9, kind: input, shape index: {}]
  %s10 = inlined_call_operand.hbm [shape: f32[512,128], index: 10, kind: input, shape index: {}]
  %s11 = inlined_call_operand.hbm [shape: f32[1,128], index: 11, kind: input, shape index: {}]
  %s12 = inlined_call_operand.hbm [shape: f32[32,128], index: 12, kind: output, shape index: {}]
  %s13 = sld [smem:[#allocation0]]
  $region78: #{block_forward.1} parent=0
    _
  %s15 = ssub.s32 1, %s13
  %s16 = scalar_select 0, %s15, %s13
  $region1: #{block_forward.1} parent=0
    #allocation3 [shape = 'u8[16384]{0}', space=vmem, size = 0x4000, scoped, tag = 'input window, operand 0, single buffered']
    #allocation4 [shape = 's32[1]{0}', space=sflag, size = 0x4, scoped, tag = 'scoped memory for block_forward.1']
    #allocation5 [shape = 's32[1]{0}', space=sflag, size = 0x4, scoped, tag = 'scoped memory for block_forward.1']
    #allocation6 [shape = 'u8[512]{0}', space=vmem, size = 0x400, scoped, tag = 'input window, operand 6, single buffered']
    #allocation7 [shape = 's32[1]{0}', space=sflag, size = 0x4, scoped, tag = 'scoped memory for block_forward.1']
    #allocation8 [shape = 'u8[512]{0}', space=vmem, size = 0x400, scoped, tag = 'input window, operand 7, single buffered']
    #allocation9 [shape = 'u8[262144]{0}', space=vmem, size = 0x40000, scoped, tag = 'input window, operand 10, single buffered']
    #allocation10 [shape = 's32[1]{0}', space=sflag, size = 0x4, scoped, tag = 'scoped memory for block_forward.1']
    #allocation11 [shape = 'u8[512]{0}', space=vmem, size = 0x400, scoped, tag = 'input window, operand 11, single buffered']
    #allocation12 [shape = 'u8[16384]{0}', space=vmem, size = 0x4000, scoped, tag = 'output window, operand 0, single buffered']
    %17 = vsyncpa [#allocation4], 0
    %18 = vsyncpa [#allocation7], 0
    %19 = vsyncpa [#allocation10], 0
    %20 = vsyncpa [#allocation5], 0
    // Predicated region
    $region2: #{block_forward.1} parent=1 // pred_check
      _
    $region3: #{block_forward.1} parent=1 // pred_check_branch
      %22 = sbr.rel (0) target = $region5
    $region4: #{block_forward.1} parent=1 // pred_region
      %s24 = ssub.s32 512, 512
      %25 = vsyncadd [#allocation4], %s24
      %s26 = sshll.u32 [#allocation3], 4
      %s27 = int_to_ptr.vmem [resolvable:$true] %s26
      %32 = dma.hbm_to_vmem [thread:$0]  %s0, 512, %s27, [#allocation4], 128, 128, 8
    $region5: #{block_forward.1} parent=1 // pred_fallthru
      _
    // Predicated region
    $region6: #{block_forward.1} parent=1 // pred_check
      _
    $region7: #{block_forward.1} parent=1 // pred_check_branch
      %34 = sbr.rel (0) target = $region9
    $region8: #{block_forward.1} parent=1 // pred_region
      _
    $region9: #{block_forward.1} parent=1 // pred_fallthru
      _
    // Predicated region
    $region10: #{block_forward.1} parent=1 // pred_check
      _
    $region11: #{block_forward.1} parent=1 // pred_check_branch
      %36 = sbr.rel (0) target = $region13
    $region12: #{block_forward.1} parent=1 // pred_region
      _
    $region13: #{block_forward.1} parent=1 // pred_fallthru
      _
    // Predicated region
    $region14: #{block_forward.1} parent=1 // pred_check
      _
    $region15: #{block_forward.1} parent=1 // pred_check_branch
      %38 = sbr.rel (0) target = $region17
    $region16: #{block_forward.1} parent=1 // pred_region
      _
    $region17: #{block_forward.1} parent=1 // pred_fallthru
      _
    // Predicated region
    $region18: #{block_forward.1} parent=1 // pred_check
      _
    $region19: #{block_forward.1} parent=1 // pred_check_branch
      %40 = sbr.rel (0) target = $region21
    $region20: #{block_forward.1} parent=1 // pred_region
      _
    $region21: #{block_forward.1} parent=1 // pred_fallthru
      _
    // Predicated region
    $region22: #{block_forward.1} parent=1 // pred_check
      _
    $region23: #{block_forward.1} parent=1 // pred_check_branch
      %42 = sbr.rel (0) target = $region25
    $region24: #{block_forward.1} parent=1 // pred_region
      _
    $region25: #{block_forward.1} parent=1 // pred_fallthru
      _
    // Predicated region
    $region26: #{block_forward.1} parent=1 // pred_check
      _
    $region27: #{block_forward.1} parent=1 // pred_check_branch
      %44 = sbr.rel (0) target = $region29
    $region28: #{block_forward.1} parent=1 // pred_region
      %s46 = ssub.s32 16, 16
      %47 = vsyncadd [#allocation7], %s46
      %s49 = sshll.u32 [#allocation6], 4
      %s50 = int_to_ptr.vmem [resolvable:$true] %s49
      %52 = dma.hbm_to_vmem [thread:$0]  %s6, 16, %s50, [#allocation7]
    $region29: #{block_forward.1} parent=1 // pred_fallthru
      _
    // Predicated region
    $region30: #{block_forward.1} parent=1 // pred_check
      _
    $region31: #{block_forward.1} parent=1 // pred_check_branch
      %54 = sbr.rel (0) target = $region33
    $region32: #{block_forward.1} parent=1 // pred_region
      %s56 = ssub.s32 16, 16
      %57 = vsyncadd [#allocation7], %s56
      %s59 = sshll.u32 [#allocation8], 4
      %s60 = int_to_ptr.vmem [resolvable:$true] %s59
      %62 = dma.hbm_to_vmem [thread:$0]  %s7, 16, %s60, [#allocation7]
    $region33: #{block_forward.1} parent=1 // pred_fallthru
      _
    // Predicated region
    $region34: #{block_forward.1} parent=1 // pred_check
      _
    $region35: #{block_forward.1} parent=1 // pred_check_branch
      %64 = sbr.rel (0) target = $region37
    $region36: #{block_forward.1} parent=1 // pred_region
      _
    $region37: #{block_forward.1} parent=1 // pred_fallthru
      _
    // Predicated region
    $region38: #{block_forward.1} parent=1 // pred_check
      _
    $region39: #{block_forward.1} parent=1 // pred_check_branch
      %66 = sbr.rel (0) target = $region41
    $region40: #{block_forward.1} parent=1 // pred_region
      _
    $region41: #{block_forward.1} parent=1 // pred_fallthru
      _
    // Predicated region
    $region42: #{block_forward.1} parent=1 // pred_check
      _
    $region43: #{block_forward.1} parent=1 // pred_check_branch
      %68 = sbr.rel (0) target = $region45
    $region44: #{block_forward.1} parent=1 // pred_region
      %s70 = ssub.s32 8192, 8192
      %71 = vsyncadd [#allocation10], %s70
      %s72 = sshll.u32 [#allocation9], 4
      %s73 = int_to_ptr.vmem [resolvable:$true] %s72
      %78 = dma.hbm_to_vmem [thread:$0]  %s10, 8192, %s73, [#allocation10], 128, 128, 8
    $region45: #{block_forward.1} parent=1 // pred_fallthru
      _
    // Predicated region
    $region46: #{block_forward.1} parent=1 // pred_check
      _
    $region47: #{block_forward.1} parent=1 // pred_check_branch
      %80 = sbr.rel (0) target = $region49
    $region48: #{block_forward.1} parent=1 // pred_region
      %s82 = ssub.s32 16, 16
      %83 = vsyncadd [#allocation10], %s82
      %s85 = sshll.u32 [#allocation11], 4
      %s86 = int_to_ptr.vmem [resolvable:$true] %s85
      %88 = dma.hbm_to_vmem [thread:$0]  %s11, 16, %s86, [#allocation10]
    $region49: #{block_forward.1} parent=1 // pred_fallthru
      _
    // Predicated region
    $region50: #{block_forward.1} parent=1 // pred_check
      _
    $region51: #{block_forward.1} parent=1 // pred_check_branch
      %90 = sbr.rel (0) target = $region53
    $region52: #{block_forward.1} parent=1 // pred_region
      %91 = dma.done [#allocation4], 512
    $region53: #{block_forward.1} parent=1 // pred_fallthru
      _
    // Predicated region
    $region54: #{block_forward.1} parent=1 // pred_check
      _
    $region55: #{block_forward.1} parent=1 // pred_check_branch
      %93 = sbr.rel (0) target = $region57
    $region56: #{block_forward.1} parent=1 // pred_region
      %94 = dma.done [#allocation7], 16
    $region57: #{block_forward.1} parent=1 // pred_fallthru
      _
    // Predicated region
    $region58: #{block_forward.1} parent=1 // pred_check
      _
    $region59: #{block_forward.1} parent=1 // pred_check_branch
      %96 = sbr.rel (0) target = $region61
    $region60: #{block_forward.1} parent=1 // pred_region
      %97 = dma.done [#allocation7], 16
    $region61: #{block_forward.1} parent=1 // pred_fallthru
      _
    // Predicated region
    $region62: #{block_forward.1} parent=1 // pred_check
      _
    $region63: #{block_forward.1} parent=1 // pred_check_branch
      %99 = sbr.rel (0) target = $region65
    $region64: #{block_forward.1} parent=1 // pred_region
      %100 = dma.done [#allocation10], 8192
    $region65: #{block_forward.1} parent=1 // pred_fallthru
      _
    // Predicated region
    $region66: #{block_forward.1} parent=1 // pred_check
      _
    $region67: #{block_forward.1} parent=1 // pred_check_branch
      %102 = sbr.rel (0) target = $region69
    $region68: #{block_forward.1} parent=1 // pred_region
      %103 = dma.done [#allocation10], 16
    $region69: #{block_forward.1} parent=1 // pred_fallthru
      _
    %v104 = vld [vmem:[#allocation3] sm:$0xff]
    %v105 = vld [vmem:[#allocation3 + $0x8] sm:$0xff]
    %v106 = vld [vmem:[#allocation3 + $0x10] sm:$0xff]
    %v107 = vld [vmem:[#allocation3 + $0x18] sm:$0xff]
    %v108 = vld [vmem:[%s1] sm:$0x1]
    %v109 = vld [vmem:[%s2] sm:$0x1]
    %110 = vadd.xlane.f32.xlu0 %v104
    %v111 = vpop.xlane.xlu0 %110
    %112 = vadd.xlane.f32.xlu0 %v105
    %v113 = vpop.xlane.xlu0 %112
    %114 = vadd.xlane.f32.xlu0 %v106
    %v115 = vpop.xlane.xlu0 %114
    %116 = vadd.xlane.f32.xlu0 %v107
    %v117 = vpop.xlane.xlu0 %116
    %v118 = vrcp.pop 128.0
    %v119 = vmul.f32 %v111, %v118
    %v120 = vmul.f32 %v113, %v118
    %v121 = vmul.f32 %v115, %v118
    %v122 = vmul.f32 %v117, %v118
    %v123 = vsub.f32 %v104, %v119
    %v124 = vsub.f32 %v105, %v120
    %v125 = vsub.f32 %v106, %v121
    %v126 = vsub.f32 %v107, %v122
    %v127 = vmul.f32 %v123, %v123
    %v128 = vmul.f32 %v124, %v124
    %v129 = vmul.f32 %v125, %v125
    %v130 = vmul.f32 %v126, %v126
    %131 = vadd.xlane.f32.xlu0 %v127
    %v132 = vpop.xlane.xlu0 %131
    %133 = vadd.xlane.f32.xlu0 %v128
    %v134 = vpop.xlane.xlu0 %133
    %135 = vadd.xlane.f32.xlu0 %v129
    %v136 = vpop.xlane.xlu0 %135
    %137 = vadd.xlane.f32.xlu0 %v130
    %v138 = vpop.xlane.xlu0 %137
    %v139 = vmul.f32 %v132, %v118
    %v140 = vmul.f32 %v134, %v118
    %v141 = vmul.f32 %v136, %v118
    %v142 = vmul.f32 %v138, %v118
    %v143 = vadd.f32 %v139, 1e-05
    %v144 = vadd.f32 %v140, 1e-05
    %v145 = vadd.f32 %v141, 1e-05
    %v146 = vadd.f32 %v142, 1e-05
    %v147 = vrsqrt.pop %v143
    %v148 = vrsqrt.pop %v144
    %v149 = vrsqrt.pop %v145
    %v150 = vrsqrt.pop %v146
    %v151 = vmul.f32 %v123, %v147
    %v152 = vmul.f32 %v124, %v148
    %v153 = vmul.f32 %v125, %v149
    %v154 = vmul.f32 %v126, %v150
    %v156 = vlaneseq
    %v157 = vshrl.u32 %v156, 7
    %v158 = vsub.s32 0, %v157
    %v159 = vrot.slane %v108, %v158
    %v161 = vmul.f32 %v151, %v159
    %v162 = vmul.f32 %v152, %v159
    %v163 = vmul.f32 %v153, %v159
    %v164 = vmul.f32 %v154, %v159
    %v166 = vlaneseq
    %v167 = vshrl.u32 %v166, 7
    %v168 = vsub.s32 0, %v167
    %v169 = vrot.slane %v109, %v168
    %v171 = vadd.f32 %v161, %v169
    %v172 = vadd.f32 %v162, %v169
    %v173 = vadd.f32 %v163, %v169
    %v174 = vadd.f32 %v164, %v169
    %v175 = vld [vmem:[%s3] sm:$0xff]
    %v176 = vld [vmem:[%s3 + $0x8] sm:$0xff]
    %v177 = vld [vmem:[%s3 + $0x10] sm:$0xff]
    %v178 = vld [vmem:[%s3 + $0x18] sm:$0xff]
    %v179 = vld [vmem:[%s3 + $0x20] sm:$0xff]
    %v180 = vld [vmem:[%s3 + $0x28] sm:$0xff]
    %v181 = vld [vmem:[%s3 + $0x30] sm:$0xff]
    %v182 = vld [vmem:[%s3 + $0x38] sm:$0xff]
    %v183 = vld [vmem:[%s3 + $0x40] sm:$0xff]
    %v184 = vld [vmem:[%s3 + $0x48] sm:$0xff]
    %v185 = vld [vmem:[%s3 + $0x50] sm:$0xff]
    %v186 = vld [vmem:[%s3 + $0x58] sm:$0xff]
    %v187 = vld [vmem:[%s3 + $0x60] sm:$0xff]
    %v188 = vld [vmem:[%s3 + $0x68] sm:$0xff]
    %v189 = vld [vmem:[%s3 + $0x70] sm:$0xff]
    %v190 = vld [vmem:[%s3 + $0x78] sm:$0xff]
    %v191 = vld [vmem:[%s3 + $0x80] sm:$0xff]
    %v192 = vld [vmem:[%s3 + $0x88] sm:$0xff]
    %v193 = vld [vmem:[%s3 + $0x90] sm:$0xff]
    %v194 = vld [vmem:[%s3 + $0x98] sm:$0xff]
    %v195 = vld [vmem:[%s3 + $0xa0] sm:$0xff]
    %v196 = vld [vmem:[%s3 + $0xa8] sm:$0xff]
    %v197 = vld [vmem:[%s3 + $0xb0] sm:$0xff]
    %v198 = vld [vmem:[%s3 + $0xb8] sm:$0xff]
    %v199 = vld [vmem:[%s3 + $0xc0] sm:$0xff]
    %v200 = vld [vmem:[%s3 + $0xc8] sm:$0xff]
    %v201 = vld [vmem:[%s3 + $0xd0] sm:$0xff]
    %v202 = vld [vmem:[%s3 + $0xd8] sm:$0xff]
    %v203 = vld [vmem:[%s3 + $0xe0] sm:$0xff]
    %v204 = vld [vmem:[%s3 + $0xe8] sm:$0xff]
    %v205 = vld [vmem:[%s3 + $0xf0] sm:$0xff]
    %v206 = vld [vmem:[%s3 + $0xf8] sm:$0xff]
    %v207 = vld [vmem:[%s3 + $0x100] sm:$0xff]
    %v208 = vld [vmem:[%s3 + $0x108] sm:$0xff]
    %v209 = vld [vmem:[%s3 + $0x110] sm:$0xff]
    %v210 = vld [vmem:[%s3 + $0x118] sm:$0xff]
    %v211 = vld [vmem:[%s3 + $0x120] sm:$0xff]
    %v212 = vld [vmem:[%s3 + $0x128] sm:$0xff]
    %v213 = vld [vmem:[%s3 + $0x130] sm:$0xff]
    %v214 = vld [vmem:[%s3 + $0x138] sm:$0xff]
    %v215 = vld [vmem:[%s3 + $0x140] sm:$0xff]
    %v216 = vld [vmem:[%s3 + $0x148] sm:$0xff]
    %v217 = vld [vmem:[%s3 + $0x150] sm:$0xff]
    %v218 = vld [vmem:[%s3 + $0x158] sm:$0xff]
    %v219 = vld [vmem:[%s3 + $0x160] sm:$0xff]
    %v220 = vld [vmem:[%s3 + $0x168] sm:$0xff]
    %v221 = vld [vmem:[%s3 + $0x170] sm:$0xff]
    %v222 = vld [vmem:[%s3 + $0x178] sm:$0xff]
    %223 = vmatprep.subr.mxu0 %v221
    %224 = vmatpush1.msra.mxu0 %v220
    %225 = vmatprep.subr.mxu0 %v218
    %226 = vmatpush1.msra.mxu0 %v217
    %227 = vmatprep.subr.mxu0 %v215
    %228 = vmatpush1.msra.mxu0 %v214
    %229 = vmatprep.subr.mxu0 %v212
    %230 = vmatpush1.msra.mxu0 %v211
    %231 = vmatprep.subr.mxu0 %v209
    %232 = vmatpush1.msra.mxu0 %v208
    %233 = vmatprep.subr.mxu0 %v206
    %234 = vmatpush1.msra.mxu0 %v205
    %235 = vmatprep.subr.mxu0 %v203
    %236 = vmatpush1.msra.mxu0 %v202
    %237 = vmatprep.subr.mxu0 %v200
    %238 = vmatpush1.msra.mxu0 %v199
    %239 = vmatprep.subr.mxu0 %v197
    %240 = vmatpush1.msra.mxu0 %v196
    %241 = vmatprep.subr.mxu0 %v194
    %242 = vmatpush1.msra.mxu0 %v193
    %243 = vmatprep.subr.mxu0 %v191
    %244 = vmatpush1.msra.mxu0 %v190
    %245 = vmatprep.subr.mxu0 %v188
    %246 = vmatpush1.msra.mxu0 %v187
    %247 = vmatprep.subr.mxu0 %v185
    %248 = vmatpush1.msra.mxu0 %v184
    %249 = vmatprep.subr.mxu0 %v182
    %250 = vmatpush1.msra.mxu0 %v181
    %251 = vmatprep.subr.mxu0 %v179
    %252 = vmatpush1.msra.mxu0 %v178
    %253 = vmatprep.subr.mxu0 %v176
    %254 = vmatpush1.msra.mxu0 %v175
    %255 = vmatprep.subr.mxu0 0.0
    %256 = vmatpush2.msra.mxu0 0.0
    %257 = vmatprep.subr.mxu0 0.0
    %258 = vmatpush2.msra.mxu0 0.0
    %259 = vmatprep.subr.mxu0 0.0
    %260 = vmatpush2.msra.mxu0 0.0
    %261 = vmatprep.subr.mxu0 0.0
    %262 = vmatpush2.msra.mxu0 0.0
    %263 = vmatprep.subr.mxu0 0.0
    %264 = vmatpush2.msra.mxu0 0.0
    %265 = vmatprep.subr.mxu0 0.0
    %266 = vmatpush2.msra.mxu0 0.0
    %267 = vmatprep.subr.mxu0 0.0
    %268 = vmatpush2.msra.mxu0 0.0
    %269 = vmatprep.subr.mxu0 0.0
    %270 = vmatpush2.msra.mxu0 0.0
    %271 = vmatprep.subr.mxu0 0.0
    %272 = vmatpush2.msra.mxu0 0.0
    %273 = vmatprep.subr.mxu0 0.0
    %274 = vmatpush2.msra.mxu0 0.0
    %275 = vmatprep.subr.mxu0 0.0
    %276 = vmatpush2.msra.mxu0 0.0
    %277 = vmatprep.subr.mxu0 0.0
    %278 = vmatpush2.msra.mxu0 0.0
    %279 = vmatprep.subr.mxu0 0.0
    %280 = vmatpush2.msra.mxu0 0.0
    %281 = vmatprep.subr.mxu0 0.0
    %282 = vmatpush2.msra.mxu0 0.0
    %283 = vmatprep.subr.mxu0 0.0
    %284 = vmatpush2.msra.mxu0 0.0
    %285 = vmatprep.subr.mxu0 0.0
    %286 = vmatpush2.msra.mxu0 0.0
    %287 = vmatprep.mubr.f32.mxu0 0.0
    %288 = vmatmul.mubr.f32.gmra.mxu0 %v171
    %v289 = vpop.f32.mrf.mxu0
    %v290 = vadd.f32 0.0, %v289
    %v291 = vpop.f32.mrf.mxu0
    %v292 = vadd.f32 0.0, %v291
    %293 = vmatprep.mubr.f32.mxu0 0.0
    %294 = vmatmul.mubr.f32.gmra.mxu0 %v172
    %v295 = vpop.f32.mrf.mxu0
    %v296 = vadd.f32 0.0, %v295
    %v297 = vpop.f32.mrf.mxu0
    %v298 = vadd.f32 0.0, %v297
    %299 = vmatprep.mubr.f32.mxu0 0.0
    %300 = vmatmul.mubr.f32.gmra.mxu0 %v173
    %v301 = vpop.f32.mrf.mxu0
    %v302 = vadd.f32 0.0, %v301
    %v303 = vpop.f32.mrf.mxu0
    %v304 = vadd.f32 0.0, %v303
    %305 = vmatprep.mubr.f32.mxu0 0.0
    %306 = vmatmul.mubr.f32.gmra.mxu0 %v174
    %v307 = vpop.f32.mrf.mxu0
    %v308 = vadd.f32 0.0, %v307
    %v309 = vpop.f32.mrf.mxu0
    %v310 = vadd.f32 0.0, %v309
    %311 = vdwg.mxu0
    %312 = vmatprep.subr.mxu0 0.0
    %313 = vmatpush1.msra.mxu0 %v222
    %314 = vmatprep.subr.mxu0 0.0
    %315 = vmatpush1.msra.mxu0 %v219
    %316 = vmatprep.subr.mxu0 0.0
    %317 = vmatpush1.msra.mxu0 %v216
    %318 = vmatprep.subr.mxu0 0.0
    %319 = vmatpush1.msra.mxu0 %v213
    %320 = vmatprep.subr.mxu0 0.0
    %321 = vmatpush1.msra.mxu0 %v210
    %322 = vmatprep.subr.mxu0 0.0
    %323 = vmatpush1.msra.mxu0 %v207
    %324 = vmatprep.subr.mxu0 0.0
    %325 = vmatpush1.msra.mxu0 %v204
    %326 = vmatprep.subr.mxu0 0.0
    %327 = vmatpush1.msra.mxu0 %v201
    %328 = vmatprep.subr.mxu0 0.0
    %329 = vmatpush1.msra.mxu0 %v198
    %330 = vmatprep.subr.mxu0 0.0
    %331 = vmatpush1.msra.mxu0 %v195
    %332 = vmatprep.subr.mxu0 0.0
    %333 = vmatpush1.msra.mxu0 %v192
    %334 = vmatprep.subr.mxu0 0.0
    %335 = vmatpush1.msra.mxu0 %v189
    %336 = vmatprep.subr.mxu0 0.0
    %337 = vmatpush1.msra.mxu0 %v186
    %338 = vmatprep.subr.mxu0 0.0
    %339 = vmatpush1.msra.mxu0 %v183
    %340 = vmatprep.subr.mxu0 0.0
    %341 = vmatpush1.msra.mxu0 %v180
    %342 = vmatprep.subr.mxu0 0.0
    %343 = vmatpush1.msra.mxu0 %v177
    %344 = vmatprep.subr.mxu0 0.0
    %345 = vmatpush2.msra.mxu0 0.0
    %346 = vmatprep.subr.mxu0 0.0
    %347 = vmatpush2.msra.mxu0 0.0
    %348 = vmatprep.subr.mxu0 0.0
    %349 = vmatpush2.msra.mxu0 0.0
    %350 = vmatprep.subr.mxu0 0.0
    %351 = vmatpush2.msra.mxu0 0.0
    %352 = vmatprep.subr.mxu0 0.0
    %353 = vmatpush2.msra.mxu0 0.0
    %354 = vmatprep.subr.mxu0 0.0
    %355 = vmatpush2.msra.mxu0 0.0
    %356 = vmatprep.subr.mxu0 0.0
    %357 = vmatpush2.msra.mxu0 0.0
    %358 = vmatprep.subr.mxu0 0.0
    %359 = vmatpush2.msra.mxu0 0.0
    %360 = vmatprep.subr.mxu0 0.0
    %361 = vmatpush2.msra.mxu0 0.0
    %362 = vmatprep.subr.mxu0 0.0
    %363 = vmatpush2.msra.mxu0 0.0
    %364 = vmatprep.subr.mxu0 0.0
    %365 = vmatpush2.msra.mxu0 0.0
    %366 = vmatprep.subr.mxu0 0.0
    %367 = vmatpush2.msra.mxu0 0.0
    %368 = vmatprep.subr.mxu0 0.0
    %369 = vmatpush2.msra.mxu0 0.0
    %370 = vmatprep.subr.mxu0 0.0
    %371 = vmatpush2.msra.mxu0 0.0
    %372 = vmatprep.subr.mxu0 0.0
    %373 = vmatpush2.msra.mxu0 0.0
    %374 = vmatprep.subr.mxu0 0.0
    %375 = vmatpush2.msra.mxu0 0.0
    %376 = vmatprep.mubr.f32.mxu0 0.0
    %377 = vmatmul.mubr.f32.gmra.mxu0 %v171
    %v378 = vpop.f32.mrf.mxu0
    %v379 = vadd.f32 0.0, %v378
    %v380 = vpop.f32.mrf.mxu0
    %381 = vmatprep.mubr.f32.mxu0 0.0
    %382 = vmatmul.mubr.f32.gmra.mxu0 %v172
    %v383 = vpop.f32.mrf.mxu0
    %v384 = vadd.f32 0.0, %v383
    %v385 = vpop.f32.mrf.mxu0
    %386 = vmatprep.mubr.f32.mxu0 0.0
    %387 = vmatmul.mubr.f32.gmra.mxu0 %v173
    %v388 = vpop.f32.mrf.mxu0
    %v389 = vadd.f32 0.0, %v388
    %v390 = vpop.f32.mrf.mxu0
    %391 = vmatprep.mubr.f32.mxu0 0.0
    %392 = vmatmul.mubr.f32.gmra.mxu0 %v174
    %v393 = vpop.f32.mrf.mxu0
    %v394 = vadd.f32 0.0, %v393
    %v395 = vpop.f32.mrf.mxu0
    %396 = vdwg.mxu0
    %vm397 = vcmask 261120
    %v399 = vsel %vm397, %v290, 0
    %v402 = vsel %vm397, %v296, 0
    %v405 = vsel %vm397, %v292, 0
    %v408 = vsel %vm397, %v298, 0
    %410 = vmatprep.subr.mxu0 0.0
    %411 = vmatpush1.xpose.msra.mxu0 0.0
    %412 = vmatprep.subr.mxu0 0.0
    %413 = vmatpush1.xpose.msra.mxu0 0.0
    %414 = vmatprep.subr.mxu0 0.0
    %415 = vmatpush1.xpose.msra.mxu0 0.0
    %416 = vmatprep.subr.mxu0 0.0
    %417 = vmatpush1.xpose.msra.mxu0 0.0
    %418 = vmatprep.subr.mxu0 0.0
    %419 = vmatpush1.xpose.msra.mxu0 0.0
    %420 = vmatprep.subr.mxu0 0.0
    %421 = vmatpush1.xpose.msra.mxu0 0.0
    %422 = vmatprep.subr.mxu0 0.0
    %423 = vmatpush1.xpose.msra.mxu0 0.0
    %424 = vmatprep.subr.mxu0 0.0
    %425 = vmatpush1.xpose.msra.mxu0 0.0
    %426 = vmatprep.subr.mxu0 0.0
    %427 = vmatpush1.xpose.msra.mxu0 0.0
    %428 = vmatprep.subr.mxu0 0.0
    %429 = vmatpush1.xpose.msra.mxu0 0.0
    %430 = vmatprep.subr.mxu0 0.0
    %431 = vmatpush1.xpose.msra.mxu0 0.0
    %432 = vmatprep.subr.mxu0 0.0
    %433 = vmatpush1.xpose.msra.mxu0 0.0
    %434 = vmatprep.subr.mxu0 0.0
    %435 = vmatpush1.xpose.msra.mxu0 0.0
    %436 = vmatprep.subr.mxu0 0.0
    %437 = vmatpush1.xpose.msra.mxu0 0.0
    %438 = vmatprep.subr.mxu0 0.0
    %439 = vmatpush1.xpose.msra.mxu0 %v408
    %440 = vmatprep.subr.mxu0 0.0
    %441 = vmatpush1.xpose.msra.mxu0 %v405
    %442 = vmatprep.subr.mxu0 0.0
    %443 = vmatpush2.xpose.msra.mxu0 0.0
    %444 = vmatprep.subr.mxu0 0.0
    %445 = vmatpush2.xpose.msra.mxu0 0.0
    %446 = vmatprep.subr.mxu0 0.0
    %447 = vmatpush2.xpose.msra.mxu0 0.0
    %448 = vmatprep.subr.mxu0 0.0
    %449 = vmatpush2.xpose.msra.mxu0 0.0
    %450 = vmatprep.subr.mxu0 0.0
    %451 = vmatpush2.xpose.msra.mxu0 0.0
    %452 = vmatprep.subr.mxu0 0.0
    %453 = vmatpush2.xpose.msra.mxu0 0.0
    %454 = vmatprep.subr.mxu0 0.0
    %455 = vmatpush2.xpose.msra.mxu0 0.0
    %456 = vmatprep.subr.mxu0 0.0
    %457 = vmatpush2.xpose.msra.mxu0 0.0
    %458 = vmatprep.subr.mxu0 0.0
    %459 = vmatpush2.xpose.msra.mxu0 0.0
    %460 = vmatprep.subr.mxu0 0.0
    %461 = vmatpush2.xpose.msra.mxu0 0.0
    %462 = vmatprep.subr.mxu0 0.0
    %463 = vmatpush2.xpose.msra.mxu0 0.0
    %464 = vmatprep.subr.mxu0 0.0
    %465 = vmatpush2.xpose.msra.mxu0 0.0
    %466 = vmatprep.subr.mxu0 0.0
    %467 = vmatpush2.xpose.msra.mxu0 0.0
    %468 = vmatprep.subr.mxu0 0.0
    %469 = vmatpush2.xpose.msra.mxu0 0.0
    %470 = vmatprep.subr.mxu0 0.0
    %471 = vmatpush2.xpose.msra.mxu0 0.0
    %472 = vmatprep.subr.mxu0 0.0
    %473 = vmatpush2.xpose.msra.mxu0 0.0
    %474 = vmatprep.mubr.f32.mxu0 0.0
    %475 = vmatmul.mubr.f32.gmra.mxu0 %v399
    %v476 = vpop.f32.mrf.mxu0
    %v477 = vadd.f32 0.0, %v476
    %v478 = vpop.f32.mrf.mxu0
    %479 = vmatprep.mubr.f32.mxu0 0.0
    %480 = vmatmul.mubr.f32.gmra.mxu0 %v402
    %v481 = vpop.f32.mrf.mxu0
    %v482 = vadd.f32 0.0, %v481
    %v483 = vpop.f32.mrf.mxu0
    %484 = vdwg.mxu0
    %vm485 = vcmask 130048
    %v486 = vsel %vm485, %v477, -inf
    %487 = vmax.xlane.f32.xlu0 %v486
    %v488 = vpop.xlane.xlu0 %487
    %v489 = vsel %vm485, %v482, -inf
    %490 = vmax.xlane.f32.xlu0 %v489
    %v491 = vpop.xlane.xlu0 %490
    %v492 = vsub.f32 %v477, %v488
    %v493 = vsub.f32 %v482, %v491
    %v494 = vmul.f32 %v492, 1.442695
    %v495 = vpow.pop %v494
    %v496 = vmul.f32 %v493, 1.442695
    %v497 = vpow.pop %v496
    %v498 = vsel %vm485, %v495, 0.0
    %499 = vadd.xlane.f32.xlu0 %v498
    %v500 = vpop.xlane.xlu0 %499
    %v501 = vsel %vm485, %v497, 0.0
    %502 = vadd.xlane.f32.xlu0 %v501
    %v503 = vpop.xlane.xlu0 %502
    %v505 = vsel %vm485, %v495, 0
    %v508 = vsel %vm485, %v497, 0
    %510 = vmatprep.subr.mxu0 0.0
    %511 = vmatpush1.msra.mxu0 0.0
    %512 = vmatprep.subr.mxu0 0.0
    %513 = vmatpush1.msra.mxu0 0.0
    %514 = vmatprep.subr.mxu0 0.0
    %515 = vmatpush1.msra.mxu0 0.0
    %516 = vmatprep.subr.mxu0 0.0
    %517 = vmatpush1.msra.mxu0 0.0
    %518 = vmatprep.subr.mxu0 0.0
    %519 = vmatpush1.msra.mxu0 0.0
    %520 = vmatprep.subr.mxu0 0.0
    %521 = vmatpush1.msra.mxu0 0.0
    %522 = vmatprep.subr.mxu0 0.0
    %523 = vmatpush1.msra.mxu0 0.0
    %524 = vmatprep.subr.mxu0 0.0
    %525 = vmatpush1.msra.mxu0 0.0
    %526 = vmatprep.subr.mxu0 0.0
    %527 = vmatpush1.msra.mxu0 0.0
    %528 = vmatprep.subr.mxu0 0.0
    %529 = vmatpush1.msra.mxu0 0.0
    %530 = vmatprep.subr.mxu0 0.0
    %531 = vmatpush1.msra.mxu0 0.0
    %532 = vmatprep.subr.mxu0 0.0
    %533 = vmatpush1.msra.mxu0 0.0
    %534 = vmatprep.subr.mxu0 0.0
    %535 = vmatpush1.msra.mxu0 0.0
    %536 = vmatprep.subr.mxu0 0.0
    %537 = vmatpush1.msra.mxu0 0.0
    %538 = vmatprep.subr.mxu0 0.0
    %539 = vmatpush1.msra.mxu0 %v384
    %540 = vmatprep.subr.mxu0 0.0
    %541 = vmatpush1.msra.mxu0 %v379
    %542 = vmatprep.subr.mxu0 0.0
    %543 = vmatpush2.msra.mxu0 0.0
    %544 = vmatprep.subr.mxu0 0.0
    %545 = vmatpush2.msra.mxu0 0.0
    %546 = vmatprep.subr.mxu0 0.0
    %547 = vmatpush2.msra.mxu0 0.0
    %548 = vmatprep.subr.mxu0 0.0
    %549 = vmatpush2.msra.mxu0 0.0
    %550 = vmatprep.subr.mxu0 0.0
    %551 = vmatpush2.msra.mxu0 0.0
    %552 = vmatprep.subr.mxu0 0.0
    %553 = vmatpush2.msra.mxu0 0.0
    %554 = vmatprep.subr.mxu0 0.0
    %555 = vmatpush2.msra.mxu0 0.0
    %556 = vmatprep.subr.mxu0 0.0
    %557 = vmatpush2.msra.mxu0 0.0
    %558 = vmatprep.subr.mxu0 0.0
    %559 = vmatpush2.msra.mxu0 0.0
    %560 = vmatprep.subr.mxu0 0.0
    %561 = vmatpush2.msra.mxu0 0.0
    %562 = vmatprep.subr.mxu0 0.0
    %563 = vmatpush2.msra.mxu0 0.0
    %564 = vmatprep.subr.mxu0 0.0
    %565 = vmatpush2.msra.mxu0 0.0
    %566 = vmatprep.subr.mxu0 0.0
    %567 = vmatpush2.msra.mxu0 0.0
    %568 = vmatprep.subr.mxu0 0.0
    %569 = vmatpush2.msra.mxu0 0.0
    %570 = vmatprep.subr.mxu0 0.0
    %571 = vmatpush2.msra.mxu0 0.0
    %572 = vmatprep.subr.mxu0 0.0
    %573 = vmatpush2.msra.mxu0 0.0
    %574 = vmatprep.mubr.f32.mxu0 0.0
    %575 = vmatmul.mubr.f32.gmra.mxu0 %v505
    %v576 = vpop.f32.mrf.mxu0
    %v577 = vadd.f32 0.0, %v576
    %v578 = vpop.f32.mrf.mxu0
    %579 = vmatprep.mubr.f32.mxu0 0.0
    %580 = vmatmul.mubr.f32.gmra.mxu0 %v508
    %v581 = vpop.f32.mrf.mxu0
    %v582 = vadd.f32 0.0, %v581
    %v583 = vpop.f32.mrf.mxu0
    %584 = vdwg.mxu0
    %v585 = vrcp.pop %v500
    %v586 = vrcp.pop %v503
    %v587 = vmul.f32 %v577, %v585
    %v588 = vmul.f32 %v582, %v586
    %589 = vst.msk [vmem:[#allocation2] sm:$0xff] %vm397, %v587
    %590 = vst.msk [vmem:[#allocation2 + $0x8] sm:$0xff] %vm397, %v588
    %591 = vrot.lane.b32.xlu0 %v290, 96
    %v592 = vpop.permute.xlu0 %591
    %593 = vrot.lane.b32.xlu0 %v296, 96
    %v594 = vpop.permute.xlu0 %593
    %595 = vrot.lane.b32.xlu0 %v292, 96
    %v596 = vpop.permute.xlu0 %595
    %597 = vrot.lane.b32.xlu0 %v298, 96
    %v598 = vpop.permute.xlu0 %597
    %v599 = vsel %vm397, %v592, 0
    %v601 = vsel %vm397, %v594, 0
    %v603 = vsel %vm397, %v596, 0
    %v605 = vsel %vm397, %v598, 0
    %607 = vmatprep.subr.mxu0 0.0
    %608 = vmatpush1.xpose.msra.mxu0 0.0
    %609 = vmatprep.subr.mxu0 0.0
    %610 = vmatpush1.xpose.msra.mxu0 0.0
    %611 = vmatprep.subr.mxu0 0.0
    %612 = vmatpush1.xpose.msra.mxu0 0.0
    %613 = vmatprep.subr.mxu0 0.0
    %614 = vmatpush1.xpose.msra.mxu0 0.0
    %615 = vmatprep.subr.mxu0 0.0
    %616 = vmatpush1.xpose.msra.mxu0 0.0
    %617 = vmatprep.subr.mxu0 0.0
    %618 = vmatpush1.xpose.msra.mxu0 0.0
    %619 = vmatprep.subr.mxu0 0.0
    %620 = vmatpush1.xpose.msra.mxu0 0.0
    %621 = vmatprep.subr.mxu0 0.0
    %622 = vmatpush1.xpose.msra.mxu0 0.0
    %623 = vmatprep.subr.mxu0 0.0
    %624 = vmatpush1.xpose.msra.mxu0 0.0
    %625 = vmatprep.subr.mxu0 0.0
    %626 = vmatpush1.xpose.msra.mxu0 0.0
    %627 = vmatprep.subr.mxu0 0.0
    %628 = vmatpush1.xpose.msra.mxu0 0.0
    %629 = vmatprep.subr.mxu0 0.0
    %630 = vmatpush1.xpose.msra.mxu0 0.0
    %631 = vmatprep.subr.mxu0 0.0
    %632 = vmatpush1.xpose.msra.mxu0 0.0
    %633 = vmatprep.subr.mxu0 0.0
    %634 = vmatpush1.xpose.msra.mxu0 0.0
    %635 = vmatprep.subr.mxu0 0.0
    %636 = vmatpush1.xpose.msra.mxu0 %v605
    %637 = vmatprep.subr.mxu0 0.0
    %638 = vmatpush1.xpose.msra.mxu0 %v603
    %639 = vmatprep.subr.mxu0 0.0
    %640 = vmatpush2.xpose.msra.mxu0 0.0
    %641 = vmatprep.subr.mxu0 0.0
    %642 = vmatpush2.xpose.msra.mxu0 0.0
    %643 = vmatprep.subr.mxu0 0.0
    %644 = vmatpush2.xpose.msra.mxu0 0.0
    %645 = vmatprep.subr.mxu0 0.0
    %646 = vmatpush2.xpose.msra.mxu0 0.0
    %647 = vmatprep.subr.mxu0 0.0
    %648 = vmatpush2.xpose.msra.mxu0 0.0
    %649 = vmatprep.subr.mxu0 0.0
    %650 = vmatpush2.xpose.msra.mxu0 0.0
    %651 = vmatprep.subr.mxu0 0.0
    %652 = vmatpush2.xpose.msra.mxu0 0.0
    %653 = vmatprep.subr.mxu0 0.0
    %654 = vmatpush2.xpose.msra.mxu0 0.0
    %655 = vmatprep.subr.mxu0 0.0
    %656 = vmatpush2.xpose.msra.mxu0 0.0
    %657 = vmatprep.subr.mxu0 0.0
    %658 = vmatpush2.xpose.msra.mxu0 0.0
    %659 = vmatprep.subr.mxu0 0.0
    %660 = vmatpush2.xpose.msra.mxu0 0.0
    %661 = vmatprep.subr.mxu0 0.0
    %662 = vmatpush2.xpose.msra.mxu0 0.0
    %663 = vmatprep.subr.mxu0 0.0
    %664 = vmatpush2.xpose.msra.mxu0 0.0
    %665 = vmatprep.subr.mxu0 0.0
    %666 = vmatpush2.xpose.msra.mxu0 0.0
    %667 = vmatprep.subr.mxu0 0.0
    %668 = vmatpush2.xpose.msra.mxu0 0.0
    %669 = vmatprep.subr.mxu0 0.0
    %670 = vmatpush2.xpose.msra.mxu0 0.0
    %671 = vmatprep.mubr.f32.mxu0 0.0
    %672 = vmatmul.mubr.f32.gmra.mxu0 %v599
    %v673 = vpop.f32.mrf.mxu0
    %v674 = vadd.f32 0.0, %v673
    %v675 = vpop.f32.mrf.mxu0
    %676 = vmatprep.mubr.f32.mxu0 0.0
    %677 = vmatmul.mubr.f32.gmra.mxu0 %v601
    %v678 = vpop.f32.mrf.mxu0
    %v679 = vadd.f32 0.0, %v678
    %v680 = vpop.f32.mrf.mxu0
    %681 = vdwg.mxu0
    %v682 = vsel %vm485, %v674, -inf
    %683 = vmax.xlane.f32.xlu0 %v682
    %v684 = vpop.xlane.xlu0 %683
    %v685 = vsel %vm485, %v679, -inf
    %686 = vmax.xlane.f32.xlu0 %v685
    %v687 = vpop.xlane.xlu0 %686
    %v688 = vsub.f32 %v674, %v684
    %v689 = vsub.f32 %v679, %v687
    %v690 = vmul.f32 %v688, 1.442695
    %v691 = vpow.pop %v690
    %v692 = vmul.f32 %v689, 1.442695
    %v693 = vpow.pop %v692
    %v694 = vsel %vm485, %v691, 0.0
    %695 = vadd.xlane.f32.xlu0 %v694
    %v696 = vpop.xlane.xlu0 %695
    %v697 = vsel %vm485, %v693, 0.0
    %698 = vadd.xlane.f32.xlu0 %v697
    %v699 = vpop.xlane.xlu0 %698
    %702 = vrot.lane.b32.xlu0 %v379, 96
    %v703 = vpop.permute.xlu0 %702
    %704 = vrot.lane.b32.xlu0 %v384, 96
    %v705 = vpop.permute.xlu0 %704
    %v709 = vsel %vm485, %v691, 0
    %v712 = vsel %vm485, %v693, 0
    %714 = vmatprep.subr.mxu0 0.0
    %715 = vmatpush1.msra.mxu0 0.0
    %716 = vmatprep.subr.mxu0 0.0
    %717 = vmatpush1.msra.mxu0 0.0
    %718 = vmatprep.subr.mxu0 0.0
    %719 = vmatpush1.msra.mxu0 0.0
    %720 = vmatprep.subr.mxu0 0.0
    %721 = vmatpush1.msra.mxu0 0.0
    %722 = vmatprep.subr.mxu0 0.0
    %723 = vmatpush1.msra.mxu0 0.0
    %724 = vmatprep.subr.mxu0 0.0
    %725 = vmatpush1.msra.mxu0 0.0
    %726 = vmatprep.subr.mxu0 0.0
    %727 = vmatpush1.msra.mxu0 0.0
    %728 = vmatprep.subr.mxu0 0.0
    %729 = vmatpush1.msra.mxu0 0.0
    %730 = vmatprep.subr.mxu0 0.0
    %731 = vmatpush1.msra.mxu0 0.0
    %732 = vmatprep.subr.mxu0 0.0
    %733 = vmatpush1.msra.mxu0 0.0
    %734 = vmatprep.subr.mxu0 0.0
    %735 = vmatpush1.msra.mxu0 0.0
    %736 = vmatprep.subr.mxu0 0.0
    %737 = vmatpush1.msra.mxu0 0.0
    %738 = vmatprep.subr.mxu0 0.0
    %739 = vmatpush1.msra.mxu0 0.0
    %740 = vmatprep.subr.mxu0 0.0
    %741 = vmatpush1.msra.mxu0 0.0
    %742 = vmatprep.subr.mxu0 0.0
    %743 = vmatpush1.msra.mxu0 %v705
    %744 = vmatprep.subr.mxu0 0.0
    %745 = vmatpush1.msra.mxu0 %v703
    %746 = vmatprep.subr.mxu0 0.0
    %747 = vmatpush2.msra.mxu0 0.0
    %748 = vmatprep.subr.mxu0 0.0
    %749 = vmatpush2.msra.mxu0 0.0
    %750 = vmatprep.subr.mxu0 0.0
    %751 = vmatpush2.msra.mxu0 0.0
    %752 = vmatprep.subr.mxu0 0.0
    %753 = vmatpush2.msra.mxu0 0.0
    %754 = vmatprep.subr.mxu0 0.0
    %755 = vmatpush2.msra.mxu0 0.0
    %756 = vmatprep.subr.mxu0 0.0
    %757 = vmatpush2.msra.mxu0 0.0
    %758 = vmatprep.subr.mxu0 0.0
    %759 = vmatpush2.msra.mxu0 0.0
    %760 = vmatprep.subr.mxu0 0.0
    %761 = vmatpush2.msra.mxu0 0.0
    %762 = vmatprep.subr.mxu0 0.0
    %763 = vmatpush2.msra.mxu0 0.0
    %764 = vmatprep.subr.mxu0 0.0
    %765 = vmatpush2.msra.mxu0 0.0
    %766 = vmatprep.subr.mxu0 0.0
    %767 = vmatpush2.msra.mxu0 0.0
    %768 = vmatprep.subr.mxu0 0.0
    %769 = vmatpush2.msra.mxu0 0.0
    %770 = vmatprep.subr.mxu0 0.0
    %771 = vmatpush2.msra.mxu0 0.0
    %772 = vmatprep.subr.mxu0 0.0
    %773 = vmatpush2.msra.mxu0 0.0
    %774 = vmatprep.subr.mxu0 0.0
    %775 = vmatpush2.msra.mxu0 0.0
    %776 = vmatprep.subr.mxu0 0.0
    %777 = vmatpush2.msra.mxu0 0.0
    %778 = vmatprep.mubr.f32.mxu0 0.0
    %779 = vmatmul.mubr.f32.gmra.mxu0 %v709
    %v780 = vpop.f32.mrf.mxu0
    %v781 = vadd.f32 0.0, %v780
    %v782 = vpop.f32.mrf.mxu0
    %783 = vmatprep.mubr.f32.mxu0 0.0
    %784 = vmatmul.mubr.f32.gmra.mxu0 %v712
    %v785 = vpop.f32.mrf.mxu0
    %v786 = vadd.f32 0.0, %v785
    %v787 = vpop.f32.mrf.mxu0
    %788 = vdwg.mxu0
    %v789 = vrcp.pop %v696
    %v790 = vrcp.pop %v699
    %v791 = vmul.f32 %v781, %v789
    %v792 = vmul.f32 %v786, %v790
    %795 = vrot.lane.b32.xlu0 %v791, 32
    %v796 = vpop.permute.xlu0 %795
    %797 = vrot.lane.b32.xlu0 %v792, 32
    %v798 = vpop.permute.xlu0 %797
    %vm801 = vcmask 523520
    %802 = vst.msk [vmem:[#allocation2] sm:$0xff] %vm801, %v796
    %803 = vst.msk [vmem:[#allocation2 + $0x8] sm:$0xff] %vm801, %v798
    %804 = vrot.lane.b32.xlu0 %v290, 64
    %v805 = vpop.permute.xlu0 %804
    %806 = vrot.lane.b32.xlu0 %v296, 64
    %v807 = vpop.permute.xlu0 %806
    %808 = vrot.lane.b32.xlu0 %v292, 64
    %v809 = vpop.permute.xlu0 %808
    %810 = vrot.lane.b32.xlu0 %v298, 64
    %v811 = vpop.permute.xlu0 %810
    %v812 = vsel %vm397, %v805, 0
    %v814 = vsel %vm397, %v807, 0
    %v816 = vsel %vm397, %v809, 0
    %v818 = vsel %vm397, %v811, 0
    %820 = vmatprep.subr.mxu0 0.0
    %821 = vmatpush1.xpose.msra.mxu0 0.0
    %822 = vmatprep.subr.mxu0 0.0
    %823 = vmatpush1.xpose.msra.mxu0 0.0
    %824 = vmatprep.subr.mxu0 0.0
    %825 = vmatpush1.xpose.msra.mxu0 0.0
    %826 = vmatprep.subr.mxu0 0.0
    %827 = vmatpush1.xpose.msra.mxu0 0.0
    %828 = vmatprep.subr.mxu0 0.0
    %829 = vmatpush1.xpose.msra.mxu0 0.0
    %830 = vmatprep.subr.mxu0 0.0
    %831 = vmatpush1.xpose.msra.mxu0 0.0
    %832 = vmatprep.subr.mxu0 0.0
    %833 = vmatpush1.xpose.msra.mxu0 0.0
    %834 = vmatprep.subr.mxu0 0.0
    %835 = vmatpush1.xpose.msra.mxu0 0.0
    %836 = vmatprep.subr.mxu0 0.0
    %837 = vmatpush1.xpose.msra.mxu0 0.0
    %838 = vmatprep.subr.mxu0 0.0
    %839 = vmatpush1.xpose.msra.mxu0 0.0
    %840 = vmatprep.subr.mxu0 0.0
    %841 = vmatpush1.xpose.msra.mxu0 0.0
    %842 = vmatprep.subr.mxu0 0.0
    %843 = vmatpush1.xpose.msra.mxu0 0.0
    %844 = vmatprep.subr.mxu0 0.0
    %845 = vmatpush1.xpose.msra.mxu0 0.0
    %846 = vmatprep.subr.mxu0 0.0
    %847 = vmatpush1.xpose.msra.mxu0 0.0
    %848 = vmatprep.subr.mxu0 0.0
    %849 = vmatpush1.xpose.msra.mxu0 %v818
    %850 = vmatprep.subr.mxu0 0.0
    %851 = vmatpush1.xpose.msra.mxu0 %v816
    %852 = vmatprep.subr.mxu0 0.0
    %853 = vmatpush2.xpose.msra.mxu0 0.0
    %854 = vmatprep.subr.mxu0 0.0
    %855 = vmatpush2.xpose.msra.mxu0 0.0
    %856 = vmatprep.subr.mxu0 0.0
    %857 = vmatpush2.xpose.msra.mxu0 0.0
    %858 = vmatprep.subr.mxu0 0.0
    %859 = vmatpush2.xpose.msra.mxu0 0.0
    %860 = vmatprep.subr.mxu0 0.0
    %861 = vmatpush2.xpose.msra.mxu0 0.0
    %862 = vmatprep.subr.mxu0 0.0
    %863 = vmatpush2.xpose.msra.mxu0 0.0
    %864 = vmatprep.subr.mxu0 0.0
    %865 = vmatpush2.xpose.msra.mxu0 0.0
    %866 = vmatprep.subr.mxu0 0.0
    %867 = vmatpush2.xpose.msra.mxu0 0.0
    %868 = vmatprep.subr.mxu0 0.0
    %869 = vmatpush2.xpose.msra.mxu0 0.0
    %870 = vmatprep.subr.mxu0 0.0
    %871 = vmatpush2.xpose.msra.mxu0 0.0
    %872 = vmatprep.subr.mxu0 0.0
    %873 = vmatpush2.xpose.msra.mxu0 0.0
    %874 = vmatprep.subr.mxu0 0.0
    %875 = vmatpush2.xpose.msra.mxu0 0.0
    %876 = vmatprep.subr.mxu0 0.0
    %877 = vmatpush2.xpose.msra.mxu0 0.0
    %878 = vmatprep.subr.mxu0 0.0
    %879 = vmatpush2.xpose.msra.mxu0 0.0
    %880 = vmatprep.subr.mxu0 0.0
    %881 = vmatpush2.xpose.msra.mxu0 0.0
    %882 = vmatprep.subr.mxu0 0.0
    %883 = vmatpush2.xpose.msra.mxu0 0.0
    %884 = vmatprep.mubr.f32.mxu0 0.0
    %885 = vmatmul.mubr.f32.gmra.mxu0 %v812
    %v886 = vpop.f32.mrf.mxu0
    %v887 = vadd.f32 0.0, %v886
    %v888 = vpop.f32.mrf.mxu0
    %889 = vmatprep.mubr.f32.mxu0 0.0
    %890 = vmatmul.mubr.f32.gmra.mxu0 %v814
    %v891 = vpop.f32.mrf.mxu0
    %v892 = vadd.f32 0.0, %v891
    %v893 = vpop.f32.mrf.mxu0
    %894 = vdwg.mxu0
    %v895 = vsel %vm485, %v887, -inf
    %896 = vmax.xlane.f32.xlu0 %v895
    %v897 = vpop.xlane.xlu0 %896
    %v898 = vsel %vm485, %v892, -inf
    %899 = vmax.xlane.f32.xlu0 %v898
    %v900 = vpop.xlane.xlu0 %899
    %v901 = vsub.f32 %v887, %v897
    %v902 = vsub.f32 %v892, %v900
    %v903 = vmul.f32 %v901, 1.442695
    %v904 = vpow.pop %v903
    %v905 = vmul.f32 %v902, 1.442695
    %v906 = vpow.pop %v905
    %v907 = vsel %vm485, %v904, 0.0
    %908 = vadd.xlane.f32.xlu0 %v907
    %v909 = vpop.xlane.xlu0 %908
    %v910 = vsel %vm485, %v906, 0.0
    %911 = vadd.xlane.f32.xlu0 %v910
    %v912 = vpop.xlane.xlu0 %911
    %913 = vrot.lane.b32.xlu0 %v379, 64
    %v914 = vpop.permute.xlu0 %913
    %915 = vrot.lane.b32.xlu0 %v384, 64
    %v916 = vpop.permute.xlu0 %915
    %v920 = vsel %vm485, %v904, 0
    %v923 = vsel %vm485, %v906, 0
    %925 = vmatprep.subr.mxu0 0.0
    %926 = vmatpush1.msra.mxu0 0.0
    %927 = vmatprep.subr.mxu0 0.0
    %928 = vmatpush1.msra.mxu0 0.0
    %929 = vmatprep.subr.mxu0 0.0
    %930 = vmatpush1.msra.mxu0 0.0
    %931 = vmatprep.subr.mxu0 0.0
    %932 = vmatpush1.msra.mxu0 0.0
    %933 = vmatprep.subr.mxu0 0.0
    %934 = vmatpush1.msra.mxu0 0.0
    %935 = vmatprep.subr.mxu0 0.0
    %936 = vmatpush1.msra.mxu0 0.0
    %937 = vmatprep.subr.mxu0 0.0
    %938 = vmatpush1.msra.mxu0 0.0
    %939 = vmatprep.subr.mxu0 0.0
    %940 = vmatpush1.msra.mxu0 0.0
    %941 = vmatprep.subr.mxu0 0.0
    %942 = vmatpush1.msra.mxu0 0.0
    %943 = vmatprep.subr.mxu0 0.0
    %944 = vmatpush1.msra.mxu0 0.0
    %945 = vmatprep.subr.mxu0 0.0
    %946 = vmatpush1.msra.mxu0 0.0
    %947 = vmatprep.subr.mxu0 0.0
    %948 = vmatpush1.msra.mxu0 0.0
    %949 = vmatprep.subr.mxu0 0.0
    %950 = vmatpush1.msra.mxu0 0.0
    %951 = vmatprep.subr.mxu0 0.0
    %952 = vmatpush1.msra.mxu0 0.0
    %953 = vmatprep.subr.mxu0 0.0
    %954 = vmatpush1.msra.mxu0 %v916
    %955 = vmatprep.subr.mxu0 0.0
    %956 = vmatpush1.msra.mxu0 %v914
    %957 = vmatprep.subr.mxu0 0.0
    %958 = vmatpush2.msra.mxu0 0.0
    %959 = vmatprep.subr.mxu0 0.0
    %960 = vmatpush2.msra.mxu0 0.0
    %961 = vmatprep.subr.mxu0 0.0
    %962 = vmatpush2.msra.mxu0 0.0
    %963 = vmatprep.subr.mxu0 0.0
    %964 = vmatpush2.msra.mxu0 0.0
    %965 = vmatprep.subr.mxu0 0.0
    %966 = vmatpush2.msra.mxu0 0.0
    %967 = vmatprep.subr.mxu0 0.0
    %968 = vmatpush2.msra.mxu0 0.0
    %969 = vmatprep.subr.mxu0 0.0
    %970 = vmatpush2.msra.mxu0 0.0
    %971 = vmatprep.subr.mxu0 0.0
    %972 = vmatpush2.msra.mxu0 0.0
    %973 = vmatprep.subr.mxu0 0.0
    %974 = vmatpush2.msra.mxu0 0.0
    %975 = vmatprep.subr.mxu0 0.0
    %976 = vmatpush2.msra.mxu0 0.0
    %977 = vmatprep.subr.mxu0 0.0
    %978 = vmatpush2.msra.mxu0 0.0
    %979 = vmatprep.subr.mxu0 0.0
    %980 = vmatpush2.msra.mxu0 0.0
    %981 = vmatprep.subr.mxu0 0.0
    %982 = vmatpush2.msra.mxu0 0.0
    %983 = vmatprep.subr.mxu0 0.0
    %984 = vmatpush2.msra.mxu0 0.0
    %985 = vmatprep.subr.mxu0 0.0
    %986 = vmatpush2.msra.mxu0 0.0
    %987 = vmatprep.subr.mxu0 0.0
    %988 = vmatpush2.msra.mxu0 0.0
    %989 = vmatprep.mubr.f32.mxu0 0.0
    %990 = vmatmul.mubr.f32.gmra.mxu0 %v920
    %v991 = vpop.f32.mrf.mxu0
    %v992 = vadd.f32 0.0, %v991
    %v993 = vpop.f32.mrf.mxu0
    %994 = vmatprep.mubr.f32.mxu0 0.0
    %995 = vmatmul.mubr.f32.gmra.mxu0 %v923
    %v996 = vpop.f32.mrf.mxu0
    %v997 = vadd.f32 0.0, %v996
    %v998 = vpop.f32.mrf.mxu0
    %999 = vdwg.mxu0
    %v1000 = vrcp.pop %v909
    %v1001 = vrcp.pop %v912
    %v1002 = vmul.f32 %v992, %v1000
    %v1003 = vmul.f32 %v997, %v1001
    %1006 = vrot.lane.b32.xlu0 %v1002, 64
    %v1007 = vpop.permute.xlu0 %1006
    %1008 = vrot.lane.b32.xlu0 %v1003, 64
    %v1009 = vpop.permute.xlu0 %1008
    %vm1012 = vcmask 785920
    %1013 = vst.msk [vmem:[#allocation2] sm:$0xff] %vm1012, %v1007
    %1014 = vst.msk [vmem:[#allocation2 + $0x8] sm:$0xff] %vm1012, %v1009
    %1015 = vrot.lane.b32.xlu0 %v290, 32
    %v1016 = vpop.permute.xlu0 %1015
    %1017 = vrot.lane.b32.xlu0 %v296, 32
    %v1018 = vpop.permute.xlu0 %1017
    %1019 = vrot.lane.b32.xlu0 %v292, 32
    %v1020 = vpop.permute.xlu0 %1019
    %1021 = vrot.lane.b32.xlu0 %v298, 32
    %v1022 = vpop.permute.xlu0 %1021
    %v1023 = vsel %vm397, %v1016, 0
    %v1025 = vsel %vm397, %v1018, 0
    %v1027 = vsel %vm397, %v1020, 0
    %v1029 = vsel %vm397, %v1022, 0
    %1031 = vmatprep.subr.mxu0 0.0
    %1032 = vmatpush1.xpose.msra.mxu0 0.0
    %1033 = vmatprep.subr.mxu0 0.0
    %1034 = vmatpush1.xpose.msra.mxu0 0.0
    %1035 = vmatprep.subr.mxu0 0.0
    %1036 = vmatpush1.xpose.msra.mxu0 0.0
    %1037 = vmatprep.subr.mxu0 0.0
    %1038 = vmatpush1.xpose.msra.mxu0 0.0
    %1039 = vmatprep.subr.mxu0 0.0
    %1040 = vmatpush1.xpose.msra.mxu0 0.0
    %1041 = vmatprep.subr.mxu0 0.0
    %1042 = vmatpush1.xpose.msra.mxu0 0.0
    %1043 = vmatprep.subr.mxu0 0.0
    %1044 = vmatpush1.xpose.msra.mxu0 0.0
    %1045 = vmatprep.subr.mxu0 0.0
    %1046 = vmatpush1.xpose.msra.mxu0 0.0
    %1047 = vmatprep.subr.mxu0 0.0
    %1048 = vmatpush1.xpose.msra.mxu0 0.0
    %1049 = vmatprep.subr.mxu0 0.0
    %1050 = vmatpush1.xpose.msra.mxu0 0.0
    %1051 = vmatprep.subr.mxu0 0.0
    %1052 = vmatpush1.xpose.msra.mxu0 0.0
    %1053 = vmatprep.subr.mxu0 0.0
    %1054 = vmatpush1.xpose.msra.mxu0 0.0
    %1055 = vmatprep.subr.mxu0 0.0
    %1056 = vmatpush1.xpose.msra.mxu0 0.0
    %1057 = vmatprep.subr.mxu0 0.0
    %1058 = vmatpush1.xpose.msra.mxu0 0.0
    %1059 = vmatprep.subr.mxu0 0.0
    %1060 = vmatpush1.xpose.msra.mxu0 %v1029
    %1061 = vmatprep.subr.mxu0 0.0
    %1062 = vmatpush1.xpose.msra.mxu0 %v1027
    %1063 = vmatprep.subr.mxu0 0.0
    %1064 = vmatpush2.xpose.msra.mxu0 0.0
    %1065 = vmatprep.subr.mxu0 0.0
    %1066 = vmatpush2.xpose.msra.mxu0 0.0
    %1067 = vmatprep.subr.mxu0 0.0
    %1068 = vmatpush2.xpose.msra.mxu0 0.0
    %1069 = vmatprep.subr.mxu0 0.0
    %1070 = vmatpush2.xpose.msra.mxu0 0.0
    %1071 = vmatprep.subr.mxu0 0.0
    %1072 = vmatpush2.xpose.msra.mxu0 0.0
    %1073 = vmatprep.subr.mxu0 0.0
    %1074 = vmatpush2.xpose.msra.mxu0 0.0
    %1075 = vmatprep.subr.mxu0 0.0
    %1076 = vmatpush2.xpose.msra.mxu0 0.0
    %1077 = vmatprep.subr.mxu0 0.0
    %1078 = vmatpush2.xpose.msra.mxu0 0.0
    %1079 = vmatprep.subr.mxu0 0.0
    %1080 = vmatpush2.xpose.msra.mxu0 0.0
    %1081 = vmatprep.subr.mxu0 0.0
    %1082 = vmatpush2.xpose.msra.mxu0 0.0
    %1083 = vmatprep.subr.mxu0 0.0
    %1084 = vmatpush2.xpose.msra.mxu0 0.0
    %1085 = vmatprep.subr.mxu0 0.0
    %1086 = vmatpush2.xpose.msra.mxu0 0.0
    %1087 = vmatprep.subr.mxu0 0.0
    %1088 = vmatpush2.xpose.msra.mxu0 0.0
    %1089 = vmatprep.subr.mxu0 0.0
    %1090 = vmatpush2.xpose.msra.mxu0 0.0
    %1091 = vmatprep.subr.mxu0 0.0
    %1092 = vmatpush2.xpose.msra.mxu0 0.0
    %1093 = vmatprep.subr.mxu0 0.0
    %1094 = vmatpush2.xpose.msra.mxu0 0.0
    %1095 = vmatprep.mubr.f32.mxu0 0.0
    %1096 = vmatmul.mubr.f32.gmra.mxu0 %v1023
    %v1097 = vpop.f32.mrf.mxu0
    %v1098 = vadd.f32 0.0, %v1097
    %v1099 = vpop.f32.mrf.mxu0
    %1100 = vmatprep.mubr.f32.mxu0 0.0
    %1101 = vmatmul.mubr.f32.gmra.mxu0 %v1025
    %v1102 = vpop.f32.mrf.mxu0
    %v1103 = vadd.f32 0.0, %v1102
    %v1104 = vpop.f32.mrf.mxu0
    %1105 = vdwg.mxu0
    %v1106 = vsel %vm485, %v1098, -inf
    %1107 = vmax.xlane.f32.xlu0 %v1106
    %v1108 = vpop.xlane.xlu0 %1107
    %v1109 = vsel %vm485, %v1103, -inf
    %1110 = vmax.xlane.f32.xlu0 %v1109
    %v1111 = vpop.xlane.xlu0 %1110
    %v1112 = vsub.f32 %v1098, %v1108
    %v1113 = vsub.f32 %v1103, %v1111
    %v1114 = vmul.f32 %v1112, 1.442695
    %v1115 = vpow.pop %v1114
    %v1116 = vmul.f32 %v1113, 1.442695
    %v1117 = vpow.pop %v1116
    %v1118 = vsel %vm485, %v1115, 0.0
    %1119 = vadd.xlane.f32.xlu0 %v1118
    %v1120 = vpop.xlane.xlu0 %1119
    %v1121 = vsel %vm485, %v1117, 0.0
    %1122 = vadd.xlane.f32.xlu0 %v1121
    %v1123 = vpop.xlane.xlu0 %1122
    %1124 = vrot.lane.b32.xlu0 %v379, 32
    %v1125 = vpop.permute.xlu0 %1124
    %1126 = vrot.lane.b32.xlu0 %v384, 32
    %v1127 = vpop.permute.xlu0 %1126
    %v1131 = vsel %vm485, %v1115, 0
    %v1134 = vsel %vm485, %v1117, 0
    %1136 = vmatprep.subr.mxu0 0.0
    %1137 = vmatpush1.msra.mxu0 0.0
    %1138 = vmatprep.subr.mxu0 0.0
    %1139 = vmatpush1.msra.mxu0 0.0
    %1140 = vmatprep.subr.mxu0 0.0
    %1141 = vmatpush1.msra.mxu0 0.0
    %1142 = vmatprep.subr.mxu0 0.0
    %1143 = vmatpush1.msra.mxu0 0.0
    %1144 = vmatprep.subr.mxu0 0.0
    %1145 = vmatpush1.msra.mxu0 0.0
    %1146 = vmatprep.subr.mxu0 0.0
    %1147 = vmatpush1.msra.mxu0 0.0
    %1148 = vmatprep.subr.mxu0 0.0
    %1149 = vmatpush1.msra.mxu0 0.0
    %1150 = vmatprep.subr.mxu0 0.0
    %1151 = vmatpush1.msra.mxu0 0.0
    %1152 = vmatprep.subr.mxu0 0.0
    %1153 = vmatpush1.msra.mxu0 0.0
    %1154 = vmatprep.subr.mxu0 0.0
    %1155 = vmatpush1.msra.mxu0 0.0
    %1156 = vmatprep.subr.mxu0 0.0
    %1157 = vmatpush1.msra.mxu0 0.0
    %1158 = vmatprep.subr.mxu0 0.0
    %1159 = vmatpush1.msra.mxu0 0.0
    %1160 = vmatprep.subr.mxu0 0.0
    %1161 = vmatpush1.msra.mxu0 0.0
    %1162 = vmatprep.subr.mxu0 0.0
    %1163 = vmatpush1.msra.mxu0 0.0
    %1164 = vmatprep.subr.mxu0 0.0
    %1165 = vmatpush1.msra.mxu0 %v1127
    %1166 = vmatprep.subr.mxu0 0.0
    %1167 = vmatpush1.msra.mxu0 %v1125
    %1168 = vmatprep.subr.mxu0 0.0
    %1169 = vmatpush2.msra.mxu0 0.0
    %1170 = vmatprep.subr.mxu0 0.0
    %1171 = vmatpush2.msra.mxu0 0.0
    %1172 = vmatprep.subr.mxu0 0.0
    %1173 = vmatpush2.msra.mxu0 0.0
    %1174 = vmatprep.subr.mxu0 0.0
    %1175 = vmatpush2.msra.mxu0 0.0
    %1176 = vmatprep.subr.mxu0 0.0
    %1177 = vmatpush2.msra.mxu0 0.0
    %1178 = vmatprep.subr.mxu0 0.0
    %1179 = vmatpush2.msra.mxu0 0.0
    %1180 = vmatprep.subr.mxu0 0.0
    %1181 = vmatpush2.msra.mxu0 0.0
    %1182 = vmatprep.subr.mxu0 0.0
    %1183 = vmatpush2.msra.mxu0 0.0
    %1184 = vmatprep.subr.mxu0 0.0
    %1185 = vmatpush2.msra.mxu0 0.0
    %1186 = vmatprep.subr.mxu0 0.0
    %1187 = vmatpush2.msra.mxu0 0.0
    %1188 = vmatprep.subr.mxu0 0.0
    %1189 = vmatpush2.msra.mxu0 0.0
    %1190 = vmatprep.subr.mxu0 0.0
    %1191 = vmatpush2.msra.mxu0 0.0
    %1192 = vmatprep.subr.mxu0 0.0
    %1193 = vmatpush2.msra.mxu0 0.0
    %1194 = vmatprep.subr.mxu0 0.0
    %1195 = vmatpush2.msra.mxu0 0.0
    %1196 = vmatprep.subr.mxu0 0.0
    %1197 = vmatpush2.msra.mxu0 0.0
    %1198 = vmatprep.subr.mxu0 0.0
    %1199 = vmatpush2.msra.mxu0 0.0
    %1200 = vmatprep.mubr.f32.mxu0 0.0
    %1201 = vmatmul.mubr.f32.gmra.mxu0 %v1131
    %v1202 = vpop.f32.mrf.mxu0
    %v1203 = vadd.f32 0.0, %v1202
    %v1204 = vpop.f32.mrf.mxu0
    %1205 = vmatprep.mubr.f32.mxu0 0.0
    %1206 = vmatmul.mubr.f32.gmra.mxu0 %v1134
    %v1207 = vpop.f32.mrf.mxu0
    %v1208 = vadd.f32 0.0, %v1207
    %v1209 = vpop.f32.mrf.mxu0
    %1210 = vdwg.mxu0
    %v1211 = vrcp.pop %v1120
    %v1212 = vrcp.pop %v1123
    %v1213 = vmul.f32 %v1203, %v1211
    %v1214 = vmul.f32 %v1208, %v1212
    %1217 = vrot.lane.b32.xlu0 %v1213, 96
    %v1218 = vpop.permute.xlu0 %1217
    %1219 = vrot.lane.b32.xlu0 %v1214, 96
    %v1220 = vpop.permute.xlu0 %1219
    %vm1223 = vcmask 1048320
    %1224 = vst.msk [vmem:[#allocation2] sm:$0xff] %vm1223, %v1218
    %1225 = vst.msk [vmem:[#allocation2 + $0x8] sm:$0xff] %vm1223, %v1220
    %v1227 = vsel %vm397, %v302, 0
    %v1230 = vsel %vm397, %v308, 0
    %v1233 = vsel %vm397, %v304, 0
    %v1236 = vsel %vm397, %v310, 0
    %1238 = vmatprep.subr.mxu0 0.0
    %1239 = vmatpush1.xpose.msra.mxu0 0.0
    %1240 = vmatprep.subr.mxu0 0.0
    %1241 = vmatpush1.xpose.msra.mxu0 0.0
    %1242 = vmatprep.subr.mxu0 0.0
    %1243 = vmatpush1.xpose.msra.mxu0 0.0
    %1244 = vmatprep.subr.mxu0 0.0
    %1245 = vmatpush1.xpose.msra.mxu0 0.0
    %1246 = vmatprep.subr.mxu0 0.0
    %1247 = vmatpush1.xpose.msra.mxu0 0.0
    %1248 = vmatprep.subr.mxu0 0.0
    %1249 = vmatpush1.xpose.msra.mxu0 0.0
    %1250 = vmatprep.subr.mxu0 0.0
    %1251 = vmatpush1.xpose.msra.mxu0 0.0
    %1252 = vmatprep.subr.mxu0 0.0
    %1253 = vmatpush1.xpose.msra.mxu0 0.0
    %1254 = vmatprep.subr.mxu0 0.0
    %1255 = vmatpush1.xpose.msra.mxu0 0.0
    %1256 = vmatprep.subr.mxu0 0.0
    %1257 = vmatpush1.xpose.msra.mxu0 0.0
    %1258 = vmatprep.subr.mxu0 0.0
    %1259 = vmatpush1.xpose.msra.mxu0 0.0
    %1260 = vmatprep.subr.mxu0 0.0
    %1261 = vmatpush1.xpose.msra.mxu0 0.0
    %1262 = vmatprep.subr.mxu0 0.0
    %1263 = vmatpush1.xpose.msra.mxu0 0.0
    %1264 = vmatprep.subr.mxu0 0.0
    %1265 = vmatpush1.xpose.msra.mxu0 0.0
    %1266 = vmatprep.subr.mxu0 0.0
    %1267 = vmatpush1.xpose.msra.mxu0 %v1236
    %1268 = vmatprep.subr.mxu0 0.0
    %1269 = vmatpush1.xpose.msra.mxu0 %v1233
    %1270 = vmatprep.subr.mxu0 0.0
    %1271 = vmatpush2.xpose.msra.mxu0 0.0
    %1272 = vmatprep.subr.mxu0 0.0
    %1273 = vmatpush2.xpose.msra.mxu0 0.0
    %1274 = vmatprep.subr.mxu0 0.0
    %1275 = vmatpush2.xpose.msra.mxu0 0.0
    %1276 = vmatprep.subr.mxu0 0.0
    %1277 = vmatpush2.xpose.msra.mxu0 0.0
    %1278 = vmatprep.subr.mxu0 0.0
    %1279 = vmatpush2.xpose.msra.mxu0 0.0
    %1280 = vmatprep.subr.mxu0 0.0
    %1281 = vmatpush2.xpose.msra.mxu0 0.0
    %1282 = vmatprep.subr.mxu0 0.0
    %1283 = vmatpush2.xpose.msra.mxu0 0.0
    %1284 = vmatprep.subr.mxu0 0.0
    %1285 = vmatpush2.xpose.msra.mxu0 0.0
    %1286 = vmatprep.subr.mxu0 0.0
    %1287 = vmatpush2.xpose.msra.mxu0 0.0
    %1288 = vmatprep.subr.mxu0 0.0
    %1289 = vmatpush2.xpose.msra.mxu0 0.0
    %1290 = vmatprep.subr.mxu0 0.0
    %1291 = vmatpush2.xpose.msra.mxu0 0.0
    %1292 = vmatprep.subr.mxu0 0.0
    %1293 = vmatpush2.xpose.msra.mxu0 0.0
    %1294 = vmatprep.subr.mxu0 0.0
    %1295 = vmatpush2.xpose.msra.mxu0 0.0
    %1296 = vmatprep.subr.mxu0 0.0
    %1297 = vmatpush2.xpose.msra.mxu0 0.0
    %1298 = vmatprep.subr.mxu0 0.0
    %1299 = vmatpush2.xpose.msra.mxu0 0.0
    %1300 = vmatprep.subr.mxu0 0.0
    %1301 = vmatpush2.xpose.msra.mxu0 0.0
    %1302 = vmatprep.mubr.f32.mxu0 0.0
    %1303 = vmatmul.mubr.f32.gmra.mxu0 %v1227
    %v1304 = vpop.f32.mrf.mxu0
    %v1305 = vadd.f32 0.0, %v1304
    %v1306 = vpop.f32.mrf.mxu0
    %1307 = vmatprep.mubr.f32.mxu0 0.0
    %1308 = vmatmul.mubr.f32.gmra.mxu0 %v1230
    %v1309 = vpop.f32.mrf.mxu0
    %v1310 = vadd.f32 0.0, %v1309
    %v1311 = vpop.f32.mrf.mxu0
    %1312 = vdwg.mxu0
    %v1313 = vsel %vm485, %v1305, -inf
    %1314 = vmax.xlane.f32.xlu0 %v1313
    %v1315 = vpop.xlane.xlu0 %1314
    %v1316 = vsel %vm485, %v1310, -inf
    %1317 = vmax.xlane.f32.xlu0 %v1316
    %v1318 = vpop.xlane.xlu0 %1317
    %v1319 = vsub.f32 %v1305, %v1315
    %v1320 = vsub.f32 %v1310, %v1318
    %v1321 = vmul.f32 %v1319, 1.442695
    %v1322 = vpow.pop %v1321
    %v1323 = vmul.f32 %v1320, 1.442695
    %v1324 = vpow.pop %v1323
    %v1325 = vsel %vm485, %v1322, 0.0
    %1326 = vadd.xlane.f32.xlu0 %v1325
    %v1327 = vpop.xlane.xlu0 %1326
    %v1328 = vsel %vm485, %v1324, 0.0
    %1329 = vadd.xlane.f32.xlu0 %v1328
    %v1330 = vpop.xlane.xlu0 %1329
    %v1332 = vsel %vm485, %v1322, 0
    %v1335 = vsel %vm485, %v1324, 0
    %1337 = vmatprep.subr.mxu0 0.0
    %1338 = vmatpush1.msra.mxu0 0.0
    %1339 = vmatprep.subr.mxu0 0.0
    %1340 = vmatpush1.msra.mxu0 0.0
    %1341 = vmatprep.subr.mxu0 0.0
    %1342 = vmatpush1.msra.mxu0 0.0
    %1343 = vmatprep.subr.mxu0 0.0
    %1344 = vmatpush1.msra.mxu0 0.0
    %1345 = vmatprep.subr.mxu0 0.0
    %1346 = vmatpush1.msra.mxu0 0.0
    %1347 = vmatprep.subr.mxu0 0.0
    %1348 = vmatpush1.msra.mxu0 0.0
    %1349 = vmatprep.subr.mxu0 0.0
    %1350 = vmatpush1.msra.mxu0 0.0
    %1351 = vmatprep.subr.mxu0 0.0
    %1352 = vmatpush1.msra.mxu0 0.0
    %1353 = vmatprep.subr.mxu0 0.0
    %1354 = vmatpush1.msra.mxu0 0.0
    %1355 = vmatprep.subr.mxu0 0.0
    %1356 = vmatpush1.msra.mxu0 0.0
    %1357 = vmatprep.subr.mxu0 0.0
    %1358 = vmatpush1.msra.mxu0 0.0
    %1359 = vmatprep.subr.mxu0 0.0
    %1360 = vmatpush1.msra.mxu0 0.0
    %1361 = vmatprep.subr.mxu0 0.0
    %1362 = vmatpush1.msra.mxu0 0.0
    %1363 = vmatprep.subr.mxu0 0.0
    %1364 = vmatpush1.msra.mxu0 0.0
    %1365 = vmatprep.subr.mxu0 0.0
    %1366 = vmatpush1.msra.mxu0 %v394
    %1367 = vmatprep.subr.mxu0 0.0
    %1368 = vmatpush1.msra.mxu0 %v389
    %1369 = vmatprep.subr.mxu0 0.0
    %1370 = vmatpush2.msra.mxu0 0.0
    %1371 = vmatprep.subr.mxu0 0.0
    %1372 = vmatpush2.msra.mxu0 0.0
    %1373 = vmatprep.subr.mxu0 0.0
    %1374 = vmatpush2.msra.mxu0 0.0
    %1375 = vmatprep.subr.mxu0 0.0
    %1376 = vmatpush2.msra.mxu0 0.0
    %1377 = vmatprep.subr.mxu0 0.0
    %1378 = vmatpush2.msra.mxu0 0.0
    %1379 = vmatprep.subr.mxu0 0.0
    %1380 = vmatpush2.msra.mxu0 0.0
    %1381 = vmatprep.subr.mxu0 0.0
    %1382 = vmatpush2.msra.mxu0 0.0
    %1383 = vmatprep.subr.mxu0 0.0
    %1384 = vmatpush2.msra.mxu0 0.0
    %1385 = vmatprep.subr.mxu0 0.0
    %1386 = vmatpush2.msra.mxu0 0.0
    %1387 = vmatprep.subr.mxu0 0.0
    %1388 = vmatpush2.msra.mxu0 0.0
    %1389 = vmatprep.subr.mxu0 0.0
    %1390 = vmatpush2.msra.mxu0 0.0
    %1391 = vmatprep.subr.mxu0 0.0
    %1392 = vmatpush2.msra.mxu0 0.0
    %1393 = vmatprep.subr.mxu0 0.0
    %1394 = vmatpush2.msra.mxu0 0.0
    %1395 = vmatprep.subr.mxu0 0.0
    %1396 = vmatpush2.msra.mxu0 0.0
    %1397 = vmatprep.subr.mxu0 0.0
    %1398 = vmatpush2.msra.mxu0 0.0
    %1399 = vmatprep.subr.mxu0 0.0
    %1400 = vmatpush2.msra.mxu0 0.0
    %1401 = vmatprep.mubr.f32.mxu0 0.0
    %1402 = vmatmul.mubr.f32.gmra.mxu0 %v1332
    %v1403 = vpop.f32.mrf.mxu0
    %v1404 = vadd.f32 0.0, %v1403
    %v1405 = vpop.f32.mrf.mxu0
    %1406 = vmatprep.mubr.f32.mxu0 0.0
    %1407 = vmatmul.mubr.f32.gmra.mxu0 %v1335
    %v1408 = vpop.f32.mrf.mxu0
    %v1409 = vadd.f32 0.0, %v1408
    %v1410 = vpop.f32.mrf.mxu0
    %1411 = vdwg.mxu0
    %v1412 = vrcp.pop %v1327
    %v1413 = vrcp.pop %v1330
    %v1414 = vmul.f32 %v1404, %v1412
    %v1415 = vmul.f32 %v1409, %v1413
    %1416 = vst.msk [vmem:[#allocation2 + $0x10] sm:$0xff] %vm397, %v1414
    %1417 = vst.msk [vmem:[#allocation2 + $0x18] sm:$0xff] %vm397, %v1415
    %1418 = vrot.lane.b32.xlu0 %v302, 96
    %v1419 = vpop.permute.xlu0 %1418
    %1420 = vrot.lane.b32.xlu0 %v308, 96
    %v1421 = vpop.permute.xlu0 %1420
    %1422 = vrot.lane.b32.xlu0 %v304, 96
    %v1423 = vpop.permute.xlu0 %1422
    %1424 = vrot.lane.b32.xlu0 %v310, 96
    %v1425 = vpop.permute.xlu0 %1424
    %v1426 = vsel %vm397, %v1419, 0
    %v1428 = vsel %vm397, %v1421, 0
    %v1430 = vsel %vm397, %v1423, 0
    %v1432 = vsel %vm397, %v1425, 0
    %1434 = vmatprep.subr.mxu0 0.0
    %1435 = vmatpush1.xpose.msra.mxu0 0.0
    %1436 = vmatprep.subr.mxu0 0.0
    %1437 = vmatpush1.xpose.msra.mxu0 0.0
    %1438 = vmatprep.subr.mxu0 0.0
    %1439 = vmatpush1.xpose.msra.mxu0 0.0
    %1440 = vmatprep.subr.mxu0 0.0
    %1441 = vmatpush1.xpose.msra.mxu0 0.0
    %1442 = vmatprep.subr.mxu0 0.0
    %1443 = vmatpush1.xpose.msra.mxu0 0.0
    %1444 = vmatprep.subr.mxu0 0.0
    %1445 = vmatpush1.xpose.msra.mxu0 0.0
    %1446 = vmatprep.subr.mxu0 0.0
    %1447 = vmatpush1.xpose.msra.mxu0 0.0
    %1448 = vmatprep.subr.mxu0 0.0
    %1449 = vmatpush1.xpose.msra.mxu0 0.0
    %1450 = vmatprep.subr.mxu0 0.0
    %1451 = vmatpush1.xpose.msra.mxu0 0.0
    %1452 = vmatprep.subr.mxu0 0.0
    %1453 = vmatpush1.xpose.msra.mxu0 0.0
    %1454 = vmatprep.subr.mxu0 0.0
    %1455 = vmatpush1.xpose.msra.mxu0 0.0
    %1456 = vmatprep.subr.mxu0 0.0
    %1457 = vmatpush1.xpose.msra.mxu0 0.0
    %1458 = vmatprep.subr.mxu0 0.0
    %1459 = vmatpush1.xpose.msra.mxu0 0.0
    %1460 = vmatprep.subr.mxu0 0.0
    %1461 = vmatpush1.xpose.msra.mxu0 0.0
    %1462 = vmatprep.subr.mxu0 0.0
    %1463 = vmatpush1.xpose.msra.mxu0 %v1432
    %1464 = vmatprep.subr.mxu0 0.0
    %1465 = vmatpush1.xpose.msra.mxu0 %v1430
    %1466 = vmatprep.subr.mxu0 0.0
    %1467 = vmatpush2.xpose.msra.mxu0 0.0
    %1468 = vmatprep.subr.mxu0 0.0
    %1469 = vmatpush2.xpose.msra.mxu0 0.0
    %1470 = vmatprep.subr.mxu0 0.0
    %1471 = vmatpush2.xpose.msra.mxu0 0.0
    %1472 = vmatprep.subr.mxu0 0.0
    %1473 = vmatpush2.xpose.msra.mxu0 0.0
    %1474 = vmatprep.subr.mxu0 0.0
    %1475 = vmatpush2.xpose.msra.mxu0 0.0
    %1476 = vmatprep.subr.mxu0 0.0
    %1477 = vmatpush2.xpose.msra.mxu0 0.0
    %1478 = vmatprep.subr.mxu0 0.0
    %1479 = vmatpush2.xpose.msra.mxu0 0.0
    %1480 = vmatprep.subr.mxu0 0.0
    %1481 = vmatpush2.xpose.msra.mxu0 0.0
    %1482 = vmatprep.subr.mxu0 0.0
    %1483 = vmatpush2.xpose.msra.mxu0 0.0
    %1484 = vmatprep.subr.mxu0 0.0
    %1485 = vmatpush2.xpose.msra.mxu0 0.0
    %1486 = vmatprep.subr.mxu0 0.0
    %1487 = vmatpush2.xpose.msra.mxu0 0.0
    %1488 = vmatprep.subr.mxu0 0.0
    %1489 = vmatpush2.xpose.msra.mxu0 0.0
    %1490 = vmatprep.subr.mxu0 0.0
    %1491 = vmatpush2.xpose.msra.mxu0 0.0
    %1492 = vmatprep.subr.mxu0 0.0
    %1493 = vmatpush2.xpose.msra.mxu0 0.0
    %1494 = vmatprep.subr.mxu0 0.0
    %1495 = vmatpush2.xpose.msra.mxu0 0.0
    %1496 = vmatprep.subr.mxu0 0.0
    %1497 = vmatpush2.xpose.msra.mxu0 0.0
    %1498 = vmatprep.mubr.f32.mxu0 0.0
    %1499 = vmatmul.mubr.f32.gmra.mxu0 %v1426
    %v1500 = vpop.f32.mrf.mxu0
    %v1501 = vadd.f32 0.0, %v1500
    %v1502 = vpop.f32.mrf.mxu0
    %1503 = vmatprep.mubr.f32.mxu0 0.0
    %1504 = vmatmul.mubr.f32.gmra.mxu0 %v1428
    %v1505 = vpop.f32.mrf.mxu0
    %v1506 = vadd.f32 0.0, %v1505
    %v1507 = vpop.f32.mrf.mxu0
    %1508 = vdwg.mxu0
    %v1509 = vsel %vm485, %v1501, -inf
    %1510 = vmax.xlane.f32.xlu0 %v1509
    %v1511 = vpop.xlane.xlu0 %1510
    %v1512 = vsel %vm485, %v1506, -inf
    %1513 = vmax.xlane.f32.xlu0 %v1512
    %v1514 = vpop.xlane.xlu0 %1513
    %v1515 = vsub.f32 %v1501, %v1511
    %v1516 = vsub.f32 %v1506, %v1514
    %v1517 = vmul.f32 %v1515, 1.442695
    %v1518 = vpow.pop %v1517
    %v1519 = vmul.f32 %v1516, 1.442695
    %v1520 = vpow.pop %v1519
    %v1521 = vsel %vm485, %v1518, 0.0
    %1522 = vadd.xlane.f32.xlu0 %v1521
    %v1523 = vpop.xlane.xlu0 %1522
    %v1524 = vsel %vm485, %v1520, 0.0
    %1525 = vadd.xlane.f32.xlu0 %v1524
    %v1526 = vpop.xlane.xlu0 %1525
    %1529 = vrot.lane.b32.xlu0 %v389, 96
    %v1530 = vpop.permute.xlu0 %1529
    %1531 = vrot.lane.b32.xlu0 %v394, 96
    %v1532 = vpop.permute.xlu0 %1531
    %v1536 = vsel %vm485, %v1518, 0
    %v1539 = vsel %vm485, %v1520, 0
    %1541 = vmatprep.subr.mxu0 0.0
    %1542 = vmatpush1.msra.mxu0 0.0
    %1543 = vmatprep.subr.mxu0 0.0
    %1544 = vmatpush1.msra.mxu0 0.0
    %1545 = vmatprep.subr.mxu0 0.0
    %1546 = vmatpush1.msra.mxu0 0.0
    %1547 = vmatprep.subr.mxu0 0.0
    %1548 = vmatpush1.msra.mxu0 0.0
    %1549 = vmatprep.subr.mxu0 0.0
    %1550 = vmatpush1.msra.mxu0 0.0
    %1551 = vmatprep.subr.mxu0 0.0
    %1552 = vmatpush1.msra.mxu0 0.0
    %1553 = vmatprep.subr.mxu0 0.0
    %1554 = vmatpush1.msra.mxu0 0.0
    %1555 = vmatprep.subr.mxu0 0.0
    %1556 = vmatpush1.msra.mxu0 0.0
    %1557 = vmatprep.subr.mxu0 0.0
    %1558 = vmatpush1.msra.mxu0 0.0
    %1559 = vmatprep.subr.mxu0 0.0
    %1560 = vmatpush1.msra.mxu0 0.0
    %1561 = vmatprep.subr.mxu0 0.0
    %1562 = vmatpush1.msra.mxu0 0.0
    %1563 = vmatprep.subr.mxu0 0.0
    %1564 = vmatpush1.msra.mxu0 0.0
    %1565 = vmatprep.subr.mxu0 0.0
    %1566 = vmatpush1.msra.mxu0 0.0
    %1567 = vmatprep.subr.mxu0 0.0
    %1568 = vmatpush1.msra.mxu0 0.0
    %1569 = vmatprep.subr.mxu0 0.0
    %1570 = vmatpush1.msra.mxu0 %v1532
    %1571 = vmatprep.subr.mxu0 0.0
    %1572 = vmatpush1.msra.mxu0 %v1530
    %1573 = vmatprep.subr.mxu0 0.0
    %1574 = vmatpush2.msra.mxu0 0.0
    %1575 = vmatprep.subr.mxu0 0.0
    %1576 = vmatpush2.msra.mxu0 0.0
    %1577 = vmatprep.subr.mxu0 0.0
    %1578 = vmatpush2.msra.mxu0 0.0
    %1579 = vmatprep.subr.mxu0 0.0
    %1580 = vmatpush2.msra.mxu0 0.0
    %1581 = vmatprep.subr.mxu0 0.0
    %1582 = vmatpush2.msra.mxu0 0.0
    %1583 = vmatprep.subr.mxu0 0.0
    %1584 = vmatpush2.msra.mxu0 0.0
    %1585 = vmatprep.subr.mxu0 0.0
    %1586 = vmatpush2.msra.mxu0 0.0
    %1587 = vmatprep.subr.mxu0 0.0
    %1588 = vmatpush2.msra.mxu0 0.0
    %1589 = vmatprep.subr.mxu0 0.0
    %1590 = vmatpush2.msra.mxu0 0.0
    %1591 = vmatprep.subr.mxu0 0.0
    %1592 = vmatpush2.msra.mxu0 0.0
    %1593 = vmatprep.subr.mxu0 0.0
    %1594 = vmatpush2.msra.mxu0 0.0
    %1595 = vmatprep.subr.mxu0 0.0
    %1596 = vmatpush2.msra.mxu0 0.0
    %1597 = vmatprep.subr.mxu0 0.0
    %1598 = vmatpush2.msra.mxu0 0.0
    %1599 = vmatprep.subr.mxu0 0.0
    %1600 = vmatpush2.msra.mxu0 0.0
    %1601 = vmatprep.subr.mxu0 0.0
    %1602 = vmatpush2.msra.mxu0 0.0
    %1603 = vmatprep.subr.mxu0 0.0
    %1604 = vmatpush2.msra.mxu0 0.0
    %1605 = vmatprep.mubr.f32.mxu0 0.0
    %1606 = vmatmul.mubr.f32.gmra.mxu0 %v1536
    %v1607 = vpop.f32.mrf.mxu0
    %v1608 = vadd.f32 0.0, %v1607
    %v1609 = vpop.f32.mrf.mxu0
    %1610 = vmatprep.mubr.f32.mxu0 0.0
    %1611 = vmatmul.mubr.f32.gmra.mxu0 %v1539
    %v1612 = vpop.f32.mrf.mxu0
    %v1613 = vadd.f32 0.0, %v1612
    %v1614 = vpop.f32.mrf.mxu0
    %1615 = vdwg.mxu0
    %v1616 = vrcp.pop %v1523
    %v1617 = vrcp.pop %v1526
    %v1618 = vmul.f32 %v1608, %v1616
    %v1619 = vmul.f32 %v1613, %v1617
    %1622 = vrot.lane.b32.xlu0 %v1618, 32
    %v1623 = vpop.permute.xlu0 %1622
    %1624 = vrot.lane.b32.xlu0 %v1619, 32
    %v1625 = vpop.permute.xlu0 %1624
    %1628 = vst.msk [vmem:[#allocation2 + $0x10] sm:$0xff] %vm801, %v1623
    %1629 = vst.msk [vmem:[#allocation2 + $0x18] sm:$0xff] %vm801, %v1625
    %1630 = vrot.lane.b32.xlu0 %v302, 64
    %v1631 = vpop.permute.xlu0 %1630
    %1632 = vrot.lane.b32.xlu0 %v308, 64
    %v1633 = vpop.permute.xlu0 %1632
    %1634 = vrot.lane.b32.xlu0 %v304, 64
    %v1635 = vpop.permute.xlu0 %1634
    %1636 = vrot.lane.b32.xlu0 %v310, 64
    %v1637 = vpop.permute.xlu0 %1636
    %v1638 = vsel %vm397, %v1631, 0
    %v1640 = vsel %vm397, %v1633, 0
    %v1642 = vsel %vm397, %v1635, 0
    %v1644 = vsel %vm397, %v1637, 0
    %1646 = vmatprep.subr.mxu0 0.0
    %1647 = vmatpush1.xpose.msra.mxu0 0.0
    %1648 = vmatprep.subr.mxu0 0.0
    %1649 = vmatpush1.xpose.msra.mxu0 0.0
    %1650 = vmatprep.subr.mxu0 0.0
    %1651 = vmatpush1.xpose.msra.mxu0 0.0
    %1652 = vmatprep.subr.mxu0 0.0
    %1653 = vmatpush1.xpose.msra.mxu0 0.0
    %1654 = vmatprep.subr.mxu0 0.0
    %1655 = vmatpush1.xpose.msra.mxu0 0.0
    %1656 = vmatprep.subr.mxu0 0.0
    %1657 = vmatpush1.xpose.msra.mxu0 0.0
    %1658 = vmatprep.subr.mxu0 0.0
    %1659 = vmatpush1.xpose.msra.mxu0 0.0
    %1660 = vmatprep.subr.mxu0 0.0
    %1661 = vmatpush1.xpose.msra.mxu0 0.0
    %1662 = vmatprep.subr.mxu0 0.0
    %1663 = vmatpush1.xpose.msra.mxu0 0.0
    %1664 = vmatprep.subr.mxu0 0.0
    %1665 = vmatpush1.xpose.msra.mxu0 0.0
    %1666 = vmatprep.subr.mxu0 0.0
    %1667 = vmatpush1.xpose.msra.mxu0 0.0
    %1668 = vmatprep.subr.mxu0 0.0
    %1669 = vmatpush1.xpose.msra.mxu0 0.0
    %1670 = vmatprep.subr.mxu0 0.0
    %1671 = vmatpush1.xpose.msra.mxu0 0.0
    %1672 = vmatprep.subr.mxu0 0.0
    %1673 = vmatpush1.xpose.msra.mxu0 0.0
    %1674 = vmatprep.subr.mxu0 0.0
    %1675 = vmatpush1.xpose.msra.mxu0 %v1644
    %1676 = vmatprep.subr.mxu0 0.0
    %1677 = vmatpush1.xpose.msra.mxu0 %v1642
    %1678 = vmatprep.subr.mxu0 0.0
    %1679 = vmatpush2.xpose.msra.mxu0 0.0
    %1680 = vmatprep.subr.mxu0 0.0
    %1681 = vmatpush2.xpose.msra.mxu0 0.0
    %1682 = vmatprep.subr.mxu0 0.0
    %1683 = vmatpush2.xpose.msra.mxu0 0.0
    %1684 = vmatprep.subr.mxu0 0.0
    %1685 = vmatpush2.xpose.msra.mxu0 0.0
    %1686 = vmatprep.subr.mxu0 0.0
    %1687 = vmatpush2.xpose.msra.mxu0 0.0
    %1688 = vmatprep.subr.mxu0 0.0
    %1689 = vmatpush2.xpose.msra.mxu0 0.0
    %1690 = vmatprep.subr.mxu0 0.0
    %1691 = vmatpush2.xpose.msra.mxu0 0.0
    %1692 = vmatprep.subr.mxu0 0.0
    %1693 = vmatpush2.xpose.msra.mxu0 0.0
    %1694 = vmatprep.subr.mxu0 0.0
    %1695 = vmatpush2.xpose.msra.mxu0 0.0
    %1696 = vmatprep.subr.mxu0 0.0
    %1697 = vmatpush2.xpose.msra.mxu0 0.0
    %1698 = vmatprep.subr.mxu0 0.0
    %1699 = vmatpush2.xpose.msra.mxu0 0.0
    %1700 = vmatprep.subr.mxu0 0.0
    %1701 = vmatpush2.xpose.msra.mxu0 0.0
    %1702 = vmatprep.subr.mxu0 0.0
    %1703 = vmatpush2.xpose.msra.mxu0 0.0
    %1704 = vmatprep.subr.mxu0 0.0
    %1705 = vmatpush2.xpose.msra.mxu0 0.0
    %1706 = vmatprep.subr.mxu0 0.0
    %1707 = vmatpush2.xpose.msra.mxu0 0.0
    %1708 = vmatprep.subr.mxu0 0.0
    %1709 = vmatpush2.xpose.msra.mxu0 0.0
    %1710 = vmatprep.mubr.f32.mxu0 0.0
    %1711 = vmatmul.mubr.f32.gmra.mxu0 %v1638
    %v1712 = vpop.f32.mrf.mxu0
    %v1713 = vadd.f32 0.0, %v1712
    %v1714 = vpop.f32.mrf.mxu0
    %1715 = vmatprep.mubr.f32.mxu0 0.0
    %1716 = vmatmul.mubr.f32.gmra.mxu0 %v1640
    %v1717 = vpop.f32.mrf.mxu0
    %v1718 = vadd.f32 0.0, %v1717
    %v1719 = vpop.f32.mrf.mxu0
    %1720 = vdwg.mxu0
    %v1721 = vsel %vm485, %v1713, -inf
    %1722 = vmax.xlane.f32.xlu0 %v1721
    %v1723 = vpop.xlane.xlu0 %1722
    %v1724 = vsel %vm485, %v1718, -inf
    %1725 = vmax.xlane.f32.xlu0 %v1724
    %v1726 = vpop.xlane.xlu0 %1725
    %v1727 = vsub.f32 %v1713, %v1723
    %v1728 = vsub.f32 %v1718, %v1726
    %v1729 = vmul.f32 %v1727, 1.442695
    %v1730 = vpow.pop %v1729
    %v1731 = vmul.f32 %v1728, 1.442695
    %v1732 = vpow.pop %v1731
    %v1733 = vsel %vm485, %v1730, 0.0
    %1734 = vadd.xlane.f32.xlu0 %v1733
    %v1735 = vpop.xlane.xlu0 %1734
    %v1736 = vsel %vm485, %v1732, 0.0
    %1737 = vadd.xlane.f32.xlu0 %v1736
    %v1738 = vpop.xlane.xlu0 %1737
    %1739 = vrot.lane.b32.xlu0 %v389, 64
    %v1740 = vpop.permute.xlu0 %1739
    %1741 = vrot.lane.b32.xlu0 %v394, 64
    %v1742 = vpop.permute.xlu0 %1741
    %v1746 = vsel %vm485, %v1730, 0
    %v1749 = vsel %vm485, %v1732, 0
    %1751 = vmatprep.subr.mxu0 0.0
    %1752 = vmatpush1.msra.mxu0 0.0
    %1753 = vmatprep.subr.mxu0 0.0
    %1754 = vmatpush1.msra.mxu0 0.0
    %1755 = vmatprep.subr.mxu0 0.0
    %1756 = vmatpush1.msra.mxu0 0.0
    %1757 = vmatprep.subr.mxu0 0.0
    %1758 = vmatpush1.msra.mxu0 0.0
    %1759 = vmatprep.subr.mxu0 0.0
    %1760 = vmatpush1.msra.mxu0 0.0
    %1761 = vmatprep.subr.mxu0 0.0
    %1762 = vmatpush1.msra.mxu0 0.0
    %1763 = vmatprep.subr.mxu0 0.0
    %1764 = vmatpush1.msra.mxu0 0.0
    %1765 = vmatprep.subr.mxu0 0.0
    %1766 = vmatpush1.msra.mxu0 0.0
    %1767 = vmatprep.subr.mxu0 0.0
    %1768 = vmatpush1.msra.mxu0 0.0
    %1769 = vmatprep.subr.mxu0 0.0
    %1770 = vmatpush1.msra.mxu0 0.0
    %1771 = vmatprep.subr.mxu0 0.0
    %1772 = vmatpush1.msra.mxu0 0.0
    %1773 = vmatprep.subr.mxu0 0.0
    %1774 = vmatpush1.msra.mxu0 0.0
    %1775 = vmatprep.subr.mxu0 0.0
    %1776 = vmatpush1.msra.mxu0 0.0
    %1777 = vmatprep.subr.mxu0 0.0
    %1778 = vmatpush1.msra.mxu0 0.0
    %1779 = vmatprep.subr.mxu0 0.0
    %1780 = vmatpush1.msra.mxu0 %v1742
    %1781 = vmatprep.subr.mxu0 0.0
    %1782 = vmatpush1.msra.mxu0 %v1740
    %1783 = vmatprep.subr.mxu0 0.0
    %1784 = vmatpush2.msra.mxu0 0.0
    %1785 = vmatprep.subr.mxu0 0.0
    %1786 = vmatpush2.msra.mxu0 0.0
    %1787 = vmatprep.subr.mxu0 0.0
    %1788 = vmatpush2.msra.mxu0 0.0
    %1789 = vmatprep.subr.mxu0 0.0
    %1790 = vmatpush2.msra.mxu0 0.0
    %1791 = vmatprep.subr.mxu0 0.0
    %1792 = vmatpush2.msra.mxu0 0.0
    %1793 = vmatprep.subr.mxu0 0.0
    %1794 = vmatpush2.msra.mxu0 0.0
    %1795 = vmatprep.subr.mxu0 0.0
    %1796 = vmatpush2.msra.mxu0 0.0
    %1797 = vmatprep.subr.mxu0 0.0
    %1798 = vmatpush2.msra.mxu0 0.0
    %1799 = vmatprep.subr.mxu0 0.0
    %1800 = vmatpush2.msra.mxu0 0.0
    %1801 = vmatprep.subr.mxu0 0.0
    %1802 = vmatpush2.msra.mxu0 0.0
    %1803 = vmatprep.subr.mxu0 0.0
    %1804 = vmatpush2.msra.mxu0 0.0
    %1805 = vmatprep.subr.mxu0 0.0
    %1806 = vmatpush2.msra.mxu0 0.0
    %1807 = vmatprep.subr.mxu0 0.0
    %1808 = vmatpush2.msra.mxu0 0.0
    %1809 = vmatprep.subr.mxu0 0.0
    %1810 = vmatpush2.msra.mxu0 0.0
    %1811 = vmatprep.subr.mxu0 0.0
    %1812 = vmatpush2.msra.mxu0 0.0
    %1813 = vmatprep.subr.mxu0 0.0
    %1814 = vmatpush2.msra.mxu0 0.0
    %1815 = vmatprep.mubr.f32.mxu0 0.0
    %1816 = vmatmul.mubr.f32.gmra.mxu0 %v1746
    %v1817 = vpop.f32.mrf.mxu0
    %v1818 = vadd.f32 0.0, %v1817
    %v1819 = vpop.f32.mrf.mxu0
    %1820 = vmatprep.mubr.f32.mxu0 0.0
    %1821 = vmatmul.mubr.f32.gmra.mxu0 %v1749
    %v1822 = vpop.f32.mrf.mxu0
    %v1823 = vadd.f32 0.0, %v1822
    %v1824 = vpop.f32.mrf.mxu0
    %1825 = vdwg.mxu0
    %v1826 = vrcp.pop %v1735
    %v1827 = vrcp.pop %v1738
    %v1828 = vmul.f32 %v1818, %v1826
    %v1829 = vmul.f32 %v1823, %v1827
    %1832 = vrot.lane.b32.xlu0 %v1828, 64
    %v1833 = vpop.permute.xlu0 %1832
    %1834 = vrot.lane.b32.xlu0 %v1829, 64
    %v1835 = vpop.permute.xlu0 %1834
    %1838 = vst.msk [vmem:[#allocation2 + $0x10] sm:$0xff] %vm1012, %v1833
    %1839 = vst.msk [vmem:[#allocation2 + $0x18] sm:$0xff] %vm1012, %v1835
    %1840 = vrot.lane.b32.xlu0 %v302, 32
    %v1841 = vpop.permute.xlu0 %1840
    %1842 = vrot.lane.b32.xlu0 %v308, 32
    %v1843 = vpop.permute.xlu0 %1842
    %1844 = vrot.lane.b32.xlu0 %v304, 32
    %v1845 = vpop.permute.xlu0 %1844
    %1846 = vrot.lane.b32.xlu0 %v310, 32
    %v1847 = vpop.permute.xlu0 %1846
    %v1848 = vsel %vm397, %v1841, 0
    %v1850 = vsel %vm397, %v1843, 0
    %v1852 = vsel %vm397, %v1845, 0
    %v1854 = vsel %vm397, %v1847, 0
    %1856 = vmatprep.subr.mxu0 0.0
    %1857 = vmatpush1.xpose.msra.mxu0 0.0
    %1858 = vmatprep.subr.mxu0 0.0
    %1859 = vmatpush1.xpose.msra.mxu0 0.0
    %1860 = vmatprep.subr.mxu0 0.0
    %1861 = vmatpush1.xpose.msra.mxu0 0.0
    %1862 = vmatprep.subr.mxu0 0.0
    %1863 = vmatpush1.xpose.msra.mxu0 0.0
    %1864 = vmatprep.subr.mxu0 0.0
    %1865 = vmatpush1.xpose.msra.mxu0 0.0
    %1866 = vmatprep.subr.mxu0 0.0
    %1867 = vmatpush1.xpose.msra.mxu0 0.0
    %1868 = vmatprep.subr.mxu0 0.0
    %1869 = vmatpush1.xpose.msra.mxu0 0.0
    %1870 = vmatprep.subr.mxu0 0.0
    %1871 = vmatpush1.xpose.msra.mxu0 0.0
    %1872 = vmatprep.subr.mxu0 0.0
    %1873 = vmatpush1.xpose.msra.mxu0 0.0
    %1874 = vmatprep.subr.mxu0 0.0
    %1875 = vmatpush1.xpose.msra.mxu0 0.0
    %1876 = vmatprep.subr.mxu0 0.0
    %1877 = vmatpush1.xpose.msra.mxu0 0.0
    %1878 = vmatprep.subr.mxu0 0.0
    %1879 = vmatpush1.xpose.msra.mxu0 0.0
    %1880 = vmatprep.subr.mxu0 0.0
    %1881 = vmatpush1.xpose.msra.mxu0 0.0
    %1882 = vmatprep.subr.mxu0 0.0
    %1883 = vmatpush1.xpose.msra.mxu0 0.0
    %1884 = vmatprep.subr.mxu0 0.0
    %1885 = vmatpush1.xpose.msra.mxu0 %v1854
    %1886 = vmatprep.subr.mxu0 0.0
    %1887 = vmatpush1.xpose.msra.mxu0 %v1852
    %1888 = vmatprep.subr.mxu0 0.0
    %1889 = vmatpush2.xpose.msra.mxu0 0.0
    %1890 = vmatprep.subr.mxu0 0.0
    %1891 = vmatpush2.xpose.msra.mxu0 0.0
    %1892 = vmatprep.subr.mxu0 0.0
    %1893 = vmatpush2.xpose.msra.mxu0 0.0
    %1894 = vmatprep.subr.mxu0 0.0
    %1895 = vmatpush2.xpose.msra.mxu0 0.0
    %1896 = vmatprep.subr.mxu0 0.0
    %1897 = vmatpush2.xpose.msra.mxu0 0.0
    %1898 = vmatprep.subr.mxu0 0.0
    %1899 = vmatpush2.xpose.msra.mxu0 0.0
    %1900 = vmatprep.subr.mxu0 0.0
    %1901 = vmatpush2.xpose.msra.mxu0 0.0
    %1902 = vmatprep.subr.mxu0 0.0
    %1903 = vmatpush2.xpose.msra.mxu0 0.0
    %1904 = vmatprep.subr.mxu0 0.0
    %1905 = vmatpush2.xpose.msra.mxu0 0.0
    %1906 = vmatprep.subr.mxu0 0.0
    %1907 = vmatpush2.xpose.msra.mxu0 0.0
    %1908 = vmatprep.subr.mxu0 0.0
    %1909 = vmatpush2.xpose.msra.mxu0 0.0
    %1910 = vmatprep.subr.mxu0 0.0
    %1911 = vmatpush2.xpose.msra.mxu0 0.0
    %1912 = vmatprep.subr.mxu0 0.0
    %1913 = vmatpush2.xpose.msra.mxu0 0.0
    %1914 = vmatprep.subr.mxu0 0.0
    %1915 = vmatpush2.xpose.msra.mxu0 0.0
    %1916 = vmatprep.subr.mxu0 0.0
    %1917 = vmatpush2.xpose.msra.mxu0 0.0
    %1918 = vmatprep.subr.mxu0 0.0
    %1919 = vmatpush2.xpose.msra.mxu0 0.0
    %1920 = vmatprep.mubr.f32.mxu0 0.0
    %1921 = vmatmul.mubr.f32.gmra.mxu0 %v1848
    %v1922 = vpop.f32.mrf.mxu0
    %v1923 = vadd.f32 0.0, %v1922
    %v1924 = vpop.f32.mrf.mxu0
    %1925 = vmatprep.mubr.f32.mxu0 0.0
    %1926 = vmatmul.mubr.f32.gmra.mxu0 %v1850
    %v1927 = vpop.f32.mrf.mxu0
    %v1928 = vadd.f32 0.0, %v1927
    %v1929 = vpop.f32.mrf.mxu0
    %1930 = vdwg.mxu0
    %v1931 = vsel %vm485, %v1923, -inf
    %1932 = vmax.xlane.f32.xlu0 %v1931
    %v1933 = vpop.xlane.xlu0 %1932
    %v1934 = vsel %vm485, %v1928, -inf
    %1935 = vmax.xlane.f32.xlu0 %v1934
    %v1936 = vpop.xlane.xlu0 %1935
    %v1937 = vsub.f32 %v1923, %v1933
    %v1938 = vsub.f32 %v1928, %v1936
    %v1939 = vmul.f32 %v1937, 1.442695
    %v1940 = vpow.pop %v1939
    %v1941 = vmul.f32 %v1938, 1.442695
    %v1942 = vpow.pop %v1941
    %v1943 = vsel %vm485, %v1940, 0.0
    %1944 = vadd.xlane.f32.xlu0 %v1943
    %v1945 = vpop.xlane.xlu0 %1944
    %v1946 = vsel %vm485, %v1942, 0.0
    %1947 = vadd.xlane.f32.xlu0 %v1946
    %v1948 = vpop.xlane.xlu0 %1947
    %1949 = vrot.lane.b32.xlu0 %v389, 32
    %v1950 = vpop.permute.xlu0 %1949
    %1951 = vrot.lane.b32.xlu0 %v394, 32
    %v1952 = vpop.permute.xlu0 %1951
    %v1956 = vsel %vm485, %v1940, 0
    %v1959 = vsel %vm485, %v1942, 0
    %1961 = vmatprep.subr.mxu0 0.0
    %1962 = vmatpush1.msra.mxu0 0.0
    %1963 = vmatprep.subr.mxu0 0.0
    %1964 = vmatpush1.msra.mxu0 0.0
    %1965 = vmatprep.subr.mxu0 0.0
    %1966 = vmatpush1.msra.mxu0 0.0
    %1967 = vmatprep.subr.mxu0 0.0
    %1968 = vmatpush1.msra.mxu0 0.0
    %1969 = vmatprep.subr.mxu0 0.0
    %1970 = vmatpush1.msra.mxu0 0.0
    %1971 = vmatprep.subr.mxu0 0.0
    %1972 = vmatpush1.msra.mxu0 0.0
    %1973 = vmatprep.subr.mxu0 0.0
    %1974 = vmatpush1.msra.mxu0 0.0
    %1975 = vmatprep.subr.mxu0 0.0
    %1976 = vmatpush1.msra.mxu0 0.0
    %1977 = vmatprep.subr.mxu0 0.0
    %1978 = vmatpush1.msra.mxu0 0.0
    %1979 = vmatprep.subr.mxu0 0.0
    %1980 = vmatpush1.msra.mxu0 0.0
    %1981 = vmatprep.subr.mxu0 0.0
    %1982 = vmatpush1.msra.mxu0 0.0
    %1983 = vmatprep.subr.mxu0 0.0
    %1984 = vmatpush1.msra.mxu0 0.0
    %1985 = vmatprep.subr.mxu0 0.0
    %1986 = vmatpush1.msra.mxu0 0.0
    %1987 = vmatprep.subr.mxu0 0.0
    %1988 = vmatpush1.msra.mxu0 0.0
    %1989 = vmatprep.subr.mxu0 0.0
    %1990 = vmatpush1.msra.mxu0 %v1952
    %1991 = vmatprep.subr.mxu0 0.0
    %1992 = vmatpush1.msra.mxu0 %v1950
    %1993 = vmatprep.subr.mxu0 0.0
    %1994 = vmatpush2.msra.mxu0 0.0
    %1995 = vmatprep.subr.mxu0 0.0
    %1996 = vmatpush2.msra.mxu0 0.0
    %1997 = vmatprep.subr.mxu0 0.0
    %1998 = vmatpush2.msra.mxu0 0.0
    %1999 = vmatprep.subr.mxu0 0.0
    %2000 = vmatpush2.msra.mxu0 0.0
    %2001 = vmatprep.subr.mxu0 0.0
    %2002 = vmatpush2.msra.mxu0 0.0
    %2003 = vmatprep.subr.mxu0 0.0
    %2004 = vmatpush2.msra.mxu0 0.0
    %2005 = vmatprep.subr.mxu0 0.0
    %2006 = vmatpush2.msra.mxu0 0.0
    %2007 = vmatprep.subr.mxu0 0.0
    %2008 = vmatpush2.msra.mxu0 0.0
    %2009 = vmatprep.subr.mxu0 0.0
    %2010 = vmatpush2.msra.mxu0 0.0
    %2011 = vmatprep.subr.mxu0 0.0
    %2012 = vmatpush2.msra.mxu0 0.0
    %2013 = vmatprep.subr.mxu0 0.0
    %2014 = vmatpush2.msra.mxu0 0.0
    %2015 = vmatprep.subr.mxu0 0.0
    %2016 = vmatpush2.msra.mxu0 0.0
    %2017 = vmatprep.subr.mxu0 0.0
    %2018 = vmatpush2.msra.mxu0 0.0
    %2019 = vmatprep.subr.mxu0 0.0
    %2020 = vmatpush2.msra.mxu0 0.0
    %2021 = vmatprep.subr.mxu0 0.0
    %2022 = vmatpush2.msra.mxu0 0.0
    %2023 = vmatprep.subr.mxu0 0.0
    %2024 = vmatpush2.msra.mxu0 0.0
    %2025 = vmatprep.mubr.f32.mxu0 0.0
    %2026 = vmatmul.mubr.f32.gmra.mxu0 %v1956
    %v2027 = vpop.f32.mrf.mxu0
    %v2028 = vadd.f32 0.0, %v2027
    %v2029 = vpop.f32.mrf.mxu0
    %2030 = vmatprep.mubr.f32.mxu0 0.0
    %2031 = vmatmul.mubr.f32.gmra.mxu0 %v1959
    %v2032 = vpop.f32.mrf.mxu0
    %v2033 = vadd.f32 0.0, %v2032
    %v2034 = vpop.f32.mrf.mxu0
    %2035 = vdwg.mxu0
    %v2036 = vrcp.pop %v1945
    %v2037 = vrcp.pop %v1948
    %v2038 = vmul.f32 %v2028, %v2036
    %v2039 = vmul.f32 %v2033, %v2037
    %2042 = vrot.lane.b32.xlu0 %v2038, 96
    %v2043 = vpop.permute.xlu0 %2042
    %2044 = vrot.lane.b32.xlu0 %v2039, 96
    %v2045 = vpop.permute.xlu0 %2044
    %2048 = vst.msk [vmem:[#allocation2 + $0x10] sm:$0xff] %vm1223, %v2043
    %2049 = vst.msk [vmem:[#allocation2 + $0x18] sm:$0xff] %vm1223, %v2045
    %v2050 = vld [vmem:[#allocation2] sm:$0xff]
    %v2051 = vld [vmem:[#allocation2 + $0x8] sm:$0xff]
    %v2052 = vld [vmem:[#allocation2 + $0x10] sm:$0xff]
    %v2053 = vld [vmem:[#allocation2 + $0x18] sm:$0xff]
    %v2054 = vld [vmem:[%s4] sm:$0xff]
    %v2055 = vld [vmem:[%s4 + $0x8] sm:$0xff]
    %v2056 = vld [vmem:[%s4 + $0x10] sm:$0xff]
    %v2057 = vld [vmem:[%s4 + $0x18] sm:$0xff]
    %v2058 = vld [vmem:[%s4 + $0x20] sm:$0xff]
    %v2059 = vld [vmem:[%s4 + $0x28] sm:$0xff]
    %v2060 = vld [vmem:[%s4 + $0x30] sm:$0xff]
    %v2061 = vld [vmem:[%s4 + $0x38] sm:$0xff]
    %v2062 = vld [vmem:[%s4 + $0x40] sm:$0xff]
    %v2063 = vld [vmem:[%s4 + $0x48] sm:$0xff]
    %v2064 = vld [vmem:[%s4 + $0x50] sm:$0xff]
    %v2065 = vld [vmem:[%s4 + $0x58] sm:$0xff]
    %v2066 = vld [vmem:[%s4 + $0x60] sm:$0xff]
    %v2067 = vld [vmem:[%s4 + $0x68] sm:$0xff]
    %v2068 = vld [vmem:[%s4 + $0x70] sm:$0xff]
    %v2069 = vld [vmem:[%s4 + $0x78] sm:$0xff]
    %v2070 = vld [vmem:[%s5] sm:$0x1]
    %v2072 = vlaneseq
    %v2073 = vshrl.u32 %v2072, 7
    %v2074 = vsub.s32 0, %v2073
    %v2075 = vrot.slane %v2070, %v2074
    %2077 = vmatprep.subr.mxu0 0.0
    %2078 = vmatpush1.msra.mxu0 %v2069
    %2079 = vmatprep.subr.mxu0 0.0
    %2080 = vmatpush1.msra.mxu0 %v2068
    %2081 = vmatprep.subr.mxu0 0.0
    %2082 = vmatpush1.msra.mxu0 %v2067
    %2083 = vmatprep.subr.mxu0 0.0
    %2084 = vmatpush1.msra.mxu0 %v2066
    %2085 = vmatprep.subr.mxu0 0.0
    %2086 = vmatpush1.msra.mxu0 %v2065
    %2087 = vmatprep.subr.mxu0 0.0
    %2088 = vmatpush1.msra.mxu0 %v2064
    %2089 = vmatprep.subr.mxu0 0.0
    %2090 = vmatpush1.msra.mxu0 %v2063
    %2091 = vmatprep.subr.mxu0 0.0
    %2092 = vmatpush1.msra.mxu0 %v2062
    %2093 = vmatprep.subr.mxu0 0.0
    %2094 = vmatpush1.msra.mxu0 %v2061
    %2095 = vmatprep.subr.mxu0 0.0
    %2096 = vmatpush1.msra.mxu0 %v2060
    %2097 = vmatprep.subr.mxu0 0.0
    %2098 = vmatpush1.msra.mxu0 %v2059
    %2099 = vmatprep.subr.mxu0 0.0
    %2100 = vmatpush1.msra.mxu0 %v2058
    %2101 = vmatprep.subr.mxu0 0.0
    %2102 = vmatpush1.msra.mxu0 %v2057
    %2103 = vmatprep.subr.mxu0 0.0
    %2104 = vmatpush1.msra.mxu0 %v2056
    %2105 = vmatprep.subr.mxu0 0.0
    %2106 = vmatpush1.msra.mxu0 %v2055
    %2107 = vmatprep.subr.mxu0 0.0
    %2108 = vmatpush1.msra.mxu0 %v2054
    %2109 = vmatprep.subr.mxu0 0.0
    %2110 = vmatpush2.msra.mxu0 0.0
    %2111 = vmatprep.subr.mxu0 0.0
    %2112 = vmatpush2.msra.mxu0 0.0
    %2113 = vmatprep.subr.mxu0 0.0
    %2114 = vmatpush2.msra.mxu0 0.0
    %2115 = vmatprep.subr.mxu0 0.0
    %2116 = vmatpush2.msra.mxu0 0.0
    %2117 = vmatprep.subr.mxu0 0.0
    %2118 = vmatpush2.msra.mxu0 0.0
    %2119 = vmatprep.subr.mxu0 0.0
    %2120 = vmatpush2.msra.mxu0 0.0
    %2121 = vmatprep.subr.mxu0 0.0
    %2122 = vmatpush2.msra.mxu0 0.0
    %2123 = vmatprep.subr.mxu0 0.0
    %2124 = vmatpush2.msra.mxu0 0.0
    %2125 = vmatprep.subr.mxu0 0.0
    %2126 = vmatpush2.msra.mxu0 0.0
    %2127 = vmatprep.subr.mxu0 0.0
    %2128 = vmatpush2.msra.mxu0 0.0
    %2129 = vmatprep.subr.mxu0 0.0
    %2130 = vmatpush2.msra.mxu0 0.0
    %2131 = vmatprep.subr.mxu0 0.0
    %2132 = vmatpush2.msra.mxu0 0.0
    %2133 = vmatprep.subr.mxu0 0.0
    %2134 = vmatpush2.msra.mxu0 0.0
    %2135 = vmatprep.subr.mxu0 0.0
    %2136 = vmatpush2.msra.mxu0 0.0
    %2137 = vmatprep.subr.mxu0 0.0
    %2138 = vmatpush2.msra.mxu0 0.0
    %2139 = vmatprep.subr.mxu0 0.0
    %2140 = vmatpush2.msra.mxu0 0.0
    %2141 = vmatprep.mubr.f32.mxu0 0.0
    %2142 = vmatmul.mubr.f32.gmra.mxu0 %v2050
    %v2143 = vpop.f32.mrf.mxu0
    %v2144 = vadd.f32 %v2075, %v2143
    %v2145 = vpop.f32.mrf.mxu0
    %2146 = vmatprep.mubr.f32.mxu0 0.0
    %2147 = vmatmul.mubr.f32.gmra.mxu0 %v2051
    %v2148 = vpop.f32.mrf.mxu0
    %v2149 = vadd.f32 %v2075, %v2148
    %v2150 = vpop.f32.mrf.mxu0
    %2151 = vmatprep.mubr.f32.mxu0 0.0
    %2152 = vmatmul.mubr.f32.gmra.mxu0 %v2052
    %v2153 = vpop.f32.mrf.mxu0
    %v2154 = vadd.f32 %v2075, %v2153
    %v2155 = vpop.f32.mrf.mxu0
    %2156 = vmatprep.mubr.f32.mxu0 0.0
    %2157 = vmatmul.mubr.f32.gmra.mxu0 %v2053
    %v2158 = vpop.f32.mrf.mxu0
    %v2159 = vadd.f32 %v2075, %v2158
    %v2160 = vpop.f32.mrf.mxu0
    %2161 = vdwg.mxu0
    %v2162 = vadd.f32 %v104, %v2144
    %v2163 = vadd.f32 %v105, %v2149
    %v2164 = vadd.f32 %v106, %v2154
    %v2165 = vadd.f32 %v107, %v2159
    %v2166 = vld [vmem:[#allocation6] sm:$0x1]
    %v2167 = vld [vmem:[#allocation8] sm:$0x1]
    %2168 = vadd.xlane.f32.xlu0 %v2162
    %v2169 = vpop.xlane.xlu0 %2168
    %2170 = vadd.xlane.f32.xlu0 %v2163
    %v2171 = vpop.xlane.xlu0 %2170
    %2172 = vadd.xlane.f32.xlu0 %v2164
    %v2173 = vpop.xlane.xlu0 %2172
    %2174 = vadd.xlane.f32.xlu0 %v2165
    %v2175 = vpop.xlane.xlu0 %2174
    %v2176 = vmul.f32 %v2169, %v118
    %v2177 = vmul.f32 %v2171, %v118
    %v2178 = vmul.f32 %v2173, %v118
    %v2179 = vmul.f32 %v2175, %v118
    %v2180 = vsub.f32 %v2162, %v2176
    %v2181 = vsub.f32 %v2163, %v2177
    %v2182 = vsub.f32 %v2164, %v2178
    %v2183 = vsub.f32 %v2165, %v2179
    %v2184 = vmul.f32 %v2180, %v2180
    %v2185 = vmul.f32 %v2181, %v2181
    %v2186 = vmul.f32 %v2182, %v2182
    %v2187 = vmul.f32 %v2183, %v2183
    %2188 = vadd.xlane.f32.xlu0 %v2184
    %v2189 = vpop.xlane.xlu0 %2188
    %2190 = vadd.xlane.f32.xlu0 %v2185
    %v2191 = vpop.xlane.xlu0 %2190
    %2192 = vadd.xlane.f32.xlu0 %v2186
    %v2193 = vpop.xlane.xlu0 %2192
    %2194 = vadd.xlane.f32.xlu0 %v2187
    %v2195 = vpop.xlane.xlu0 %2194
    %v2196 = vmul.f32 %v2189, %v118
    %v2197 = vmul.f32 %v2191, %v118
    %v2198 = vmul.f32 %v2193, %v118
    %v2199 = vmul.f32 %v2195, %v118
    %v2200 = vadd.f32 %v2196, 1e-05
    %v2201 = vadd.f32 %v2197, 1e-05
    %v2202 = vadd.f32 %v2198, 1e-05
    %v2203 = vadd.f32 %v2199, 1e-05
    %v2204 = vrsqrt.pop %v2200
    %v2205 = vrsqrt.pop %v2201
    %v2206 = vrsqrt.pop %v2202
    %v2207 = vrsqrt.pop %v2203
    %v2208 = vmul.f32 %v2180, %v2204
    %v2209 = vmul.f32 %v2181, %v2205
    %v2210 = vmul.f32 %v2182, %v2206
    %v2211 = vmul.f32 %v2183, %v2207
    %v2213 = vlaneseq
    %v2214 = vshrl.u32 %v2213, 7
    %v2215 = vsub.s32 0, %v2214
    %v2216 = vrot.slane %v2166, %v2215
    %v2218 = vmul.f32 %v2208, %v2216
    %v2219 = vmul.f32 %v2209, %v2216
    %v2220 = vmul.f32 %v2210, %v2216
    %v2221 = vmul.f32 %v2211, %v2216
    %v2223 = vlaneseq
    %v2224 = vshrl.u32 %v2223, 7
    %v2225 = vsub.s32 0, %v2224
    %v2226 = vrot.slane %v2167, %v2225
    %v2228 = vadd.f32 %v2218, %v2226
    %v2229 = vadd.f32 %v2219, %v2226
    %v2230 = vadd.f32 %v2220, %v2226
    %v2231 = vadd.f32 %v2221, %v2226
    %v2232 = vld [vmem:[%s8] sm:$0xff]
    %v2233 = vld [vmem:[%s8 + $0x8] sm:$0xff]
    %v2234 = vld [vmem:[%s8 + $0x10] sm:$0xff]
    %v2235 = vld [vmem:[%s8 + $0x18] sm:$0xff]
    %v2236 = vld [vmem:[%s8 + $0x20] sm:$0xff]
    %v2237 = vld [vmem:[%s8 + $0x28] sm:$0xff]
    %v2238 = vld [vmem:[%s8 + $0x30] sm:$0xff]
    %v2239 = vld [vmem:[%s8 + $0x38] sm:$0xff]
    %v2240 = vld [vmem:[%s8 + $0x40] sm:$0xff]
    %v2241 = vld [vmem:[%s8 + $0x48] sm:$0xff]
    %v2242 = vld [vmem:[%s8 + $0x50] sm:$0xff]
    %v2243 = vld [vmem:[%s8 + $0x58] sm:$0xff]
    %v2244 = vld [vmem:[%s8 + $0x60] sm:$0xff]
    %v2245 = vld [vmem:[%s8 + $0x68] sm:$0xff]
    %v2246 = vld [vmem:[%s8 + $0x70] sm:$0xff]
    %v2247 = vld [vmem:[%s8 + $0x78] sm:$0xff]
    %v2248 = vld [vmem:[%s8 + $0x80] sm:$0xff]
    %v2249 = vld [vmem:[%s8 + $0x88] sm:$0xff]
    %v2250 = vld [vmem:[%s8 + $0x90] sm:$0xff]
    %v2251 = vld [vmem:[%s8 + $0x98] sm:$0xff]
    %v2252 = vld [vmem:[%s8 + $0xa0] sm:$0xff]
    %v2253 = vld [vmem:[%s8 + $0xa8] sm:$0xff]
    %v2254 = vld [vmem:[%s8 + $0xb0] sm:$0xff]
    %v2255 = vld [vmem:[%s8 + $0xb8] sm:$0xff]
    %v2256 = vld [vmem:[%s8 + $0xc0] sm:$0xff]
    %v2257 = vld [vmem:[%s8 + $0xc8] sm:$0xff]
    %v2258 = vld [vmem:[%s8 + $0xd0] sm:$0xff]
    %v2259 = vld [vmem:[%s8 + $0xd8] sm:$0xff]
    %v2260 = vld [vmem:[%s8 + $0xe0] sm:$0xff]
    %v2261 = vld [vmem:[%s8 + $0xe8] sm:$0xff]
    %v2262 = vld [vmem:[%s8 + $0xf0] sm:$0xff]
    %v2263 = vld [vmem:[%s8 + $0xf8] sm:$0xff]
    %v2264 = vld [vmem:[%s8 + $0x100] sm:$0xff]
    %v2265 = vld [vmem:[%s8 + $0x108] sm:$0xff]
    %v2266 = vld [vmem:[%s8 + $0x110] sm:$0xff]
    %v2267 = vld [vmem:[%s8 + $0x118] sm:$0xff]
    %v2268 = vld [vmem:[%s8 + $0x120] sm:$0xff]
    %v2269 = vld [vmem:[%s8 + $0x128] sm:$0xff]
    %v2270 = vld [vmem:[%s8 + $0x130] sm:$0xff]
    %v2271 = vld [vmem:[%s8 + $0x138] sm:$0xff]
    %v2272 = vld [vmem:[%s8 + $0x140] sm:$0xff]
    %v2273 = vld [vmem:[%s8 + $0x148] sm:$0xff]
    %v2274 = vld [vmem:[%s8 + $0x150] sm:$0xff]
    %v2275 = vld [vmem:[%s8 + $0x158] sm:$0xff]
    %v2276 = vld [vmem:[%s8 + $0x160] sm:$0xff]
    %v2277 = vld [vmem:[%s8 + $0x168] sm:$0xff]
    %v2278 = vld [vmem:[%s8 + $0x170] sm:$0xff]
    %v2279 = vld [vmem:[%s8 + $0x178] sm:$0xff]
    %v2280 = vld [vmem:[%s8 + $0x180] sm:$0xff]
    %v2281 = vld [vmem:[%s8 + $0x188] sm:$0xff]
    %v2282 = vld [vmem:[%s8 + $0x190] sm:$0xff]
    %v2283 = vld [vmem:[%s8 + $0x198] sm:$0xff]
    %v2284 = vld [vmem:[%s8 + $0x1a0] sm:$0xff]
    %v2285 = vld [vmem:[%s8 + $0x1a8] sm:$0xff]
    %v2286 = vld [vmem:[%s8 + $0x1b0] sm:$0xff]
    %v2287 = vld [vmem:[%s8 + $0x1b8] sm:$0xff]
    %v2288 = vld [vmem:[%s8 + $0x1c0] sm:$0xff]
    %v2289 = vld [vmem:[%s8 + $0x1c8] sm:$0xff]
    %v2290 = vld [vmem:[%s8 + $0x1d0] sm:$0xff]
    %v2291 = vld [vmem:[%s8 + $0x1d8] sm:$0xff]
    %v2292 = vld [vmem:[%s8 + $0x1e0] sm:$0xff]
    %v2293 = vld [vmem:[%s8 + $0x1e8] sm:$0xff]
    %v2294 = vld [vmem:[%s8 + $0x1f0] sm:$0xff]
    %v2295 = vld [vmem:[%s8 + $0x1f8] sm:$0xff]
    %v2296 = vld [vmem:[%s9] sm:$0xf]
    %v2298 = vlaneseq
    %v2299 = vshrl.u32 %v2298, 7
    %v2300 = vsub.s32 0, %v2299
    %v2301 = vrot.slane %v2296, %v2300
    %v2302 = vlaneseq
    %v2303 = vshrl.u32 %v2302, 7
    %v2304 = vsub.s32 1, %v2303
    %v2305 = vrot.slane %v2296, %v2304
    %v2306 = vlaneseq
    %v2307 = vshrl.u32 %v2306, 7
    %v2308 = vsub.s32 2, %v2307
    %v2309 = vrot.slane %v2296, %v2308
    %v2310 = vlaneseq
    %v2311 = vshrl.u32 %v2310, 7
    %v2312 = vsub.s32 3, %v2311
    %v2313 = vrot.slane %v2296, %v2312
    %2318 = vmatprep.subr.mxu0 %v2293
    %2319 = vmatpush1.msra.mxu0 %v2292
    %2320 = vmatprep.subr.mxu0 %v2289
    %2321 = vmatpush1.msra.mxu0 %v2288
    %2322 = vmatprep.subr.mxu0 %v2285
    %2323 = vmatpush1.msra.mxu0 %v2284
    %2324 = vmatprep.subr.mxu0 %v2281
    %2325 = vmatpush1.msra.mxu0 %v2280
    %2326 = vmatprep.subr.mxu0 %v2277
    %2327 = vmatpush1.msra.mxu0 %v2276
    %2328 = vmatprep.subr.mxu0 %v2273
    %2329 = vmatpush1.msra.mxu0 %v2272
    %2330 = vmatprep.subr.mxu0 %v2269
    %2331 = vmatpush1.msra.mxu0 %v2268
    %2332 = vmatprep.subr.mxu0 %v2265
    %2333 = vmatpush1.msra.mxu0 %v2264
    %2334 = vmatprep.subr.mxu0 %v2261
    %2335 = vmatpush1.msra.mxu0 %v2260
    %2336 = vmatprep.subr.mxu0 %v2257
    %2337 = vmatpush1.msra.mxu0 %v2256
    %2338 = vmatprep.subr.mxu0 %v2253
    %2339 = vmatpush1.msra.mxu0 %v2252
    %2340 = vmatprep.subr.mxu0 %v2249
    %2341 = vmatpush1.msra.mxu0 %v2248
    %2342 = vmatprep.subr.mxu0 %v2245
    %2343 = vmatpush1.msra.mxu0 %v2244
    %2344 = vmatprep.subr.mxu0 %v2241
    %2345 = vmatpush1.msra.mxu0 %v2240
    %2346 = vmatprep.subr.mxu0 %v2237
    %2347 = vmatpush1.msra.mxu0 %v2236
    %2348 = vmatprep.subr.mxu0 %v2233
    %2349 = vmatpush1.msra.mxu0 %v2232
    %2350 = vmatprep.subr.mxu0 0.0
    %2351 = vmatpush2.msra.mxu0 0.0
    %2352 = vmatprep.subr.mxu0 0.0
    %2353 = vmatpush2.msra.mxu0 0.0
    %2354 = vmatprep.subr.mxu0 0.0
    %2355 = vmatpush2.msra.mxu0 0.0
    %2356 = vmatprep.subr.mxu0 0.0
    %2357 = vmatpush2.msra.mxu0 0.0
    %2358 = vmatprep.subr.mxu0 0.0
    %2359 = vmatpush2.msra.mxu0 0.0
    %2360 = vmatprep.subr.mxu0 0.0
    %2361 = vmatpush2.msra.mxu0 0.0
    %2362 = vmatprep.subr.mxu0 0.0
    %2363 = vmatpush2.msra.mxu0 0.0
    %2364 = vmatprep.subr.mxu0 0.0
    %2365 = vmatpush2.msra.mxu0 0.0
    %2366 = vmatprep.subr.mxu0 0.0
    %2367 = vmatpush2.msra.mxu0 0.0
    %2368 = vmatprep.subr.mxu0 0.0
    %2369 = vmatpush2.msra.mxu0 0.0
    %2370 = vmatprep.subr.mxu0 0.0
    %2371 = vmatpush2.msra.mxu0 0.0
    %2372 = vmatprep.subr.mxu0 0.0
    %2373 = vmatpush2.msra.mxu0 0.0
    %2374 = vmatprep.subr.mxu0 0.0
    %2375 = vmatpush2.msra.mxu0 0.0
    %2376 = vmatprep.subr.mxu0 0.0
    %2377 = vmatpush2.msra.mxu0 0.0
    %2378 = vmatprep.subr.mxu0 0.0
    %2379 = vmatpush2.msra.mxu0 0.0
    %2380 = vmatprep.subr.mxu0 0.0
    %2381 = vmatpush2.msra.mxu0 0.0
    %2382 = vmatprep.mubr.f32.mxu0 0.0
    %2383 = vmatmul.mubr.f32.gmra.mxu0 %v2228
    %v2384 = vpop.f32.mrf.mxu0
    %v2385 = vadd.f32 %v2301, %v2384
    %v2386 = vpop.f32.mrf.mxu0
    %v2387 = vadd.f32 %v2305, %v2386
    %2388 = vmatprep.mubr.f32.mxu0 0.0
    %2389 = vmatmul.mubr.f32.gmra.mxu0 %v2229
    %v2390 = vpop.f32.mrf.mxu0
    %v2391 = vadd.f32 %v2301, %v2390
    %v2392 = vpop.f32.mrf.mxu0
    %v2393 = vadd.f32 %v2305, %v2392
    %2394 = vmatprep.mubr.f32.mxu0 0.0
    %2395 = vmatmul.mubr.f32.gmra.mxu0 %v2230
    %v2396 = vpop.f32.mrf.mxu0
    %v2397 = vadd.f32 %v2301, %v2396
    %v2398 = vpop.f32.mrf.mxu0
    %v2399 = vadd.f32 %v2305, %v2398
    %2400 = vmatprep.mubr.f32.mxu0 0.0
    %2401 = vmatmul.mubr.f32.gmra.mxu0 %v2231
    %v2402 = vpop.f32.mrf.mxu0
    %v2403 = vadd.f32 %v2301, %v2402
    %v2404 = vpop.f32.mrf.mxu0
    %v2405 = vadd.f32 %v2305, %v2404
    %2406 = vdwg.mxu0
    %2407 = vmatprep.subr.mxu0 %v2295
    %2408 = vmatpush1.msra.mxu0 %v2294
    %2409 = vmatprep.subr.mxu0 %v2291
    %2410 = vmatpush1.msra.mxu0 %v2290
    %2411 = vmatprep.subr.mxu0 %v2287
    %2412 = vmatpush1.msra.mxu0 %v2286
    %2413 = vmatprep.subr.mxu0 %v2283
    %2414 = vmatpush1.msra.mxu0 %v2282
    %2415 = vmatprep.subr.mxu0 %v2279
    %2416 = vmatpush1.msra.mxu0 %v2278
    %2417 = vmatprep.subr.mxu0 %v2275
    %2418 = vmatpush1.msra.mxu0 %v2274
    %2419 = vmatprep.subr.mxu0 %v2271
    %2420 = vmatpush1.msra.mxu0 %v2270
    %2421 = vmatprep.subr.mxu0 %v2267
    %2422 = vmatpush1.msra.mxu0 %v2266
    %2423 = vmatprep.subr.mxu0 %v2263
    %2424 = vmatpush1.msra.mxu0 %v2262
    %2425 = vmatprep.subr.mxu0 %v2259
    %2426 = vmatpush1.msra.mxu0 %v2258
    %2427 = vmatprep.subr.mxu0 %v2255
    %2428 = vmatpush1.msra.mxu0 %v2254
    %2429 = vmatprep.subr.mxu0 %v2251
    %2430 = vmatpush1.msra.mxu0 %v2250
    %2431 = vmatprep.subr.mxu0 %v2247
    %2432 = vmatpush1.msra.mxu0 %v2246
    %2433 = vmatprep.subr.mxu0 %v2243
    %2434 = vmatpush1.msra.mxu0 %v2242
    %2435 = vmatprep.subr.mxu0 %v2239
    %2436 = vmatpush1.msra.mxu0 %v2238
    %2437 = vmatprep.subr.mxu0 %v2235
    %2438 = vmatpush1.msra.mxu0 %v2234
    %2439 = vmatprep.subr.mxu0 0.0
    %2440 = vmatpush2.msra.mxu0 0.0
    %2441 = vmatprep.subr.mxu0 0.0
    %2442 = vmatpush2.msra.mxu0 0.0
    %2443 = vmatprep.subr.mxu0 0.0
    %2444 = vmatpush2.msra.mxu0 0.0
    %2445 = vmatprep.subr.mxu0 0.0
    %2446 = vmatpush2.msra.mxu0 0.0
    %2447 = vmatprep.subr.mxu0 0.0
    %2448 = vmatpush2.msra.mxu0 0.0
    %2449 = vmatprep.subr.mxu0 0.0
    %2450 = vmatpush2.msra.mxu0 0.0
    %2451 = vmatprep.subr.mxu0 0.0
    %2452 = vmatpush2.msra.mxu0 0.0
    %2453 = vmatprep.subr.mxu0 0.0
    %2454 = vmatpush2.msra.mxu0 0.0
    %2455 = vmatprep.subr.mxu0 0.0
    %2456 = vmatpush2.msra.mxu0 0.0
    %2457 = vmatprep.subr.mxu0 0.0
    %2458 = vmatpush2.msra.mxu0 0.0
    %2459 = vmatprep.subr.mxu0 0.0
    %2460 = vmatpush2.msra.mxu0 0.0
    %2461 = vmatprep.subr.mxu0 0.0
    %2462 = vmatpush2.msra.mxu0 0.0
    %2463 = vmatprep.subr.mxu0 0.0
    %2464 = vmatpush2.msra.mxu0 0.0
    %2465 = vmatprep.subr.mxu0 0.0
    %2466 = vmatpush2.msra.mxu0 0.0
    %2467 = vmatprep.subr.mxu0 0.0
    %2468 = vmatpush2.msra.mxu0 0.0
    %2469 = vmatprep.subr.mxu0 0.0
    %2470 = vmatpush2.msra.mxu0 0.0
    %2471 = vmatprep.mubr.f32.mxu0 0.0
    %2472 = vmatmul.mubr.f32.gmra.mxu0 %v2228
    %v2473 = vpop.f32.mrf.mxu0
    %v2474 = vadd.f32 %v2309, %v2473
    %v2475 = vpop.f32.mrf.mxu0
    %v2476 = vadd.f32 %v2313, %v2475
    %2477 = vmatprep.mubr.f32.mxu0 0.0
    %2478 = vmatmul.mubr.f32.gmra.mxu0 %v2229
    %v2479 = vpop.f32.mrf.mxu0
    %v2480 = vadd.f32 %v2309, %v2479
    %v2481 = vpop.f32.mrf.mxu0
    %v2482 = vadd.f32 %v2313, %v2481
    %2483 = vmatprep.mubr.f32.mxu0 0.0
    %2484 = vmatmul.mubr.f32.gmra.mxu0 %v2230
    %v2485 = vpop.f32.mrf.mxu0
    %v2486 = vadd.f32 %v2309, %v2485
    %v2487 = vpop.f32.mrf.mxu0
    %v2488 = vadd.f32 %v2313, %v2487
    %2489 = vmatprep.mubr.f32.mxu0 0.0
    %2490 = vmatmul.mubr.f32.gmra.mxu0 %v2231
    %v2491 = vpop.f32.mrf.mxu0
    %v2492 = vadd.f32 %v2309, %v2491
    %v2493 = vpop.f32.mrf.mxu0
    %v2494 = vadd.f32 %v2313, %v2493
    %2495 = vdwg.mxu0
    %v2496 = vmul.f32 %v2385, 0.5
    %v2497 = vmul.f32 %v2387, 0.5
    %v2498 = vmul.f32 %v2474, 0.5
    %v2499 = vmul.f32 %v2476, 0.5
    %v2500 = vmul.f32 %v2391, 0.5
    %v2501 = vmul.f32 %v2393, 0.5
    %v2502 = vmul.f32 %v2480, 0.5
    %v2503 = vmul.f32 %v2482, 0.5
    %v2504 = vmul.f32 %v2397, 0.5
    %v2505 = vmul.f32 %v2399, 0.5
    %v2506 = vmul.f32 %v2486, 0.5
    %v2507 = vmul.f32 %v2488, 0.5
    %v2508 = vmul.f32 %v2403, 0.5
    %v2509 = vmul.f32 %v2405, 0.5
    %v2510 = vmul.f32 %v2492, 0.5
    %v2511 = vmul.f32 %v2494, 0.5
    %v2512 = vmul.f32 %v2385, 0.044715
    %v2513 = vmul.f32 %v2387, 0.044715
    %v2514 = vmul.f32 %v2474, 0.044715
    %v2515 = vmul.f32 %v2476, 0.044715
    %v2516 = vmul.f32 %v2391, 0.044715
    %v2517 = vmul.f32 %v2393, 0.044715
    %v2518 = vmul.f32 %v2480, 0.044715
    %v2519 = vmul.f32 %v2482, 0.044715
    %v2520 = vmul.f32 %v2397, 0.044715
    %v2521 = vmul.f32 %v2399, 0.044715
    %v2522 = vmul.f32 %v2486, 0.044715
    %v2523 = vmul.f32 %v2488, 0.044715
    %v2524 = vmul.f32 %v2403, 0.044715
    %v2525 = vmul.f32 %v2405, 0.044715
    %v2526 = vmul.f32 %v2492, 0.044715
    %v2527 = vmul.f32 %v2494, 0.044715
    %v2528 = vmul.f32 %v2512, %v2385
    %v2529 = vmul.f32 %v2513, %v2387
    %v2530 = vmul.f32 %v2514, %v2474
    %v2531 = vmul.f32 %v2515, %v2476
    %v2532 = vmul.f32 %v2516, %v2391
    %v2533 = vmul.f32 %v2517, %v2393
    %v2534 = vmul.f32 %v2518, %v2480
    %v2535 = vmul.f32 %v2519, %v2482
    %v2536 = vmul.f32 %v2520, %v2397
    %v2537 = vmul.f32 %v2521, %v2399
    %v2538 = vmul.f32 %v2522, %v2486
    %v2539 = vmul.f32 %v2523, %v2488
    %v2540 = vmul.f32 %v2524, %v2403
    %v2541 = vmul.f32 %v2525, %v2405
    %v2542 = vmul.f32 %v2526, %v2492
    %v2543 = vmul.f32 %v2527, %v2494
    %v2544 = vmul.f32 %v2528, %v2385
    %v2545 = vmul.f32 %v2529, %v2387
    %v2546 = vmul.f32 %v2530, %v2474
    %v2547 = vmul.f32 %v2531, %v2476
    %v2548 = vmul.f32 %v2532, %v2391
    %v2549 = vmul.f32 %v2533, %v2393
    %v2550 = vmul.f32 %v2534, %v2480
    %v2551 = vmul.f32 %v2535, %v2482
    %v2552 = vmul.f32 %v2536, %v2397
    %v2553 = vmul.f32 %v2537, %v2399
    %v2554 = vmul.f32 %v2538, %v2486
    %v2555 = vmul.f32 %v2539, %v2488
    %v2556 = vmul.f32 %v2540, %v2403
    %v2557 = vmul.f32 %v2541, %v2405
    %v2558 = vmul.f32 %v2542, %v2492
    %v2559 = vmul.f32 %v2543, %v2494
    %v2560 = vadd.f32 %v2385, %v2544
    %v2561 = vadd.f32 %v2387, %v2545
    %v2562 = vadd.f32 %v2474, %v2546
    %v2563 = vadd.f32 %v2476, %v2547
    %v2564 = vadd.f32 %v2391, %v2548
    %v2565 = vadd.f32 %v2393, %v2549
    %v2566 = vadd.f32 %v2480, %v2550
    %v2567 = vadd.f32 %v2482, %v2551
    %v2568 = vadd.f32 %v2397, %v2552
    %v2569 = vadd.f32 %v2399, %v2553
    %v2570 = vadd.f32 %v2486, %v2554
    %v2571 = vadd.f32 %v2488, %v2555
    %v2572 = vadd.f32 %v2403, %v2556
    %v2573 = vadd.f32 %v2405, %v2557
    %v2574 = vadd.f32 %v2492, %v2558
    %v2575 = vadd.f32 %v2494, %v2559
    %v2576 = vmul.f32 %v2560, 0.7978846
    %v2577 = vmul.f32 %v2561, 0.7978846
    %v2578 = vmul.f32 %v2562, 0.7978846
    %v2579 = vmul.f32 %v2563, 0.7978846
    %v2580 = vmul.f32 %v2564, 0.7978846
    %v2581 = vmul.f32 %v2565, 0.7978846
    %v2582 = vmul.f32 %v2566, 0.7978846
    %v2583 = vmul.f32 %v2567, 0.7978846
    %v2584 = vmul.f32 %v2568, 0.7978846
    %v2585 = vmul.f32 %v2569, 0.7978846
    %v2586 = vmul.f32 %v2570, 0.7978846
    %v2587 = vmul.f32 %v2571, 0.7978846
    %v2588 = vmul.f32 %v2572, 0.7978846
    %v2589 = vmul.f32 %v2573, 0.7978846
    %v2590 = vmul.f32 %v2574, 0.7978846
    %v2591 = vmul.f32 %v2575, 0.7978846
    %v2592 = vtanh.pop %v2576
    %v2593 = vtanh.pop %v2577
    %v2594 = vtanh.pop %v2578
    %v2595 = vtanh.pop %v2579
    %v2596 = vtanh.pop %v2580
    %v2597 = vtanh.pop %v2581
    %v2598 = vtanh.pop %v2582
    %v2599 = vtanh.pop %v2583
    %v2600 = vtanh.pop %v2584
    %v2601 = vtanh.pop %v2585
    %v2602 = vtanh.pop %v2586
    %v2603 = vtanh.pop %v2587
    %v2604 = vtanh.pop %v2588
    %v2605 = vtanh.pop %v2589
    %v2606 = vtanh.pop %v2590
    %v2607 = vtanh.pop %v2591
    %v2608 = vadd.f32 %v2592, 1.0
    %v2609 = vadd.f32 %v2593, 1.0
    %v2610 = vadd.f32 %v2594, 1.0
    %v2611 = vadd.f32 %v2595, 1.0
    %v2612 = vadd.f32 %v2596, 1.0
    %v2613 = vadd.f32 %v2597, 1.0
    %v2614 = vadd.f32 %v2598, 1.0
    %v2615 = vadd.f32 %v2599, 1.0
    %v2616 = vadd.f32 %v2600, 1.0
    %v2617 = vadd.f32 %v2601, 1.0
    %v2618 = vadd.f32 %v2602, 1.0
    %v2619 = vadd.f32 %v2603, 1.0
    %v2620 = vadd.f32 %v2604, 1.0
    %v2621 = vadd.f32 %v2605, 1.0
    %v2622 = vadd.f32 %v2606, 1.0
    %v2623 = vadd.f32 %v2607, 1.0
    %v2624 = vmul.f32 %v2496, %v2608
    %v2625 = vmul.f32 %v2497, %v2609
    %v2626 = vmul.f32 %v2498, %v2610
    %v2627 = vmul.f32 %v2499, %v2611
    %v2628 = vmul.f32 %v2500, %v2612
    %v2629 = vmul.f32 %v2501, %v2613
    %v2630 = vmul.f32 %v2502, %v2614
    %v2631 = vmul.f32 %v2503, %v2615
    %v2632 = vmul.f32 %v2504, %v2616
    %v2633 = vmul.f32 %v2505, %v2617
    %v2634 = vmul.f32 %v2506, %v2618
    %v2635 = vmul.f32 %v2507, %v2619
    %v2636 = vmul.f32 %v2508, %v2620
    %v2637 = vmul.f32 %v2509, %v2621
    %v2638 = vmul.f32 %v2510, %v2622
    %v2639 = vmul.f32 %v2511, %v2623
    %v2640 = vld [vmem:[#allocation9] sm:$0xff]
    %v2641 = vld [vmem:[#allocation9 + $0x8] sm:$0xff]
    %v2642 = vld [vmem:[#allocation9 + $0x10] sm:$0xff]
    %v2643 = vld [vmem:[#allocation9 + $0x18] sm:$0xff]
    %v2644 = vld [vmem:[#allocation9 + $0x20] sm:$0xff]
    %v2645 = vld [vmem:[#allocation9 + $0x28] sm:$0xff]
    %v2646 = vld [vmem:[#allocation9 + $0x30] sm:$0xff]
    %v2647 = vld [vmem:[#allocation9 + $0x38] sm:$0xff]
    %v2648 = vld [vmem:[#allocation9 + $0x40] sm:$0xff]
    %v2649 = vld [vmem:[#allocation9 + $0x48] sm:$0xff]
    %v2650 = vld [vmem:[#allocation9 + $0x50] sm:$0xff]
    %v2651 = vld [vmem:[#allocation9 + $0x58] sm:$0xff]
    %v2652 = vld [vmem:[#allocation9 + $0x60] sm:$0xff]
    %v2653 = vld [vmem:[#allocation9 + $0x68] sm:$0xff]
    %v2654 = vld [vmem:[#allocation9 + $0x70] sm:$0xff]
    %v2655 = vld [vmem:[#allocation9 + $0x78] sm:$0xff]
    %v2656 = vld [vmem:[#allocation9 + $0x80] sm:$0xff]
    %v2657 = vld [vmem:[#allocation9 + $0x88] sm:$0xff]
    %v2658 = vld [vmem:[#allocation9 + $0x90] sm:$0xff]
    %v2659 = vld [vmem:[#allocation9 + $0x98] sm:$0xff]
    %v2660 = vld [vmem:[#allocation9 + $0xa0] sm:$0xff]
    %v2661 = vld [vmem:[#allocation9 + $0xa8] sm:$0xff]
    %v2662 = vld [vmem:[#allocation9 + $0xb0] sm:$0xff]
    %v2663 = vld [vmem:[#allocation9 + $0xb8] sm:$0xff]
    %v2664 = vld [vmem:[#allocation9 + $0xc0] sm:$0xff]
    %v2665 = vld [vmem:[#allocation9 + $0xc8] sm:$0xff]
    %v2666 = vld [vmem:[#allocation9 + $0xd0] sm:$0xff]
    %v2667 = vld [vmem:[#allocation9 + $0xd8] sm:$0xff]
    %v2668 = vld [vmem:[#allocation9 + $0xe0] sm:$0xff]
    %v2669 = vld [vmem:[#allocation9 + $0xe8] sm:$0xff]
    %v2670 = vld [vmem:[#allocation9 + $0xf0] sm:$0xff]
    %v2671 = vld [vmem:[#allocation9 + $0xf8] sm:$0xff]
    %v2672 = vld [vmem:[#allocation9 + $0x100] sm:$0xff]
    %v2673 = vld [vmem:[#allocation9 + $0x108] sm:$0xff]
    %v2674 = vld [vmem:[#allocation9 + $0x110] sm:$0xff]
    %v2675 = vld [vmem:[#allocation9 + $0x118] sm:$0xff]
    %v2676 = vld [vmem:[#allocation9 + $0x120] sm:$0xff]
    %v2677 = vld [vmem:[#allocation9 + $0x128] sm:$0xff]
    %v2678 = vld [vmem:[#allocation9 + $0x130] sm:$0xff]
    %v2679 = vld [vmem:[#allocation9 + $0x138] sm:$0xff]
    %v2680 = vld [vmem:[#allocation9 + $0x140] sm:$0xff]
    %v2681 = vld [vmem:[#allocation9 + $0x148] sm:$0xff]
    %v2682 = vld [vmem:[#allocation9 + $0x150] sm:$0xff]
    %v2683 = vld [vmem:[#allocation9 + $0x158] sm:$0xff]
    %v2684 = vld [vmem:[#allocation9 + $0x160] sm:$0xff]
    %v2685 = vld [vmem:[#allocation9 + $0x168] sm:$0xff]
    %v2686 = vld [vmem:[#allocation9 + $0x170] sm:$0xff]
    %v2687 = vld [vmem:[#allocation9 + $0x178] sm:$0xff]
    %v2688 = vld [vmem:[#allocation9 + $0x180] sm:$0xff]
    %v2689 = vld [vmem:[#allocation9 + $0x188] sm:$0xff]
    %v2690 = vld [vmem:[#allocation9 + $0x190] sm:$0xff]
    %v2691 = vld [vmem:[#allocation9 + $0x198] sm:$0xff]
    %v2692 = vld [vmem:[#allocation9 + $0x1a0] sm:$0xff]
    %v2693 = vld [vmem:[#allocation9 + $0x1a8] sm:$0xff]
    %v2694 = vld [vmem:[#allocation9 + $0x1b0] sm:$0xff]
    %v2695 = vld [vmem:[#allocation9 + $0x1b8] sm:$0xff]
    %v2696 = vld [vmem:[#allocation9 + $0x1c0] sm:$0xff]
    %v2697 = vld [vmem:[#allocation9 + $0x1c8] sm:$0xff]
    %v2698 = vld [vmem:[#allocation9 + $0x1d0] sm:$0xff]
    %v2699 = vld [vmem:[#allocation9 + $0x1d8] sm:$0xff]
    %v2700 = vld [vmem:[#allocation9 + $0x1e0] sm:$0xff]
    %v2701 = vld [vmem:[#allocation9 + $0x1e8] sm:$0xff]
    %v2702 = vld [vmem:[#allocation9 + $0x1f0] sm:$0xff]
    %v2703 = vld [vmem:[#allocation9 + $0x1f8] sm:$0xff]
    %2704 = vmatprep.subr.mxu0 0.0
    %2705 = vmatpush1.msra.mxu0 %v2655
    %2706 = vmatprep.subr.mxu0 0.0
    %2707 = vmatpush1.msra.mxu0 %v2654
    %2708 = vmatprep.subr.mxu0 0.0
    %2709 = vmatpush1.msra.mxu0 %v2653
    %2710 = vmatprep.subr.mxu0 0.0
    %2711 = vmatpush1.msra.mxu0 %v2652
    %2712 = vmatprep.subr.mxu0 0.0
    %2713 = vmatpush1.msra.mxu0 %v2651
    %2714 = vmatprep.subr.mxu0 0.0
    %2715 = vmatpush1.msra.mxu0 %v2650
    %2716 = vmatprep.subr.mxu0 0.0
    %2717 = vmatpush1.msra.mxu0 %v2649
    %2718 = vmatprep.subr.mxu0 0.0
    %2719 = vmatpush1.msra.mxu0 %v2648
    %2720 = vmatprep.subr.mxu0 0.0
    %2721 = vmatpush1.msra.mxu0 %v2647
    %2722 = vmatprep.subr.mxu0 0.0
    %2723 = vmatpush1.msra.mxu0 %v2646
    %2724 = vmatprep.subr.mxu0 0.0
    %2725 = vmatpush1.msra.mxu0 %v2645
    %2726 = vmatprep.subr.mxu0 0.0
    %2727 = vmatpush1.msra.mxu0 %v2644
    %2728 = vmatprep.subr.mxu0 0.0
    %2729 = vmatpush1.msra.mxu0 %v2643
    %2730 = vmatprep.subr.mxu0 0.0
    %2731 = vmatpush1.msra.mxu0 %v2642
    %2732 = vmatprep.subr.mxu0 0.0
    %2733 = vmatpush1.msra.mxu0 %v2641
    %2734 = vmatprep.subr.mxu0 0.0
    %2735 = vmatpush1.msra.mxu0 %v2640
    %2736 = vmatprep.subr.mxu0 0.0
    %2737 = vmatpush2.msra.mxu0 %v2671
    %2738 = vmatprep.subr.mxu0 0.0
    %2739 = vmatpush2.msra.mxu0 %v2670
    %2740 = vmatprep.subr.mxu0 0.0
    %2741 = vmatpush2.msra.mxu0 %v2669
    %2742 = vmatprep.subr.mxu0 0.0
    %2743 = vmatpush2.msra.mxu0 %v2668
    %2744 = vmatprep.subr.mxu0 0.0
    %2745 = vmatpush2.msra.mxu0 %v2667
    %2746 = vmatprep.subr.mxu0 0.0
    %2747 = vmatpush2.msra.mxu0 %v2666
    %2748 = vmatprep.subr.mxu0 0.0
    %2749 = vmatpush2.msra.mxu0 %v2665
    %2750 = vmatprep.subr.mxu0 0.0
    %2751 = vmatpush2.msra.mxu0 %v2664
    %2752 = vmatprep.subr.mxu0 0.0
    %2753 = vmatpush2.msra.mxu0 %v2663
    %2754 = vmatprep.subr.mxu0 0.0
    %2755 = vmatpush2.msra.mxu0 %v2662
    %2756 = vmatprep.subr.mxu0 0.0
    %2757 = vmatpush2.msra.mxu0 %v2661
    %2758 = vmatprep.subr.mxu0 0.0
    %2759 = vmatpush2.msra.mxu0 %v2660
    %2760 = vmatprep.subr.mxu0 0.0
    %2761 = vmatpush2.msra.mxu0 %v2659
    %2762 = vmatprep.subr.mxu0 0.0
    %2763 = vmatpush2.msra.mxu0 %v2658
    %2764 = vmatprep.subr.mxu0 0.0
    %2765 = vmatpush2.msra.mxu0 %v2657
    %2766 = vmatprep.subr.mxu0 0.0
    %2767 = vmatpush2.msra.mxu0 %v2656
    %2768 = vmatprep.mubr.f32.mxu0 %v2625
    %2769 = vmatmul.mubr.f32.gmra.mxu0 %v2624
    %v2770 = vpop.f32.mrf.mxu0
    %v2771 = vadd.f32 0.0, %v2770
    %v2772 = vpop.f32.mrf.mxu0
    %2773 = vmatprep.mubr.f32.mxu0 %v2629
    %2774 = vmatmul.mubr.f32.gmra.mxu0 %v2628
    %v2775 = vpop.f32.mrf.mxu0
    %v2776 = vadd.f32 0.0, %v2775
    %v2777 = vpop.f32.mrf.mxu0
    %2778 = vmatprep.mubr.f32.mxu0 %v2633
    %2779 = vmatmul.mubr.f32.gmra.mxu0 %v2632
    %v2780 = vpop.f32.mrf.mxu0
    %v2781 = vadd.f32 0.0, %v2780
    %v2782 = vpop.f32.mrf.mxu0
    %2783 = vmatprep.mubr.f32.mxu0 %v2637
    %2784 = vmatmul.mubr.f32.gmra.mxu0 %v2636
    %v2785 = vpop.f32.mrf.mxu0
    %v2786 = vadd.f32 0.0, %v2785
    %v2787 = vpop.f32.mrf.mxu0
    %2788 = vdwg.mxu0
    %2789 = vmatprep.subr.mxu0 0.0
    %2790 = vmatpush1.msra.mxu0 %v2687
    %2791 = vmatprep.subr.mxu0 0.0
    %2792 = vmatpush1.msra.mxu0 %v2686
    %2793 = vmatprep.subr.mxu0 0.0
    %2794 = vmatpush1.msra.mxu0 %v2685
    %2795 = vmatprep.subr.mxu0 0.0
    %2796 = vmatpush1.msra.mxu0 %v2684
    %2797 = vmatprep.subr.mxu0 0.0
    %2798 = vmatpush1.msra.mxu0 %v2683
    %2799 = vmatprep.subr.mxu0 0.0
    %2800 = vmatpush1.msra.mxu0 %v2682
    %2801 = vmatprep.subr.mxu0 0.0
    %2802 = vmatpush1.msra.mxu0 %v2681
    %2803 = vmatprep.subr.mxu0 0.0
    %2804 = vmatpush1.msra.mxu0 %v2680
    %2805 = vmatprep.subr.mxu0 0.0
    %2806 = vmatpush1.msra.mxu0 %v2679
    %2807 = vmatprep.subr.mxu0 0.0
    %2808 = vmatpush1.msra.mxu0 %v2678
    %2809 = vmatprep.subr.mxu0 0.0
    %2810 = vmatpush1.msra.mxu0 %v2677
    %2811 = vmatprep.subr.mxu0 0.0
    %2812 = vmatpush1.msra.mxu0 %v2676
    %2813 = vmatprep.subr.mxu0 0.0
    %2814 = vmatpush1.msra.mxu0 %v2675
    %2815 = vmatprep.subr.mxu0 0.0
    %2816 = vmatpush1.msra.mxu0 %v2674
    %2817 = vmatprep.subr.mxu0 0.0
    %2818 = vmatpush1.msra.mxu0 %v2673
    %2819 = vmatprep.subr.mxu0 0.0
    %2820 = vmatpush1.msra.mxu0 %v2672
    %2821 = vmatprep.subr.mxu0 0.0
    %2822 = vmatpush2.msra.mxu0 %v2703
    %2823 = vmatprep.subr.mxu0 0.0
    %2824 = vmatpush2.msra.mxu0 %v2702
    %2825 = vmatprep.subr.mxu0 0.0
    %2826 = vmatpush2.msra.mxu0 %v2701
    %2827 = vmatprep.subr.mxu0 0.0
    %2828 = vmatpush2.msra.mxu0 %v2700
    %2829 = vmatprep.subr.mxu0 0.0
    %2830 = vmatpush2.msra.mxu0 %v2699
    %2831 = vmatprep.subr.mxu0 0.0
    %2832 = vmatpush2.msra.mxu0 %v2698
    %2833 = vmatprep.subr.mxu0 0.0
    %2834 = vmatpush2.msra.mxu0 %v2697
    %2835 = vmatprep.subr.mxu0 0.0
    %2836 = vmatpush2.msra.mxu0 %v2696
    %2837 = vmatprep.subr.mxu0 0.0
    %2838 = vmatpush2.msra.mxu0 %v2695
    %2839 = vmatprep.subr.mxu0 0.0
    %2840 = vmatpush2.msra.mxu0 %v2694
    %2841 = vmatprep.subr.mxu0 0.0
    %2842 = vmatpush2.msra.mxu0 %v2693
    %2843 = vmatprep.subr.mxu0 0.0
    %2844 = vmatpush2.msra.mxu0 %v2692
    %2845 = vmatprep.subr.mxu0 0.0
    %2846 = vmatpush2.msra.mxu0 %v2691
    %2847 = vmatprep.subr.mxu0 0.0
    %2848 = vmatpush2.msra.mxu0 %v2690
    %2849 = vmatprep.subr.mxu0 0.0
    %2850 = vmatpush2.msra.mxu0 %v2689
    %2851 = vmatprep.subr.mxu0 0.0
    %2852 = vmatpush2.msra.mxu0 %v2688
    %2853 = vmatprep.mubr.f32.mxu0 %v2627
    %2854 = vmatmul.mubr.f32.gmra.mxu0 %v2626
    %v2855 = vpop.f32.mrf.mxu0
    %v2856 = vadd.f32 %v2771, %v2855
    %v2857 = vpop.f32.mrf.mxu0
    %2858 = vmatprep.mubr.f32.mxu0 %v2631
    %2859 = vmatmul.mubr.f32.gmra.mxu0 %v2630
    %v2860 = vpop.f32.mrf.mxu0
    %v2861 = vadd.f32 %v2776, %v2860
    %v2862 = vpop.f32.mrf.mxu0
    %2863 = vmatprep.mubr.f32.mxu0 %v2635
    %2864 = vmatmul.mubr.f32.gmra.mxu0 %v2634
    %v2865 = vpop.f32.mrf.mxu0
    %v2866 = vadd.f32 %v2781, %v2865
    %v2867 = vpop.f32.mrf.mxu0
    %2868 = vmatprep.mubr.f32.mxu0 %v2639
    %2869 = vmatmul.mubr.f32.gmra.mxu0 %v2638
    %v2870 = vpop.f32.mrf.mxu0
    %v2871 = vadd.f32 %v2786, %v2870
    %v2872 = vpop.f32.mrf.mxu0
    %2873 = vdwg.mxu0
    %v2874 = vadd.f32 %v2162, %v2856
    %v2875 = vadd.f32 %v2163, %v2861
    %v2876 = vadd.f32 %v2164, %v2866
    %v2877 = vadd.f32 %v2165, %v2871
    %v2878 = vld [vmem:[#allocation11] sm:$0x1]
    %v2880 = vlaneseq
    %v2881 = vshrl.u32 %v2880, 7
    %v2882 = vsub.s32 0, %v2881
    %v2883 = vrot.slane %v2878, %v2882
    %v2885 = vadd.f32 %v2874, %v2883
    %v2886 = vadd.f32 %v2875, %v2883
    %v2887 = vadd.f32 %v2876, %v2883
    %v2888 = vadd.f32 %v2877, %v2883
    %2889 = vst [vmem:[#allocation12] sm:$0xff] %v2885
    %2890 = vst [vmem:[#allocation12 + $0x8] sm:$0xff] %v2886
    %2891 = vst [vmem:[#allocation12 + $0x10] sm:$0xff] %v2887
    %2892 = vst [vmem:[#allocation12 + $0x18] sm:$0xff] %v2888
    // Predicated region
    $region70: #{block_forward.1} parent=1 // pred_check
      _
    $region71: #{block_forward.1} parent=1 // pred_check_branch
      %2894 = sbr.rel (0) target = $region73
    $region72: #{block_forward.1} parent=1 // pred_region
      %s2896 = ssub.s32 512, 512
      %2897 = vsyncadd [#allocation5], %s2896
      %s2898 = sshll.u32 [#allocation12], 4
      %s2899 = int_to_ptr.vmem [resolvable:$true] %s2898
      %2904 = dma.vmem_to_hbm [thread:$0]  %s2899, 512, %s12, [#allocation5], 128, 128, 8
    $region73: #{block_forward.1} parent=1 // pred_fallthru
      _
    // Predicated region
    $region74: #{block_forward.1} parent=1 // pred_check
      _
    $region75: #{block_forward.1} parent=1 // pred_check_branch
      %2906 = sbr.rel (0) target = $region77
    $region76: #{block_forward.1} parent=1 // pred_region
      %2907 = dma.done [#allocation5], 512
    $region77: #{block_forward.1} parent=1 // pred_fallthru
      _
    %2908 = vsyncpa [#allocation4], 1
    %2909 = vsyncpa [#allocation7], 1
    %2910 = vsyncpa [#allocation10], 1
    %2911 = vsyncpa [#allocation5], 1

</llo_original>
